<compile_context>
chip_gen: v7x
topology: tpu7x:2x2x1
jax: 0.10.0
libtpu: 0.0.40
codegen_flags: <defaults>
</compile_context>

<pallas_src>
import functools

import jax
import jax.numpy as jnp
from jax.experimental import pallas as pl
from jax.experimental.pallas import tpu as pltpu  # noqa: F401  (no TPU-specific scratch needed)


def _layernorm(z, g, b, eps=1e-5):
    mu = jnp.mean(z, axis=-1, keepdims=True)
    var = jnp.mean((z - mu) ** 2, axis=-1, keepdims=True)
    return (z - mu) * jax.lax.rsqrt(var + eps) * g + b


# -----------------------------------------------------------------------------
# Single fused kernel.
#   x_tb: (T*B, P) f32  time-major flattened input (row = t*B + b)
#   out:  (B, D)  f32   class token only
# Token matrix x2d is (B*N, D) in registers, n-major (row = n*B + b), N = T+1.
# -----------------------------------------------------------------------------
def fused_forward_kernel(x_tb_ref, h0_ref, c0_ref,
                         wih_ref, whh_ref, lstm_b_ref, ctok_ref,
                         ln1g_ref, ln1b_ref, wq_ref, wk_ref, wv_ref,
                         wo_ref, bo_ref,
                         ln2g_ref, ln2b_ref, w1_ref, b1_ref, w2_ref, b2_ref,
                         out_ref, *, heads, seq_len, batch):
    T = seq_len
    B = batch
    H = h0_ref.shape[1]
    D = ctok_ref.shape[1]
    N = T + 1
    BN = B * N
    depth = wq_ref.shape[0]
    hd = D // heads
    bf16 = jnp.bfloat16

    # -------------------- LSTM (batch_first, single layer) --------------------
    wih = wih_ref[...]            # (P, 4H) bf16, gate cols permuted [i, f, o, g]
    whh = whh_ref[...]            # (H, 4H) bf16, same permutation
    bias = lstm_b_ref[...]        # (1, 4H) f32,  same permutation

    # Hoisted input projection: one MXU push for the whole sequence.
    xw = jnp.dot(x_tb_ref[...].astype(bf16), wih,
                 preferred_element_type=jnp.float32)              # (T*B, 4H)

    h = h0_ref[...]               # (B, H) f32
    c = c0_ref[...]
    # n-major token rows: class token first (rows 0..B-1), then h_1..h_T blocks.
    rows = [jnp.broadcast_to(ctok_ref[...], (B, D))]
    for t in range(T):            # static unroll, T is small
        gates = (xw[t * B:(t + 1) * B, :]
                 + jnp.dot(h.astype(bf16), whh,
                           preferred_element_type=jnp.float32)
                 + bias)                                          # (B, 4H)
        sg = jax.nn.sigmoid(gates[:, 0:3 * H])   # one sigmoid over [i | f | o]
        g_g = jnp.tanh(gates[:, 3 * H:4 * H])    # one tanh over g
        i_g = sg[:, 0:H]
        f_g = sg[:, H:2 * H]
        o_g = sg[:, 2 * H:3 * H]
        c = f_g * c + i_g * g_g
        h = o_g * jnp.tanh(c)
        rows.append(h)

    x2d = jnp.concatenate(rows, axis=0)          # (BN, D), register-resident

    # ---------------- block-diagonal batch mask (hoisted once) ----------------
    ri = jax.lax.broadcasted_iota(jnp.int32, (BN, BN), 0)
    ci = jax.lax.broadcasted_iota(jnp.int32, (BN, BN), 1)
    mask = jnp.where((ri % B) == (ci % B), 0.0, -1e30).astype(jnp.float32)

    # -------------------- Transformer (all batches fused) ---------------------
    for l in range(depth):
        # --- Residual(PreNorm(Attention)) ---
        xn = _layernorm(x2d, ln1g_ref[l], ln1b_ref[l]).astype(bf16)
        q = jnp.dot(xn, wq_ref[l], preferred_element_type=jnp.float32)  # scale folded in
        k = jnp.dot(xn, wk_ref[l], preferred_element_type=jnp.float32)
        v = jnp.dot(xn, wv_ref[l], preferred_element_type=jnp.float32)
        wo_l = wo_ref[l]                                                # (heads, hd, D)

        acc = jnp.zeros((BN, D), jnp.float32)
        for hh in range(heads):                  # static head loop, Wo folded in
            cs = hh * hd
            qh = q[:, cs:cs + hd].astype(bf16)   # (BN, hd)
            kh = k[:, cs:cs + hd].astype(bf16)
            vh = v[:, cs:cs + hd].astype(bf16)
            dots = jax.lax.dot_general(
                qh, kh, (((1,), (1,)), ((), ())),
                preferred_element_type=jnp.float32) + mask              # (BN, BN)
            dots = dots - jnp.max(dots, axis=-1, keepdims=True)
            e = jnp.exp(dots)
            p = e * pl.reciprocal(jnp.sum(e, axis=-1, keepdims=True), approx=True)
            ho = jnp.dot(p.astype(bf16), vh,
                         preferred_element_type=jnp.float32)            # (BN, hd)
            acc = acc + jnp.dot(ho.astype(bf16), wo_l[hh],
                                preferred_element_type=jnp.float32)     # (BN, D)
        x2d = x2d + acc + bo_ref[l]

        # --- Residual(PreNorm(FeedForward)) ---
        xn2 = _layernorm(x2d, ln2g_ref[l], ln2b_ref[l]).astype(bf16)
        h1 = jnp.maximum(
            jnp.dot(xn2, w1_ref[l], preferred_element_type=jnp.float32) + b1_ref[l],
            0.0)
        ff = jnp.dot(h1.astype(bf16), w2_ref[l],
                     preferred_element_type=jnp.float32) + b2_ref[l]
        x2d = x2d + ff

    # Class tokens occupy rows 0..B-1 (n-major layout): one store, no loop.
    out_ref[...] = x2d[0:B, :]


# -----------------------------------------------------------------------------
# Parameter construction in PyTorch-equivalent layout (gate order i,f,g,o;
# fused to_qkv; Wout as (D, D)), then a host-side prep step that permutes gate
# columns, folds the attention scale into Wq, splits qkv, pre-splits Wo per
# head, and casts matmul weights to bf16.
# -----------------------------------------------------------------------------
def init_params(key, *, patch_dim, dim, depth, heads, fc_dim):
    del heads
    ks = jax.random.split(key, 5 + depth)
    bound = 1.0 / jnp.sqrt(dim)

    def unif(k, shape, b):
        return jax.random.uniform(k, shape, jnp.float32, minval=-b, maxval=b)

    params = {
        "wih_T": unif(ks[0], (patch_dim, 4 * dim), bound),   # W_ih^T, gate order i,f,g,o
        "whh_T": unif(ks[1], (dim, 4 * dim), bound),         # W_hh^T
    }
    b_ih = unif(ks[2], (4 * dim,), bound)
    b_hh = unif(ks[3], (4 * dim,), bound)
    params["lstm_b"] = (b_ih + b_hh).reshape(1, 4 * dim)
    params["c_token"] = jax.random.normal(ks[4], (1, dim), jnp.float32)

    ln1_g, ln1_b, wqkv, wo, bo = [], [], [], [], []
    ln2_g, ln2_b, w1, b1, w2, b2 = [], [], [], [], [], []
    for l in range(depth):
        lk = jax.random.split(ks[5 + l], 8)
        b_d = 1.0 / jnp.sqrt(dim)
        b_fc = 1.0 / jnp.sqrt(fc_dim)
        ln1_g.append(jnp.ones((1, dim), jnp.float32))
        ln1_b.append(jnp.zeros((1, dim), jnp.float32))
        wqkv.append(unif(lk[0], (dim, 3 * dim), b_d))        # to_qkv^T (no bias)
        wo.append(unif(lk[1], (dim, dim), b_d))              # to_out^T
        bo.append(unif(lk[2], (dim,), b_d).reshape(1, dim))
        ln2_g.append(jnp.ones((1, dim), jnp.float32))
        ln2_b.append(jnp.zeros((1, dim), jnp.float32))
        w1.append(unif(lk[3], (dim, fc_dim), b_d))           # W1^T
        b1.append(unif(lk[4], (fc_dim,), b_d).reshape(1, fc_dim))
        w2.append(unif(lk[5], (fc_dim, dim), b_fc))          # W2^T
        b2.append(unif(lk[6], (dim,), b_fc).reshape(1, dim))
    params.update(
        ln1_g=jnp.stack(ln1_g), ln1_b=jnp.stack(ln1_b),
        wqkv=jnp.stack(wqkv), wo=jnp.stack(wo), bo=jnp.stack(bo),
        ln2_g=jnp.stack(ln2_g), ln2_b=jnp.stack(ln2_b),
        w1=jnp.stack(w1), b1=jnp.stack(b1), w2=jnp.stack(w2), b2=jnp.stack(b2),
    )
    return params


def prepare_params(params, *, dim, heads):
    """Host-side, one-time weight reshaping (free; not on the kernel path)."""
    H = dim
    hd = dim // heads
    depth = params["wqkv"].shape[0]
    scale = dim ** (-0.5)          # PyTorch Attention scales by full dim**-0.5
    bf16 = jnp.bfloat16

    def permute_gates(w):          # PyTorch order [i, f, g, o] -> [i, f, o, g]
        return jnp.concatenate(
            [w[..., 0:H], w[..., H:2 * H], w[..., 3 * H:4 * H], w[..., 2 * H:3 * H]],
            axis=-1)

    wqkv = params["wqkv"]
    return {
        "wih_T": permute_gates(params["wih_T"]).astype(bf16),
        "whh_T": permute_gates(params["whh_T"]).astype(bf16),
        "lstm_b": permute_gates(params["lstm_b"]),
        "c_token": params["c_token"],
        "ln1_g": params["ln1_g"], "ln1_b": params["ln1_b"],
        "wq": (wqkv[:, :, 0:dim] * scale).astype(bf16),     # scale folded into Wq
        "wk": wqkv[:, :, dim:2 * dim].astype(bf16),
        "wv": wqkv[:, :, 2 * dim:3 * dim].astype(bf16),
        "wo": params["wo"].reshape(depth, heads, hd, dim).astype(bf16),
        "bo": params["bo"],
        "ln2_g": params["ln2_g"], "ln2_b": params["ln2_b"],
        "w1": params["w1"].astype(bf16), "b1": params["b1"],
        "w2": params["w2"].astype(bf16), "b2": params["b2"],
    }


def lstm_transformer_forward(forward_seq, prep, *, dim, heads, key):
    B, T, P = forward_seq.shape
    # PyTorch forward draws random h_0/c_0 each call; here drawn from a fixed key.
    kh_, kc_ = jax.random.split(key)
    h0 = jax.random.normal(kh_, (B, dim), jnp.float32)
    c0 = jax.random.normal(kc_, (B, dim), jnp.float32)

    # Time-major flatten so each LSTM step reads one contiguous (B, 4H) block of xw.
    x_tb = jnp.transpose(forward_seq, (1, 0, 2)).reshape(T * B, P)

    kernel = functools.partial(fused_forward_kernel,
                               heads=heads, seq_len=T, batch=B)
    # Grid-less: everything VMEM-resident, single invocation.
    # TODO(synk): on v7x, a grid=(B,) parallel batch axis could use the 2nd TensorCore.
    return pl.pallas_call(
        kernel,
        out_shape=jax.ShapeDtypeStruct((B, dim), jnp.float32),
    )(
        x_tb, h0, c0,
        prep["wih_T"], prep["whh_T"], prep["lstm_b"], prep["c_token"],
        prep["ln1_g"], prep["ln1_b"], prep["wq"], prep["wk"], prep["wv"],
        prep["wo"], prep["bo"],
        prep["ln2_g"], prep["ln2_b"], prep["w1"], prep["b1"],
        prep["w2"], prep["b2"],
    )


if __name__ == "__main__":
    # Small, module-consistent shapes
    patch_size = 4
    channels = 1
    patch_dim = channels * patch_size
    dim = 32
    depth = 2
    heads = 4
    fc_dim = 64
    batch = 2
    seq = 8

    root = jax.random.PRNGKey(0)
    k_in, k_par, k_state = jax.random.split(root, 3)

    forward_seq = jax.random.normal(k_in, (batch, seq, patch_dim), jnp.float32)
    params = init_params(k_par, patch_dim=patch_dim, dim=dim, depth=depth,
                         heads=heads, fc_dim=fc_dim)
    prep = prepare_params(params, dim=dim, heads=heads)

    out = lstm_transformer_forward(forward_seq, prep, dim=dim, heads=heads,
                                   key=k_state)
    out = jax.block_until_ready(out)
    assert out.shape == (batch, dim)
    assert bool(jnp.all(jnp.isfinite(out)))
    print("KERNEL_OK")
</pallas_src>

<mosaic_0001>
module attributes {stable_mosaic.version = 11 : i64} {
  func.func @fused_forward_kernel(%arg0: memref<16x4xf32, #tpu.memory_space<vmem>>, %arg1: memref<2x32xf32, #tpu.memory_space<vmem>>, %arg2: memref<2x32xf32, #tpu.memory_space<vmem>>, %arg3: memref<4x128xbf16, #tpu.memory_space<vmem>>, %arg4: memref<32x128xbf16, #tpu.memory_space<vmem>>, %arg5: memref<1x128xf32, #tpu.memory_space<vmem>>, %arg6: memref<1x32xf32, #tpu.memory_space<vmem>>, %arg7: memref<2x1x32xf32, #tpu.memory_space<vmem>>, %arg8: memref<2x1x32xf32, #tpu.memory_space<vmem>>, %arg9: memref<2x32x32xbf16, #tpu.memory_space<vmem>>, %arg10: memref<2x32x32xbf16, #tpu.memory_space<vmem>>, %arg11: memref<2x32x32xbf16, #tpu.memory_space<vmem>>, %arg12: memref<2x4x8x32xbf16, #tpu.memory_space<vmem>>, %arg13: memref<2x1x32xf32, #tpu.memory_space<vmem>>, %arg14: memref<2x1x32xf32, #tpu.memory_space<vmem>>, %arg15: memref<2x1x32xf32, #tpu.memory_space<vmem>>, %arg16: memref<2x32x64xbf16, #tpu.memory_space<vmem>>, %arg17: memref<2x1x64xf32, #tpu.memory_space<vmem>>, %arg18: memref<2x64x32xbf16, #tpu.memory_space<vmem>>, %arg19: memref<2x1x32xf32, #tpu.memory_space<vmem>>, %arg20: memref<2x32xf32, #tpu.memory_space<vmem>>) attributes {dimension_semantics = [], scalar_prefetch = 0 : i64, scratch_operands = 0 : i64, tpu.core_type = #tpu.core_type<tc>} {
    %c0 = arith.constant 0 : index
    %c0_0 = arith.constant 0 : index
    %0 = vector.load %arg3[%c0, %c0_0] : memref<4x128xbf16, #tpu.memory_space<vmem>>, vector<4x128xbf16>
    %c0_1 = arith.constant 0 : index
    %c0_2 = arith.constant 0 : index
    %1 = vector.load %arg4[%c0_1, %c0_2] : memref<32x128xbf16, #tpu.memory_space<vmem>>, vector<32x128xbf16>
    %c0_3 = arith.constant 0 : index
    %c0_4 = arith.constant 0 : index
    %2 = vector.load %arg5[%c0_3, %c0_4] : memref<1x128xf32, #tpu.memory_space<vmem>>, vector<1x128xf32>
    %c0_5 = arith.constant 0 : index
    %c0_6 = arith.constant 0 : index
    %3 = vector.load %arg0[%c0_5, %c0_6] : memref<16x4xf32, #tpu.memory_space<vmem>>, vector<16x4xf32>
    %4 = arith.truncf %3 : vector<16x4xf32> to vector<16x4xbf16>
    %cst = arith.constant dense<0.000000e+00> : vector<16x128xf32>
    %5 = tpu.matmul %4, %0, %cst {dimension_numbers = #tpu.dot_dimension_numbers<[1], [0], [0], [1], [0, 0, 1, 1], [], []>} : vector<16x4xbf16>, vector<4x128xbf16>, vector<16x128xf32> -> vector<16x128xf32>
    %c0_7 = arith.constant 0 : index
    %c0_8 = arith.constant 0 : index
    %6 = vector.load %arg1[%c0_7, %c0_8] : memref<2x32xf32, #tpu.memory_space<vmem>>, vector<2x32xf32>
    %c0_9 = arith.constant 0 : index
    %c0_10 = arith.constant 0 : index
    %7 = vector.load %arg2[%c0_9, %c0_10] : memref<2x32xf32, #tpu.memory_space<vmem>>, vector<2x32xf32>
    %c0_11 = arith.constant 0 : index
    %c0_12 = arith.constant 0 : index
    %8 = vector.load %arg6[%c0_11, %c0_12] : memref<1x32xf32, #tpu.memory_space<vmem>>, vector<1x32xf32>
    %9 = vector.shape_cast %8 : vector<1x32xf32> to vector<1x32xf32>
    %10 = vector.broadcast %9 : vector<1x32xf32> to vector<2x32xf32>
    %11 = vector.extract_strided_slice %5 {offsets = [0, 0], sizes = [2, 128], strides = [1, 1]} : vector<16x128xf32> to vector<2x128xf32>
    %12 = arith.truncf %6 : vector<2x32xf32> to vector<2x32xbf16>
    %cst_13 = arith.constant dense<0.000000e+00> : vector<2x128xf32>
    %13 = tpu.matmul %12, %1, %cst_13 {dimension_numbers = #tpu.dot_dimension_numbers<[1], [0], [0], [1], [0, 0, 1, 1], [], []>} : vector<2x32xbf16>, vector<32x128xbf16>, vector<2x128xf32> -> vector<2x128xf32>
    %14 = arith.addf %11, %13 : vector<2x128xf32>
    %15 = vector.broadcast %2 : vector<1x128xf32> to vector<2x128xf32>
    %16 = arith.addf %14, %15 : vector<2x128xf32>
    %17 = vector.extract_strided_slice %16 {offsets = [0, 0], sizes = [2, 96], strides = [1, 1]} : vector<2x128xf32> to vector<2x96xf32>
    %18 = arith.negf %17 : vector<2x96xf32>
    %19 = math.exp %18 : vector<2x96xf32>
    %cst_14 = arith.constant 1.000000e+00 : f32
    %20 = vector.broadcast %cst_14 : f32 to vector<2x96xf32>
    %21 = arith.addf %20, %19 : vector<2x96xf32>
    %22 = arith.divf %20, %21 : vector<2x96xf32>
    %23 = vector.extract_strided_slice %16 {offsets = [0, 96], sizes = [2, 32], strides = [1, 1]} : vector<2x128xf32> to vector<2x32xf32>
    %24 = math.tanh %23 : vector<2x32xf32>
    %25 = vector.extract_strided_slice %22 {offsets = [0, 0], sizes = [2, 32], strides = [1, 1]} : vector<2x96xf32> to vector<2x32xf32>
    %26 = vector.extract_strided_slice %22 {offsets = [0, 32], sizes = [2, 32], strides = [1, 1]} : vector<2x96xf32> to vector<2x32xf32>
    %27 = vector.extract_strided_slice %22 {offsets = [0, 64], sizes = [2, 32], strides = [1, 1]} : vector<2x96xf32> to vector<2x32xf32>
    %28 = arith.mulf %26, %7 : vector<2x32xf32>
    %29 = arith.mulf %25, %24 : vector<2x32xf32>
    %30 = arith.addf %28, %29 : vector<2x32xf32>
    %31 = math.tanh %30 : vector<2x32xf32>
    %32 = arith.mulf %27, %31 : vector<2x32xf32>
    %33 = vector.extract_strided_slice %5 {offsets = [2, 0], sizes = [2, 128], strides = [1, 1]} : vector<16x128xf32> to vector<2x128xf32>
    %34 = arith.truncf %32 : vector<2x32xf32> to vector<2x32xbf16>
    %cst_15 = arith.constant dense<0.000000e+00> : vector<2x128xf32>
    %35 = tpu.matmul %34, %1, %cst_15 {dimension_numbers = #tpu.dot_dimension_numbers<[1], [0], [0], [1], [0, 0, 1, 1], [], []>} : vector<2x32xbf16>, vector<32x128xbf16>, vector<2x128xf32> -> vector<2x128xf32>
    %36 = arith.addf %33, %35 : vector<2x128xf32>
    %37 = vector.broadcast %2 : vector<1x128xf32> to vector<2x128xf32>
    %38 = arith.addf %36, %37 : vector<2x128xf32>
    %39 = vector.extract_strided_slice %38 {offsets = [0, 0], sizes = [2, 96], strides = [1, 1]} : vector<2x128xf32> to vector<2x96xf32>
    %40 = arith.negf %39 : vector<2x96xf32>
    %41 = math.exp %40 : vector<2x96xf32>
    %cst_16 = arith.constant 1.000000e+00 : f32
    %42 = vector.broadcast %cst_16 : f32 to vector<2x96xf32>
    %43 = arith.addf %42, %41 : vector<2x96xf32>
    %44 = arith.divf %42, %43 : vector<2x96xf32>
    %45 = vector.extract_strided_slice %38 {offsets = [0, 96], sizes = [2, 32], strides = [1, 1]} : vector<2x128xf32> to vector<2x32xf32>
    %46 = math.tanh %45 : vector<2x32xf32>
    %47 = vector.extract_strided_slice %44 {offsets = [0, 0], sizes = [2, 32], strides = [1, 1]} : vector<2x96xf32> to vector<2x32xf32>
    %48 = vector.extract_strided_slice %44 {offsets = [0, 32], sizes = [2, 32], strides = [1, 1]} : vector<2x96xf32> to vector<2x32xf32>
    %49 = vector.extract_strided_slice %44 {offsets = [0, 64], sizes = [2, 32], strides = [1, 1]} : vector<2x96xf32> to vector<2x32xf32>
    %50 = arith.mulf %48, %30 : vector<2x32xf32>
    %51 = arith.mulf %47, %46 : vector<2x32xf32>
    %52 = arith.addf %50, %51 : vector<2x32xf32>
    %53 = math.tanh %52 : vector<2x32xf32>
    %54 = arith.mulf %49, %53 : vector<2x32xf32>
    %55 = vector.extract_strided_slice %5 {offsets = [4, 0], sizes = [2, 128], strides = [1, 1]} : vector<16x128xf32> to vector<2x128xf32>
    %56 = arith.truncf %54 : vector<2x32xf32> to vector<2x32xbf16>
    %cst_17 = arith.constant dense<0.000000e+00> : vector<2x128xf32>
    %57 = tpu.matmul %56, %1, %cst_17 {dimension_numbers = #tpu.dot_dimension_numbers<[1], [0], [0], [1], [0, 0, 1, 1], [], []>} : vector<2x32xbf16>, vector<32x128xbf16>, vector<2x128xf32> -> vector<2x128xf32>
    %58 = arith.addf %55, %57 : vector<2x128xf32>
    %59 = vector.broadcast %2 : vector<1x128xf32> to vector<2x128xf32>
    %60 = arith.addf %58, %59 : vector<2x128xf32>
    %61 = vector.extract_strided_slice %60 {offsets = [0, 0], sizes = [2, 96], strides = [1, 1]} : vector<2x128xf32> to vector<2x96xf32>
    %62 = arith.negf %61 : vector<2x96xf32>
    %63 = math.exp %62 : vector<2x96xf32>
    %cst_18 = arith.constant 1.000000e+00 : f32
    %64 = vector.broadcast %cst_18 : f32 to vector<2x96xf32>
    %65 = arith.addf %64, %63 : vector<2x96xf32>
    %66 = arith.divf %64, %65 : vector<2x96xf32>
    %67 = vector.extract_strided_slice %60 {offsets = [0, 96], sizes = [2, 32], strides = [1, 1]} : vector<2x128xf32> to vector<2x32xf32>
    %68 = math.tanh %67 : vector<2x32xf32>
    %69 = vector.extract_strided_slice %66 {offsets = [0, 0], sizes = [2, 32], strides = [1, 1]} : vector<2x96xf32> to vector<2x32xf32>
    %70 = vector.extract_strided_slice %66 {offsets = [0, 32], sizes = [2, 32], strides = [1, 1]} : vector<2x96xf32> to vector<2x32xf32>
    %71 = vector.extract_strided_slice %66 {offsets = [0, 64], sizes = [2, 32], strides = [1, 1]} : vector<2x96xf32> to vector<2x32xf32>
    %72 = arith.mulf %70, %52 : vector<2x32xf32>
    %73 = arith.mulf %69, %68 : vector<2x32xf32>
    %74 = arith.addf %72, %73 : vector<2x32xf32>
    %75 = math.tanh %74 : vector<2x32xf32>
    %76 = arith.mulf %71, %75 : vector<2x32xf32>
    %77 = vector.extract_strided_slice %5 {offsets = [6, 0], sizes = [2, 128], strides = [1, 1]} : vector<16x128xf32> to vector<2x128xf32>
    %78 = arith.truncf %76 : vector<2x32xf32> to vector<2x32xbf16>
    %cst_19 = arith.constant dense<0.000000e+00> : vector<2x128xf32>
    %79 = tpu.matmul %78, %1, %cst_19 {dimension_numbers = #tpu.dot_dimension_numbers<[1], [0], [0], [1], [0, 0, 1, 1], [], []>} : vector<2x32xbf16>, vector<32x128xbf16>, vector<2x128xf32> -> vector<2x128xf32>
    %80 = arith.addf %77, %79 : vector<2x128xf32>
    %81 = vector.broadcast %2 : vector<1x128xf32> to vector<2x128xf32>
    %82 = arith.addf %80, %81 : vector<2x128xf32>
    %83 = vector.extract_strided_slice %82 {offsets = [0, 0], sizes = [2, 96], strides = [1, 1]} : vector<2x128xf32> to vector<2x96xf32>
    %84 = arith.negf %83 : vector<2x96xf32>
    %85 = math.exp %84 : vector<2x96xf32>
    %cst_20 = arith.constant 1.000000e+00 : f32
    %86 = vector.broadcast %cst_20 : f32 to vector<2x96xf32>
    %87 = arith.addf %86, %85 : vector<2x96xf32>
    %88 = arith.divf %86, %87 : vector<2x96xf32>
    %89 = vector.extract_strided_slice %82 {offsets = [0, 96], sizes = [2, 32], strides = [1, 1]} : vector<2x128xf32> to vector<2x32xf32>
    %90 = math.tanh %89 : vector<2x32xf32>
    %91 = vector.extract_strided_slice %88 {offsets = [0, 0], sizes = [2, 32], strides = [1, 1]} : vector<2x96xf32> to vector<2x32xf32>
    %92 = vector.extract_strided_slice %88 {offsets = [0, 32], sizes = [2, 32], strides = [1, 1]} : vector<2x96xf32> to vector<2x32xf32>
    %93 = vector.extract_strided_slice %88 {offsets = [0, 64], sizes = [2, 32], strides = [1, 1]} : vector<2x96xf32> to vector<2x32xf32>
    %94 = arith.mulf %92, %74 : vector<2x32xf32>
    %95 = arith.mulf %91, %90 : vector<2x32xf32>
    %96 = arith.addf %94, %95 : vector<2x32xf32>
    %97 = math.tanh %96 : vector<2x32xf32>
    %98 = arith.mulf %93, %97 : vector<2x32xf32>
    %99 = vector.extract_strided_slice %5 {offsets = [8, 0], sizes = [2, 128], strides = [1, 1]} : vector<16x128xf32> to vector<2x128xf32>
    %100 = arith.truncf %98 : vector<2x32xf32> to vector<2x32xbf16>
    %cst_21 = arith.constant dense<0.000000e+00> : vector<2x128xf32>
    %101 = tpu.matmul %100, %1, %cst_21 {dimension_numbers = #tpu.dot_dimension_numbers<[1], [0], [0], [1], [0, 0, 1, 1], [], []>} : vector<2x32xbf16>, vector<32x128xbf16>, vector<2x128xf32> -> vector<2x128xf32>
    %102 = arith.addf %99, %101 : vector<2x128xf32>
    %103 = vector.broadcast %2 : vector<1x128xf32> to vector<2x128xf32>
    %104 = arith.addf %102, %103 : vector<2x128xf32>
    %105 = vector.extract_strided_slice %104 {offsets = [0, 0], sizes = [2, 96], strides = [1, 1]} : vector<2x128xf32> to vector<2x96xf32>
    %106 = arith.negf %105 : vector<2x96xf32>
    %107 = math.exp %106 : vector<2x96xf32>
    %cst_22 = arith.constant 1.000000e+00 : f32
    %108 = vector.broadcast %cst_22 : f32 to vector<2x96xf32>
    %109 = arith.addf %108, %107 : vector<2x96xf32>
    %110 = arith.divf %108, %109 : vector<2x96xf32>
    %111 = vector.extract_strided_slice %104 {offsets = [0, 96], sizes = [2, 32], strides = [1, 1]} : vector<2x128xf32> to vector<2x32xf32>
    %112 = math.tanh %111 : vector<2x32xf32>
    %113 = vector.extract_strided_slice %110 {offsets = [0, 0], sizes = [2, 32], strides = [1, 1]} : vector<2x96xf32> to vector<2x32xf32>
    %114 = vector.extract_strided_slice %110 {offsets = [0, 32], sizes = [2, 32], strides = [1, 1]} : vector<2x96xf32> to vector<2x32xf32>
    %115 = vector.extract_strided_slice %110 {offsets = [0, 64], sizes = [2, 32], strides = [1, 1]} : vector<2x96xf32> to vector<2x32xf32>
    %116 = arith.mulf %114, %96 : vector<2x32xf32>
    %117 = arith.mulf %113, %112 : vector<2x32xf32>
    %118 = arith.addf %116, %117 : vector<2x32xf32>
    %119 = math.tanh %118 : vector<2x32xf32>
    %120 = arith.mulf %115, %119 : vector<2x32xf32>
    %121 = vector.extract_strided_slice %5 {offsets = [10, 0], sizes = [2, 128], strides = [1, 1]} : vector<16x128xf32> to vector<2x128xf32>
    %122 = arith.truncf %120 : vector<2x32xf32> to vector<2x32xbf16>
    %cst_23 = arith.constant dense<0.000000e+00> : vector<2x128xf32>
    %123 = tpu.matmul %122, %1, %cst_23 {dimension_numbers = #tpu.dot_dimension_numbers<[1], [0], [0], [1], [0, 0, 1, 1], [], []>} : vector<2x32xbf16>, vector<32x128xbf16>, vector<2x128xf32> -> vector<2x128xf32>
    %124 = arith.addf %121, %123 : vector<2x128xf32>
    %125 = vector.broadcast %2 : vector<1x128xf32> to vector<2x128xf32>
    %126 = arith.addf %124, %125 : vector<2x128xf32>
    %127 = vector.extract_strided_slice %126 {offsets = [0, 0], sizes = [2, 96], strides = [1, 1]} : vector<2x128xf32> to vector<2x96xf32>
    %128 = arith.negf %127 : vector<2x96xf32>
    %129 = math.exp %128 : vector<2x96xf32>
    %cst_24 = arith.constant 1.000000e+00 : f32
    %130 = vector.broadcast %cst_24 : f32 to vector<2x96xf32>
    %131 = arith.addf %130, %129 : vector<2x96xf32>
    %132 = arith.divf %130, %131 : vector<2x96xf32>
    %133 = vector.extract_strided_slice %126 {offsets = [0, 96], sizes = [2, 32], strides = [1, 1]} : vector<2x128xf32> to vector<2x32xf32>
    %134 = math.tanh %133 : vector<2x32xf32>
    %135 = vector.extract_strided_slice %132 {offsets = [0, 0], sizes = [2, 32], strides = [1, 1]} : vector<2x96xf32> to vector<2x32xf32>
    %136 = vector.extract_strided_slice %132 {offsets = [0, 32], sizes = [2, 32], strides = [1, 1]} : vector<2x96xf32> to vector<2x32xf32>
    %137 = vector.extract_strided_slice %132 {offsets = [0, 64], sizes = [2, 32], strides = [1, 1]} : vector<2x96xf32> to vector<2x32xf32>
    %138 = arith.mulf %136, %118 : vector<2x32xf32>
    %139 = arith.mulf %135, %134 : vector<2x32xf32>
    %140 = arith.addf %138, %139 : vector<2x32xf32>
    %141 = math.tanh %140 : vector<2x32xf32>
    %142 = arith.mulf %137, %141 : vector<2x32xf32>
    %143 = vector.extract_strided_slice %5 {offsets = [12, 0], sizes = [2, 128], strides = [1, 1]} : vector<16x128xf32> to vector<2x128xf32>
    %144 = arith.truncf %142 : vector<2x32xf32> to vector<2x32xbf16>
    %cst_25 = arith.constant dense<0.000000e+00> : vector<2x128xf32>
    %145 = tpu.matmul %144, %1, %cst_25 {dimension_numbers = #tpu.dot_dimension_numbers<[1], [0], [0], [1], [0, 0, 1, 1], [], []>} : vector<2x32xbf16>, vector<32x128xbf16>, vector<2x128xf32> -> vector<2x128xf32>
    %146 = arith.addf %143, %145 : vector<2x128xf32>
    %147 = vector.broadcast %2 : vector<1x128xf32> to vector<2x128xf32>
    %148 = arith.addf %146, %147 : vector<2x128xf32>
    %149 = vector.extract_strided_slice %148 {offsets = [0, 0], sizes = [2, 96], strides = [1, 1]} : vector<2x128xf32> to vector<2x96xf32>
    %150 = arith.negf %149 : vector<2x96xf32>
    %151 = math.exp %150 : vector<2x96xf32>
    %cst_26 = arith.constant 1.000000e+00 : f32
    %152 = vector.broadcast %cst_26 : f32 to vector<2x96xf32>
    %153 = arith.addf %152, %151 : vector<2x96xf32>
    %154 = arith.divf %152, %153 : vector<2x96xf32>
    %155 = vector.extract_strided_slice %148 {offsets = [0, 96], sizes = [2, 32], strides = [1, 1]} : vector<2x128xf32> to vector<2x32xf32>
    %156 = math.tanh %155 : vector<2x32xf32>
    %157 = vector.extract_strided_slice %154 {offsets = [0, 0], sizes = [2, 32], strides = [1, 1]} : vector<2x96xf32> to vector<2x32xf32>
    %158 = vector.extract_strided_slice %154 {offsets = [0, 32], sizes = [2, 32], strides = [1, 1]} : vector<2x96xf32> to vector<2x32xf32>
    %159 = vector.extract_strided_slice %154 {offsets = [0, 64], sizes = [2, 32], strides = [1, 1]} : vector<2x96xf32> to vector<2x32xf32>
    %160 = arith.mulf %158, %140 : vector<2x32xf32>
    %161 = arith.mulf %157, %156 : vector<2x32xf32>
    %162 = arith.addf %160, %161 : vector<2x32xf32>
    %163 = math.tanh %162 : vector<2x32xf32>
    %164 = arith.mulf %159, %163 : vector<2x32xf32>
    %165 = vector.extract_strided_slice %5 {offsets = [14, 0], sizes = [2, 128], strides = [1, 1]} : vector<16x128xf32> to vector<2x128xf32>
    %166 = arith.truncf %164 : vector<2x32xf32> to vector<2x32xbf16>
    %cst_27 = arith.constant dense<0.000000e+00> : vector<2x128xf32>
    %167 = tpu.matmul %166, %1, %cst_27 {dimension_numbers = #tpu.dot_dimension_numbers<[1], [0], [0], [1], [0, 0, 1, 1], [], []>} : vector<2x32xbf16>, vector<32x128xbf16>, vector<2x128xf32> -> vector<2x128xf32>
    %168 = arith.addf %165, %167 : vector<2x128xf32>
    %169 = vector.broadcast %2 : vector<1x128xf32> to vector<2x128xf32>
    %170 = arith.addf %168, %169 : vector<2x128xf32>
    %171 = vector.extract_strided_slice %170 {offsets = [0, 0], sizes = [2, 96], strides = [1, 1]} : vector<2x128xf32> to vector<2x96xf32>
    %172 = arith.negf %171 : vector<2x96xf32>
    %173 = math.exp %172 : vector<2x96xf32>
    %cst_28 = arith.constant 1.000000e+00 : f32
    %174 = vector.broadcast %cst_28 : f32 to vector<2x96xf32>
    %175 = arith.addf %174, %173 : vector<2x96xf32>
    %176 = arith.divf %174, %175 : vector<2x96xf32>
    %177 = vector.extract_strided_slice %170 {offsets = [0, 96], sizes = [2, 32], strides = [1, 1]} : vector<2x128xf32> to vector<2x32xf32>
    %178 = math.tanh %177 : vector<2x32xf32>
    %179 = vector.extract_strided_slice %176 {offsets = [0, 0], sizes = [2, 32], strides = [1, 1]} : vector<2x96xf32> to vector<2x32xf32>
    %180 = vector.extract_strided_slice %176 {offsets = [0, 32], sizes = [2, 32], strides = [1, 1]} : vector<2x96xf32> to vector<2x32xf32>
    %181 = vector.extract_strided_slice %176 {offsets = [0, 64], sizes = [2, 32], strides = [1, 1]} : vector<2x96xf32> to vector<2x32xf32>
    %182 = arith.mulf %180, %162 : vector<2x32xf32>
    %183 = arith.mulf %179, %178 : vector<2x32xf32>
    %184 = arith.addf %182, %183 : vector<2x32xf32>
    %185 = math.tanh %184 : vector<2x32xf32>
    %186 = arith.mulf %181, %185 : vector<2x32xf32>
    %187 = tpu.concatenate %10, %32, %54, %76, %98, %120, %142, %164, %186 in 0 : vector<2x32xf32>, vector<2x32xf32>, vector<2x32xf32>, vector<2x32xf32>, vector<2x32xf32>, vector<2x32xf32>, vector<2x32xf32>, vector<2x32xf32>, vector<2x32xf32> -> vector<18x32xf32>
    %188 = tpu.iota {dimensions = array<i32: 0>} : vector<18x18xi32>
    %189 = tpu.iota {dimensions = array<i32: 1>} : vector<18x18xi32>
    %c2_i32 = arith.constant 2 : i32
    %c0_i32 = arith.constant 0 : i32
    %190 = arith.cmpi eq, %c2_i32, %c0_i32 : i32
    %c1_i32 = arith.constant 1 : i32
    %191 = arith.select %190, %c1_i32, %c2_i32 : i32
    %192 = vector.broadcast %191 : i32 to vector<18x18xi32>
    %193 = arith.remsi %188, %192 : vector<18x18xi32>
    %c0_i32_29 = arith.constant 0 : i32
    %194 = vector.broadcast %c0_i32_29 : i32 to vector<18x18xi32>
    %195 = arith.cmpi ne, %193, %194 : vector<18x18xi32>
    %c0_i32_30 = arith.constant 0 : i32
    %196 = vector.broadcast %c0_i32_30 : i32 to vector<18x18xi32>
    %197 = arith.cmpi slt, %193, %196 : vector<18x18xi32>
    %c0_i32_31 = arith.constant 0 : i32
    %198 = arith.cmpi slt, %191, %c0_i32_31 : i32
    %199 = vector.broadcast %198 : i1 to vector<18x18xi1>
    %200 = vector.broadcast %199 : vector<18x18xi1> to vector<18x18xi1>
    %201 = arith.xori %197, %200 : vector<18x18xi1>
    %202 = arith.andi %201, %195 : vector<18x18xi1>
    %203 = vector.broadcast %191 : i32 to vector<18x18xi32>
    %204 = arith.addi %193, %203 : vector<18x18xi32>
    %205 = arith.select %202, %204, %193 : vector<18x18xi1>, vector<18x18xi32>
    %c2_i32_32 = arith.constant 2 : i32
    %c0_i32_33 = arith.constant 0 : i32
    %206 = arith.cmpi eq, %c2_i32_32, %c0_i32_33 : i32
    %c1_i32_34 = arith.constant 1 : i32
    %207 = arith.select %206, %c1_i32_34, %c2_i32_32 : i32
    %208 = vector.broadcast %207 : i32 to vector<18x18xi32>
    %209 = arith.remsi %189, %208 : vector<18x18xi32>
    %c0_i32_35 = arith.constant 0 : i32
    %210 = vector.broadcast %c0_i32_35 : i32 to vector<18x18xi32>
    %211 = arith.cmpi ne, %209, %210 : vector<18x18xi32>
    %c0_i32_36 = arith.constant 0 : i32
    %212 = vector.broadcast %c0_i32_36 : i32 to vector<18x18xi32>
    %213 = arith.cmpi slt, %209, %212 : vector<18x18xi32>
    %c0_i32_37 = arith.constant 0 : i32
    %214 = arith.cmpi slt, %207, %c0_i32_37 : i32
    %215 = vector.broadcast %214 : i1 to vector<18x18xi1>
    %216 = vector.broadcast %215 : vector<18x18xi1> to vector<18x18xi1>
    %217 = arith.xori %213, %216 : vector<18x18xi1>
    %218 = arith.andi %217, %211 : vector<18x18xi1>
    %219 = vector.broadcast %207 : i32 to vector<18x18xi32>
    %220 = arith.addi %209, %219 : vector<18x18xi32>
    %221 = arith.select %218, %220, %209 : vector<18x18xi1>, vector<18x18xi32>
    %222 = arith.cmpi eq, %205, %221 : vector<18x18xi32>
    %cst_38 = arith.constant 0.000000e+00 : f32
    %cst_39 = arith.constant -1.000000e+30 : f32
    %223 = vector.broadcast %cst_38 : f32 to vector<18x18xf32>
    %224 = vector.broadcast %cst_39 : f32 to vector<18x18xf32>
    %225 = arith.select %222, %223, %224 : vector<18x18xi1>, vector<18x18xf32>
    %c0_40 = arith.constant 0 : index
    %c0_41 = arith.constant 0 : index
    %c0_42 = arith.constant 0 : index
    %226 = vector.load %arg7[%c0_40, %c0_41, %c0_42] : memref<2x1x32xf32, #tpu.memory_space<vmem>>, vector<1x1x32xf32>
    %227 = vector.shape_cast %226 : vector<1x1x32xf32> to vector<1x32xf32>
    %c0_43 = arith.constant 0 : index
    %c0_44 = arith.constant 0 : index
    %c0_45 = arith.constant 0 : index
    %228 = vector.load %arg8[%c0_43, %c0_44, %c0_45] : memref<2x1x32xf32, #tpu.memory_space<vmem>>, vector<1x1x32xf32>
    %229 = vector.shape_cast %228 : vector<1x1x32xf32> to vector<1x32xf32>
    %cst_46 = arith.constant dense<0.000000e+00> : vector<18xf32>
    %230 = vector.multi_reduction <add>, %187, %cst_46 [1] : vector<18x32xf32> to vector<18xf32>
    %231 = vector.shape_cast %230 : vector<18xf32> to vector<18x1xf32>
    %cst_47 = arith.constant 3.200000e+01 : f32
    %232 = vector.broadcast %cst_47 : f32 to vector<18x1xf32>
    %233 = arith.divf %231, %232 : vector<18x1xf32>
    %234 = vector.broadcast %233 : vector<18x1xf32> to vector<18x32xf32>
    %235 = arith.subf %187, %234 : vector<18x32xf32>
    %236 = arith.mulf %235, %235 : vector<18x32xf32>
    %cst_48 = arith.constant dense<0.000000e+00> : vector<18xf32>
    %237 = vector.multi_reduction <add>, %236, %cst_48 [1] : vector<18x32xf32> to vector<18xf32>
    %238 = vector.shape_cast %237 : vector<18xf32> to vector<18x1xf32>
    %cst_49 = arith.constant 3.200000e+01 : f32
    %239 = vector.broadcast %cst_49 : f32 to vector<18x1xf32>
    %240 = arith.divf %238, %239 : vector<18x1xf32>
    %241 = vector.broadcast %233 : vector<18x1xf32> to vector<18x32xf32>
    %242 = arith.subf %187, %241 : vector<18x32xf32>
    %cst_50 = arith.constant 9.99999974E-6 : f32
    %243 = vector.broadcast %cst_50 : f32 to vector<18x1xf32>
    %244 = arith.addf %240, %243 : vector<18x1xf32>
    %245 = math.rsqrt %244 : vector<18x1xf32>
    %246 = vector.broadcast %245 : vector<18x1xf32> to vector<18x32xf32>
    %247 = arith.mulf %242, %246 : vector<18x32xf32>
    %248 = vector.broadcast %227 : vector<1x32xf32> to vector<18x32xf32>
    %249 = arith.mulf %247, %248 : vector<18x32xf32>
    %250 = vector.broadcast %229 : vector<1x32xf32> to vector<18x32xf32>
    %251 = arith.addf %249, %250 : vector<18x32xf32>
    %252 = arith.truncf %251 : vector<18x32xf32> to vector<18x32xbf16>
    %c0_51 = arith.constant 0 : index
    %c0_52 = arith.constant 0 : index
    %c0_53 = arith.constant 0 : index
    %253 = vector.load %arg9[%c0_51, %c0_52, %c0_53] : memref<2x32x32xbf16, #tpu.memory_space<vmem>>, vector<1x32x32xbf16>
    %254 = vector.shape_cast %253 : vector<1x32x32xbf16> to vector<32x32xbf16>
    %cst_54 = arith.constant dense<0.000000e+00> : vector<18x32xf32>
    %255 = tpu.matmul %252, %254, %cst_54 {dimension_numbers = #tpu.dot_dimension_numbers<[1], [0], [0], [1], [0, 0, 1, 1], [], []>} : vector<18x32xbf16>, vector<32x32xbf16>, vector<18x32xf32> -> vector<18x32xf32>
    %c0_55 = arith.constant 0 : index
    %c0_56 = arith.constant 0 : index
    %c0_57 = arith.constant 0 : index
    %256 = vector.load %arg10[%c0_55, %c0_56, %c0_57] : memref<2x32x32xbf16, #tpu.memory_space<vmem>>, vector<1x32x32xbf16>
    %257 = vector.shape_cast %256 : vector<1x32x32xbf16> to vector<32x32xbf16>
    %cst_58 = arith.constant dense<0.000000e+00> : vector<18x32xf32>
    %258 = tpu.matmul %252, %257, %cst_58 {dimension_numbers = #tpu.dot_dimension_numbers<[1], [0], [0], [1], [0, 0, 1, 1], [], []>} : vector<18x32xbf16>, vector<32x32xbf16>, vector<18x32xf32> -> vector<18x32xf32>
    %c0_59 = arith.constant 0 : index
    %c0_60 = arith.constant 0 : index
    %c0_61 = arith.constant 0 : index
    %259 = vector.load %arg11[%c0_59, %c0_60, %c0_61] : memref<2x32x32xbf16, #tpu.memory_space<vmem>>, vector<1x32x32xbf16>
    %260 = vector.shape_cast %259 : vector<1x32x32xbf16> to vector<32x32xbf16>
    %cst_62 = arith.constant dense<0.000000e+00> : vector<18x32xf32>
    %261 = tpu.matmul %252, %260, %cst_62 {dimension_numbers = #tpu.dot_dimension_numbers<[1], [0], [0], [1], [0, 0, 1, 1], [], []>} : vector<18x32xbf16>, vector<32x32xbf16>, vector<18x32xf32> -> vector<18x32xf32>
    %c0_63 = arith.constant 0 : index
    %c0_64 = arith.constant 0 : index
    %c0_65 = arith.constant 0 : index
    %c0_66 = arith.constant 0 : index
    %262 = vector.load %arg12[%c0_63, %c0_64, %c0_65, %c0_66] : memref<2x4x8x32xbf16, #tpu.memory_space<vmem>>, vector<1x4x8x32xbf16>
    %263 = vector.shape_cast %262 : vector<1x4x8x32xbf16> to vector<4x8x32xbf16>
    %cst_67 = arith.constant 0.000000e+00 : f32
    %264 = vector.broadcast %cst_67 : f32 to vector<18x32xf32>
    %265 = vector.extract_strided_slice %255 {offsets = [0, 0], sizes = [18, 8], strides = [1, 1]} : vector<18x32xf32> to vector<18x8xf32>
    %266 = arith.truncf %265 : vector<18x8xf32> to vector<18x8xbf16>
    %267 = vector.extract_strided_slice %258 {offsets = [0, 0], sizes = [18, 8], strides = [1, 1]} : vector<18x32xf32> to vector<18x8xf32>
    %268 = arith.truncf %267 : vector<18x8xf32> to vector<18x8xbf16>
    %269 = vector.extract_strided_slice %261 {offsets = [0, 0], sizes = [18, 8], strides = [1, 1]} : vector<18x32xf32> to vector<18x8xf32>
    %270 = arith.truncf %269 : vector<18x8xf32> to vector<18x8xbf16>
    %cst_68 = arith.constant dense<0.000000e+00> : vector<18x18xf32>
    %271 = tpu.matmul %266, %268, %cst_68 {dimension_numbers = #tpu.dot_dimension_numbers<[1], [1], [0], [0], [0, 0, 1, 0], [], []>} : vector<18x8xbf16>, vector<18x8xbf16>, vector<18x18xf32> -> vector<18x18xf32>
    %272 = arith.addf %271, %225 : vector<18x18xf32>
    %cst_69 = arith.constant dense<0xFF800000> : vector<18xf32>
    %273 = vector.multi_reduction <maximumf>, %272, %cst_69 [1] : vector<18x18xf32> to vector<18xf32>
    %274 = vector.shape_cast %273 : vector<18xf32> to vector<18x1xf32>
    %275 = vector.broadcast %274 : vector<18x1xf32> to vector<18x18xf32>
    %276 = arith.subf %272, %275 : vector<18x18xf32>
    %277 = math.exp %276 : vector<18x18xf32>
    %cst_70 = arith.constant dense<0.000000e+00> : vector<18xf32>
    %278 = vector.multi_reduction <add>, %277, %cst_70 [1] : vector<18x18xf32> to vector<18xf32>
    %279 = vector.shape_cast %278 : vector<18xf32> to vector<18x1xf32>
    %280 = tpu.reciprocal %279 {approx = true} : vector<18x1xf32> -> vector<18x1xf32>
    %281 = vector.broadcast %280 : vector<18x1xf32> to vector<18x18xf32>
    %282 = arith.mulf %277, %281 : vector<18x18xf32>
    %283 = arith.truncf %282 : vector<18x18xf32> to vector<18x18xbf16>
    %cst_71 = arith.constant dense<0.000000e+00> : vector<18x8xf32>
    %284 = tpu.matmul %283, %270, %cst_71 {dimension_numbers = #tpu.dot_dimension_numbers<[1], [0], [0], [1], [0, 0, 1, 1], [], []>} : vector<18x18xbf16>, vector<18x8xbf16>, vector<18x8xf32> -> vector<18x8xf32>
    %285 = arith.truncf %284 : vector<18x8xf32> to vector<18x8xbf16>
    %286 = vector.extract_strided_slice %263 {offsets = [0, 0, 0], sizes = [1, 8, 32], strides = [1, 1, 1]} : vector<4x8x32xbf16> to vector<1x8x32xbf16>
    %287 = vector.shape_cast %286 : vector<1x8x32xbf16> to vector<8x32xbf16>
    %cst_72 = arith.constant dense<0.000000e+00> : vector<18x32xf32>
    %288 = tpu.matmul %285, %287, %cst_72 {dimension_numbers = #tpu.dot_dimension_numbers<[1], [0], [0], [1], [0, 0, 1, 1], [], []>} : vector<18x8xbf16>, vector<8x32xbf16>, vector<18x32xf32> -> vector<18x32xf32>
    %289 = arith.addf %264, %288 : vector<18x32xf32>
    %290 = vector.extract_strided_slice %255 {offsets = [0, 8], sizes = [18, 8], strides = [1, 1]} : vector<18x32xf32> to vector<18x8xf32>
    %291 = arith.truncf %290 : vector<18x8xf32> to vector<18x8xbf16>
    %292 = vector.extract_strided_slice %258 {offsets = [0, 8], sizes = [18, 8], strides = [1, 1]} : vector<18x32xf32> to vector<18x8xf32>
    %293 = arith.truncf %292 : vector<18x8xf32> to vector<18x8xbf16>
    %294 = vector.extract_strided_slice %261 {offsets = [0, 8], sizes = [18, 8], strides = [1, 1]} : vector<18x32xf32> to vector<18x8xf32>
    %295 = arith.truncf %294 : vector<18x8xf32> to vector<18x8xbf16>
    %cst_73 = arith.constant dense<0.000000e+00> : vector<18x18xf32>
    %296 = tpu.matmul %291, %293, %cst_73 {dimension_numbers = #tpu.dot_dimension_numbers<[1], [1], [0], [0], [0, 0, 1, 0], [], []>} : vector<18x8xbf16>, vector<18x8xbf16>, vector<18x18xf32> -> vector<18x18xf32>
    %297 = arith.addf %296, %225 : vector<18x18xf32>
    %cst_74 = arith.constant dense<0xFF800000> : vector<18xf32>
    %298 = vector.multi_reduction <maximumf>, %297, %cst_74 [1] : vector<18x18xf32> to vector<18xf32>
    %299 = vector.shape_cast %298 : vector<18xf32> to vector<18x1xf32>
    %300 = vector.broadcast %299 : vector<18x1xf32> to vector<18x18xf32>
    %301 = arith.subf %297, %300 : vector<18x18xf32>
    %302 = math.exp %301 : vector<18x18xf32>
    %cst_75 = arith.constant dense<0.000000e+00> : vector<18xf32>
    %303 = vector.multi_reduction <add>, %302, %cst_75 [1] : vector<18x18xf32> to vector<18xf32>
    %304 = vector.shape_cast %303 : vector<18xf32> to vector<18x1xf32>
    %305 = tpu.reciprocal %304 {approx = true} : vector<18x1xf32> -> vector<18x1xf32>
    %306 = vector.broadcast %305 : vector<18x1xf32> to vector<18x18xf32>
    %307 = arith.mulf %302, %306 : vector<18x18xf32>
    %308 = arith.truncf %307 : vector<18x18xf32> to vector<18x18xbf16>
    %cst_76 = arith.constant dense<0.000000e+00> : vector<18x8xf32>
    %309 = tpu.matmul %308, %295, %cst_76 {dimension_numbers = #tpu.dot_dimension_numbers<[1], [0], [0], [1], [0, 0, 1, 1], [], []>} : vector<18x18xbf16>, vector<18x8xbf16>, vector<18x8xf32> -> vector<18x8xf32>
    %310 = arith.truncf %309 : vector<18x8xf32> to vector<18x8xbf16>
    %311 = vector.extract_strided_slice %263 {offsets = [1, 0, 0], sizes = [1, 8, 32], strides = [1, 1, 1]} : vector<4x8x32xbf16> to vector<1x8x32xbf16>
    %312 = vector.shape_cast %311 : vector<1x8x32xbf16> to vector<8x32xbf16>
    %cst_77 = arith.constant dense<0.000000e+00> : vector<18x32xf32>
    %313 = tpu.matmul %310, %312, %cst_77 {dimension_numbers = #tpu.dot_dimension_numbers<[1], [0], [0], [1], [0, 0, 1, 1], [], []>} : vector<18x8xbf16>, vector<8x32xbf16>, vector<18x32xf32> -> vector<18x32xf32>
    %314 = arith.addf %289, %313 : vector<18x32xf32>
    %315 = vector.extract_strided_slice %255 {offsets = [0, 16], sizes = [18, 8], strides = [1, 1]} : vector<18x32xf32> to vector<18x8xf32>
    %316 = arith.truncf %315 : vector<18x8xf32> to vector<18x8xbf16>
    %317 = vector.extract_strided_slice %258 {offsets = [0, 16], sizes = [18, 8], strides = [1, 1]} : vector<18x32xf32> to vector<18x8xf32>
    %318 = arith.truncf %317 : vector<18x8xf32> to vector<18x8xbf16>
    %319 = vector.extract_strided_slice %261 {offsets = [0, 16], sizes = [18, 8], strides = [1, 1]} : vector<18x32xf32> to vector<18x8xf32>
    %320 = arith.truncf %319 : vector<18x8xf32> to vector<18x8xbf16>
    %cst_78 = arith.constant dense<0.000000e+00> : vector<18x18xf32>
    %321 = tpu.matmul %316, %318, %cst_78 {dimension_numbers = #tpu.dot_dimension_numbers<[1], [1], [0], [0], [0, 0, 1, 0], [], []>} : vector<18x8xbf16>, vector<18x8xbf16>, vector<18x18xf32> -> vector<18x18xf32>
    %322 = arith.addf %321, %225 : vector<18x18xf32>
    %cst_79 = arith.constant dense<0xFF800000> : vector<18xf32>
    %323 = vector.multi_reduction <maximumf>, %322, %cst_79 [1] : vector<18x18xf32> to vector<18xf32>
    %324 = vector.shape_cast %323 : vector<18xf32> to vector<18x1xf32>
    %325 = vector.broadcast %324 : vector<18x1xf32> to vector<18x18xf32>
    %326 = arith.subf %322, %325 : vector<18x18xf32>
    %327 = math.exp %326 : vector<18x18xf32>
    %cst_80 = arith.constant dense<0.000000e+00> : vector<18xf32>
    %328 = vector.multi_reduction <add>, %327, %cst_80 [1] : vector<18x18xf32> to vector<18xf32>
    %329 = vector.shape_cast %328 : vector<18xf32> to vector<18x1xf32>
    %330 = tpu.reciprocal %329 {approx = true} : vector<18x1xf32> -> vector<18x1xf32>
    %331 = vector.broadcast %330 : vector<18x1xf32> to vector<18x18xf32>
    %332 = arith.mulf %327, %331 : vector<18x18xf32>
    %333 = arith.truncf %332 : vector<18x18xf32> to vector<18x18xbf16>
    %cst_81 = arith.constant dense<0.000000e+00> : vector<18x8xf32>
    %334 = tpu.matmul %333, %320, %cst_81 {dimension_numbers = #tpu.dot_dimension_numbers<[1], [0], [0], [1], [0, 0, 1, 1], [], []>} : vector<18x18xbf16>, vector<18x8xbf16>, vector<18x8xf32> -> vector<18x8xf32>
    %335 = arith.truncf %334 : vector<18x8xf32> to vector<18x8xbf16>
    %336 = vector.extract_strided_slice %263 {offsets = [2, 0, 0], sizes = [1, 8, 32], strides = [1, 1, 1]} : vector<4x8x32xbf16> to vector<1x8x32xbf16>
    %337 = vector.shape_cast %336 : vector<1x8x32xbf16> to vector<8x32xbf16>
    %cst_82 = arith.constant dense<0.000000e+00> : vector<18x32xf32>
    %338 = tpu.matmul %335, %337, %cst_82 {dimension_numbers = #tpu.dot_dimension_numbers<[1], [0], [0], [1], [0, 0, 1, 1], [], []>} : vector<18x8xbf16>, vector<8x32xbf16>, vector<18x32xf32> -> vector<18x32xf32>
    %339 = arith.addf %314, %338 : vector<18x32xf32>
    %340 = vector.extract_strided_slice %255 {offsets = [0, 24], sizes = [18, 8], strides = [1, 1]} : vector<18x32xf32> to vector<18x8xf32>
    %341 = arith.truncf %340 : vector<18x8xf32> to vector<18x8xbf16>
    %342 = vector.extract_strided_slice %258 {offsets = [0, 24], sizes = [18, 8], strides = [1, 1]} : vector<18x32xf32> to vector<18x8xf32>
    %343 = arith.truncf %342 : vector<18x8xf32> to vector<18x8xbf16>
    %344 = vector.extract_strided_slice %261 {offsets = [0, 24], sizes = [18, 8], strides = [1, 1]} : vector<18x32xf32> to vector<18x8xf32>
    %345 = arith.truncf %344 : vector<18x8xf32> to vector<18x8xbf16>
    %cst_83 = arith.constant dense<0.000000e+00> : vector<18x18xf32>
    %346 = tpu.matmul %341, %343, %cst_83 {dimension_numbers = #tpu.dot_dimension_numbers<[1], [1], [0], [0], [0, 0, 1, 0], [], []>} : vector<18x8xbf16>, vector<18x8xbf16>, vector<18x18xf32> -> vector<18x18xf32>
    %347 = arith.addf %346, %225 : vector<18x18xf32>
    %cst_84 = arith.constant dense<0xFF800000> : vector<18xf32>
    %348 = vector.multi_reduction <maximumf>, %347, %cst_84 [1] : vector<18x18xf32> to vector<18xf32>
    %349 = vector.shape_cast %348 : vector<18xf32> to vector<18x1xf32>
    %350 = vector.broadcast %349 : vector<18x1xf32> to vector<18x18xf32>
    %351 = arith.subf %347, %350 : vector<18x18xf32>
    %352 = math.exp %351 : vector<18x18xf32>
    %cst_85 = arith.constant dense<0.000000e+00> : vector<18xf32>
    %353 = vector.multi_reduction <add>, %352, %cst_85 [1] : vector<18x18xf32> to vector<18xf32>
    %354 = vector.shape_cast %353 : vector<18xf32> to vector<18x1xf32>
    %355 = tpu.reciprocal %354 {approx = true} : vector<18x1xf32> -> vector<18x1xf32>
    %356 = vector.broadcast %355 : vector<18x1xf32> to vector<18x18xf32>
    %357 = arith.mulf %352, %356 : vector<18x18xf32>
    %358 = arith.truncf %357 : vector<18x18xf32> to vector<18x18xbf16>
    %cst_86 = arith.constant dense<0.000000e+00> : vector<18x8xf32>
    %359 = tpu.matmul %358, %345, %cst_86 {dimension_numbers = #tpu.dot_dimension_numbers<[1], [0], [0], [1], [0, 0, 1, 1], [], []>} : vector<18x18xbf16>, vector<18x8xbf16>, vector<18x8xf32> -> vector<18x8xf32>
    %360 = arith.truncf %359 : vector<18x8xf32> to vector<18x8xbf16>
    %361 = vector.extract_strided_slice %263 {offsets = [3, 0, 0], sizes = [1, 8, 32], strides = [1, 1, 1]} : vector<4x8x32xbf16> to vector<1x8x32xbf16>
    %362 = vector.shape_cast %361 : vector<1x8x32xbf16> to vector<8x32xbf16>
    %cst_87 = arith.constant dense<0.000000e+00> : vector<18x32xf32>
    %363 = tpu.matmul %360, %362, %cst_87 {dimension_numbers = #tpu.dot_dimension_numbers<[1], [0], [0], [1], [0, 0, 1, 1], [], []>} : vector<18x8xbf16>, vector<8x32xbf16>, vector<18x32xf32> -> vector<18x32xf32>
    %364 = arith.addf %339, %363 : vector<18x32xf32>
    %365 = arith.addf %187, %364 : vector<18x32xf32>
    %c0_88 = arith.constant 0 : index
    %c0_89 = arith.constant 0 : index
    %c0_90 = arith.constant 0 : index
    %366 = vector.load %arg13[%c0_88, %c0_89, %c0_90] : memref<2x1x32xf32, #tpu.memory_space<vmem>>, vector<1x1x32xf32>
    %367 = vector.shape_cast %366 : vector<1x1x32xf32> to vector<1x32xf32>
    %368 = vector.broadcast %367 : vector<1x32xf32> to vector<18x32xf32>
    %369 = arith.addf %365, %368 : vector<18x32xf32>
    %c0_91 = arith.constant 0 : index
    %c0_92 = arith.constant 0 : index
    %c0_93 = arith.constant 0 : index
    %370 = vector.load %arg14[%c0_91, %c0_92, %c0_93] : memref<2x1x32xf32, #tpu.memory_space<vmem>>, vector<1x1x32xf32>
    %371 = vector.shape_cast %370 : vector<1x1x32xf32> to vector<1x32xf32>
    %c0_94 = arith.constant 0 : index
    %c0_95 = arith.constant 0 : index
    %c0_96 = arith.constant 0 : index
    %372 = vector.load %arg15[%c0_94, %c0_95, %c0_96] : memref<2x1x32xf32, #tpu.memory_space<vmem>>, vector<1x1x32xf32>
    %373 = vector.shape_cast %372 : vector<1x1x32xf32> to vector<1x32xf32>
    %cst_97 = arith.constant dense<0.000000e+00> : vector<18xf32>
    %374 = vector.multi_reduction <add>, %369, %cst_97 [1] : vector<18x32xf32> to vector<18xf32>
    %375 = vector.shape_cast %374 : vector<18xf32> to vector<18x1xf32>
    %cst_98 = arith.constant 3.200000e+01 : f32
    %376 = vector.broadcast %cst_98 : f32 to vector<18x1xf32>
    %377 = arith.divf %375, %376 : vector<18x1xf32>
    %378 = vector.broadcast %377 : vector<18x1xf32> to vector<18x32xf32>
    %379 = arith.subf %369, %378 : vector<18x32xf32>
    %380 = arith.mulf %379, %379 : vector<18x32xf32>
    %cst_99 = arith.constant dense<0.000000e+00> : vector<18xf32>
    %381 = vector.multi_reduction <add>, %380, %cst_99 [1] : vector<18x32xf32> to vector<18xf32>
    %382 = vector.shape_cast %381 : vector<18xf32> to vector<18x1xf32>
    %cst_100 = arith.constant 3.200000e+01 : f32
    %383 = vector.broadcast %cst_100 : f32 to vector<18x1xf32>
    %384 = arith.divf %382, %383 : vector<18x1xf32>
    %385 = vector.broadcast %377 : vector<18x1xf32> to vector<18x32xf32>
    %386 = arith.subf %369, %385 : vector<18x32xf32>
    %cst_101 = arith.constant 9.99999974E-6 : f32
    %387 = vector.broadcast %cst_101 : f32 to vector<18x1xf32>
    %388 = arith.addf %384, %387 : vector<18x1xf32>
    %389 = math.rsqrt %388 : vector<18x1xf32>
    %390 = vector.broadcast %389 : vector<18x1xf32> to vector<18x32xf32>
    %391 = arith.mulf %386, %390 : vector<18x32xf32>
    %392 = vector.broadcast %371 : vector<1x32xf32> to vector<18x32xf32>
    %393 = arith.mulf %391, %392 : vector<18x32xf32>
    %394 = vector.broadcast %373 : vector<1x32xf32> to vector<18x32xf32>
    %395 = arith.addf %393, %394 : vector<18x32xf32>
    %396 = arith.truncf %395 : vector<18x32xf32> to vector<18x32xbf16>
    %c0_102 = arith.constant 0 : index
    %c0_103 = arith.constant 0 : index
    %c0_104 = arith.constant 0 : index
    %397 = vector.load %arg16[%c0_102, %c0_103, %c0_104] : memref<2x32x64xbf16, #tpu.memory_space<vmem>>, vector<1x32x64xbf16>
    %398 = vector.shape_cast %397 : vector<1x32x64xbf16> to vector<32x64xbf16>
    %cst_105 = arith.constant dense<0.000000e+00> : vector<18x64xf32>
    %399 = tpu.matmul %396, %398, %cst_105 {dimension_numbers = #tpu.dot_dimension_numbers<[1], [0], [0], [1], [0, 0, 1, 1], [], []>} : vector<18x32xbf16>, vector<32x64xbf16>, vector<18x64xf32> -> vector<18x64xf32>
    %c0_106 = arith.constant 0 : index
    %c0_107 = arith.constant 0 : index
    %c0_108 = arith.constant 0 : index
    %400 = vector.load %arg17[%c0_106, %c0_107, %c0_108] : memref<2x1x64xf32, #tpu.memory_space<vmem>>, vector<1x1x64xf32>
    %401 = vector.shape_cast %400 : vector<1x1x64xf32> to vector<1x64xf32>
    %402 = vector.broadcast %401 : vector<1x64xf32> to vector<18x64xf32>
    %403 = arith.addf %399, %402 : vector<18x64xf32>
    %cst_109 = arith.constant 0.000000e+00 : f32
    %404 = vector.broadcast %cst_109 : f32 to vector<18x64xf32>
    %405 = arith.maximumf %403, %404 : vector<18x64xf32>
    %406 = arith.truncf %405 : vector<18x64xf32> to vector<18x64xbf16>
    %c0_110 = arith.constant 0 : index
    %c0_111 = arith.constant 0 : index
    %c0_112 = arith.constant 0 : index
    %407 = vector.load %arg18[%c0_110, %c0_111, %c0_112] : memref<2x64x32xbf16, #tpu.memory_space<vmem>>, vector<1x64x32xbf16>
    %408 = vector.shape_cast %407 : vector<1x64x32xbf16> to vector<64x32xbf16>
    %cst_113 = arith.constant dense<0.000000e+00> : vector<18x32xf32>
    %409 = tpu.matmul %406, %408, %cst_113 {dimension_numbers = #tpu.dot_dimension_numbers<[1], [0], [0], [1], [0, 0, 1, 1], [], []>} : vector<18x64xbf16>, vector<64x32xbf16>, vector<18x32xf32> -> vector<18x32xf32>
    %c0_114 = arith.constant 0 : index
    %c0_115 = arith.constant 0 : index
    %c0_116 = arith.constant 0 : index
    %410 = vector.load %arg19[%c0_114, %c0_115, %c0_116] : memref<2x1x32xf32, #tpu.memory_space<vmem>>, vector<1x1x32xf32>
    %411 = vector.shape_cast %410 : vector<1x1x32xf32> to vector<1x32xf32>
    %412 = vector.broadcast %411 : vector<1x32xf32> to vector<18x32xf32>
    %413 = arith.addf %409, %412 : vector<18x32xf32>
    %414 = arith.addf %369, %413 : vector<18x32xf32>
    %c1 = arith.constant 1 : index
    %c0_117 = arith.constant 0 : index
    %c0_118 = arith.constant 0 : index
    %415 = vector.load %arg7[%c1, %c0_117, %c0_118] : memref<2x1x32xf32, #tpu.memory_space<vmem>>, vector<1x1x32xf32>
    %416 = vector.shape_cast %415 : vector<1x1x32xf32> to vector<1x32xf32>
    %c1_119 = arith.constant 1 : index
    %c0_120 = arith.constant 0 : index
    %c0_121 = arith.constant 0 : index
    %417 = vector.load %arg8[%c1_119, %c0_120, %c0_121] : memref<2x1x32xf32, #tpu.memory_space<vmem>>, vector<1x1x32xf32>
    %418 = vector.shape_cast %417 : vector<1x1x32xf32> to vector<1x32xf32>
    %cst_122 = arith.constant dense<0.000000e+00> : vector<18xf32>
    %419 = vector.multi_reduction <add>, %414, %cst_122 [1] : vector<18x32xf32> to vector<18xf32>
    %420 = vector.shape_cast %419 : vector<18xf32> to vector<18x1xf32>
    %cst_123 = arith.constant 3.200000e+01 : f32
    %421 = vector.broadcast %cst_123 : f32 to vector<18x1xf32>
    %422 = arith.divf %420, %421 : vector<18x1xf32>
    %423 = vector.broadcast %422 : vector<18x1xf32> to vector<18x32xf32>
    %424 = arith.subf %414, %423 : vector<18x32xf32>
    %425 = arith.mulf %424, %424 : vector<18x32xf32>
    %cst_124 = arith.constant dense<0.000000e+00> : vector<18xf32>
    %426 = vector.multi_reduction <add>, %425, %cst_124 [1] : vector<18x32xf32> to vector<18xf32>
    %427 = vector.shape_cast %426 : vector<18xf32> to vector<18x1xf32>
    %cst_125 = arith.constant 3.200000e+01 : f32
    %428 = vector.broadcast %cst_125 : f32 to vector<18x1xf32>
    %429 = arith.divf %427, %428 : vector<18x1xf32>
    %430 = vector.broadcast %422 : vector<18x1xf32> to vector<18x32xf32>
    %431 = arith.subf %414, %430 : vector<18x32xf32>
    %cst_126 = arith.constant 9.99999974E-6 : f32
    %432 = vector.broadcast %cst_126 : f32 to vector<18x1xf32>
    %433 = arith.addf %429, %432 : vector<18x1xf32>
    %434 = math.rsqrt %433 : vector<18x1xf32>
    %435 = vector.broadcast %434 : vector<18x1xf32> to vector<18x32xf32>
    %436 = arith.mulf %431, %435 : vector<18x32xf32>
    %437 = vector.broadcast %416 : vector<1x32xf32> to vector<18x32xf32>
    %438 = arith.mulf %436, %437 : vector<18x32xf32>
    %439 = vector.broadcast %418 : vector<1x32xf32> to vector<18x32xf32>
    %440 = arith.addf %438, %439 : vector<18x32xf32>
    %441 = arith.truncf %440 : vector<18x32xf32> to vector<18x32xbf16>
    %c1_127 = arith.constant 1 : index
    %c0_128 = arith.constant 0 : index
    %c0_129 = arith.constant 0 : index
    %442 = vector.load %arg9[%c1_127, %c0_128, %c0_129] : memref<2x32x32xbf16, #tpu.memory_space<vmem>>, vector<1x32x32xbf16>
    %443 = vector.shape_cast %442 : vector<1x32x32xbf16> to vector<32x32xbf16>
    %cst_130 = arith.constant dense<0.000000e+00> : vector<18x32xf32>
    %444 = tpu.matmul %441, %443, %cst_130 {dimension_numbers = #tpu.dot_dimension_numbers<[1], [0], [0], [1], [0, 0, 1, 1], [], []>} : vector<18x32xbf16>, vector<32x32xbf16>, vector<18x32xf32> -> vector<18x32xf32>
    %c1_131 = arith.constant 1 : index
    %c0_132 = arith.constant 0 : index
    %c0_133 = arith.constant 0 : index
    %445 = vector.load %arg10[%c1_131, %c0_132, %c0_133] : memref<2x32x32xbf16, #tpu.memory_space<vmem>>, vector<1x32x32xbf16>
    %446 = vector.shape_cast %445 : vector<1x32x32xbf16> to vector<32x32xbf16>
    %cst_134 = arith.constant dense<0.000000e+00> : vector<18x32xf32>
    %447 = tpu.matmul %441, %446, %cst_134 {dimension_numbers = #tpu.dot_dimension_numbers<[1], [0], [0], [1], [0, 0, 1, 1], [], []>} : vector<18x32xbf16>, vector<32x32xbf16>, vector<18x32xf32> -> vector<18x32xf32>
    %c1_135 = arith.constant 1 : index
    %c0_136 = arith.constant 0 : index
    %c0_137 = arith.constant 0 : index
    %448 = vector.load %arg11[%c1_135, %c0_136, %c0_137] : memref<2x32x32xbf16, #tpu.memory_space<vmem>>, vector<1x32x32xbf16>
    %449 = vector.shape_cast %448 : vector<1x32x32xbf16> to vector<32x32xbf16>
    %cst_138 = arith.constant dense<0.000000e+00> : vector<18x32xf32>
    %450 = tpu.matmul %441, %449, %cst_138 {dimension_numbers = #tpu.dot_dimension_numbers<[1], [0], [0], [1], [0, 0, 1, 1], [], []>} : vector<18x32xbf16>, vector<32x32xbf16>, vector<18x32xf32> -> vector<18x32xf32>
    %c1_139 = arith.constant 1 : index
    %c0_140 = arith.constant 0 : index
    %c0_141 = arith.constant 0 : index
    %c0_142 = arith.constant 0 : index
    %451 = vector.load %arg12[%c1_139, %c0_140, %c0_141, %c0_142] : memref<2x4x8x32xbf16, #tpu.memory_space<vmem>>, vector<1x4x8x32xbf16>
    %452 = vector.shape_cast %451 : vector<1x4x8x32xbf16> to vector<4x8x32xbf16>
    %cst_143 = arith.constant 0.000000e+00 : f32
    %453 = vector.broadcast %cst_143 : f32 to vector<18x32xf32>
    %454 = vector.extract_strided_slice %444 {offsets = [0, 0], sizes = [18, 8], strides = [1, 1]} : vector<18x32xf32> to vector<18x8xf32>
    %455 = arith.truncf %454 : vector<18x8xf32> to vector<18x8xbf16>
    %456 = vector.extract_strided_slice %447 {offsets = [0, 0], sizes = [18, 8], strides = [1, 1]} : vector<18x32xf32> to vector<18x8xf32>
    %457 = arith.truncf %456 : vector<18x8xf32> to vector<18x8xbf16>
    %458 = vector.extract_strided_slice %450 {offsets = [0, 0], sizes = [18, 8], strides = [1, 1]} : vector<18x32xf32> to vector<18x8xf32>
    %459 = arith.truncf %458 : vector<18x8xf32> to vector<18x8xbf16>
    %cst_144 = arith.constant dense<0.000000e+00> : vector<18x18xf32>
    %460 = tpu.matmul %455, %457, %cst_144 {dimension_numbers = #tpu.dot_dimension_numbers<[1], [1], [0], [0], [0, 0, 1, 0], [], []>} : vector<18x8xbf16>, vector<18x8xbf16>, vector<18x18xf32> -> vector<18x18xf32>
    %461 = arith.addf %460, %225 : vector<18x18xf32>
    %cst_145 = arith.constant dense<0xFF800000> : vector<18xf32>
    %462 = vector.multi_reduction <maximumf>, %461, %cst_145 [1] : vector<18x18xf32> to vector<18xf32>
    %463 = vector.shape_cast %462 : vector<18xf32> to vector<18x1xf32>
    %464 = vector.broadcast %463 : vector<18x1xf32> to vector<18x18xf32>
    %465 = arith.subf %461, %464 : vector<18x18xf32>
    %466 = math.exp %465 : vector<18x18xf32>
    %cst_146 = arith.constant dense<0.000000e+00> : vector<18xf32>
    %467 = vector.multi_reduction <add>, %466, %cst_146 [1] : vector<18x18xf32> to vector<18xf32>
    %468 = vector.shape_cast %467 : vector<18xf32> to vector<18x1xf32>
    %469 = tpu.reciprocal %468 {approx = true} : vector<18x1xf32> -> vector<18x1xf32>
    %470 = vector.broadcast %469 : vector<18x1xf32> to vector<18x18xf32>
    %471 = arith.mulf %466, %470 : vector<18x18xf32>
    %472 = arith.truncf %471 : vector<18x18xf32> to vector<18x18xbf16>
    %cst_147 = arith.constant dense<0.000000e+00> : vector<18x8xf32>
    %473 = tpu.matmul %472, %459, %cst_147 {dimension_numbers = #tpu.dot_dimension_numbers<[1], [0], [0], [1], [0, 0, 1, 1], [], []>} : vector<18x18xbf16>, vector<18x8xbf16>, vector<18x8xf32> -> vector<18x8xf32>
    %474 = arith.truncf %473 : vector<18x8xf32> to vector<18x8xbf16>
    %475 = vector.extract_strided_slice %452 {offsets = [0, 0, 0], sizes = [1, 8, 32], strides = [1, 1, 1]} : vector<4x8x32xbf16> to vector<1x8x32xbf16>
    %476 = vector.shape_cast %475 : vector<1x8x32xbf16> to vector<8x32xbf16>
    %cst_148 = arith.constant dense<0.000000e+00> : vector<18x32xf32>
    %477 = tpu.matmul %474, %476, %cst_148 {dimension_numbers = #tpu.dot_dimension_numbers<[1], [0], [0], [1], [0, 0, 1, 1], [], []>} : vector<18x8xbf16>, vector<8x32xbf16>, vector<18x32xf32> -> vector<18x32xf32>
    %478 = arith.addf %453, %477 : vector<18x32xf32>
    %479 = vector.extract_strided_slice %444 {offsets = [0, 8], sizes = [18, 8], strides = [1, 1]} : vector<18x32xf32> to vector<18x8xf32>
    %480 = arith.truncf %479 : vector<18x8xf32> to vector<18x8xbf16>
    %481 = vector.extract_strided_slice %447 {offsets = [0, 8], sizes = [18, 8], strides = [1, 1]} : vector<18x32xf32> to vector<18x8xf32>
    %482 = arith.truncf %481 : vector<18x8xf32> to vector<18x8xbf16>
    %483 = vector.extract_strided_slice %450 {offsets = [0, 8], sizes = [18, 8], strides = [1, 1]} : vector<18x32xf32> to vector<18x8xf32>
    %484 = arith.truncf %483 : vector<18x8xf32> to vector<18x8xbf16>
    %cst_149 = arith.constant dense<0.000000e+00> : vector<18x18xf32>
    %485 = tpu.matmul %480, %482, %cst_149 {dimension_numbers = #tpu.dot_dimension_numbers<[1], [1], [0], [0], [0, 0, 1, 0], [], []>} : vector<18x8xbf16>, vector<18x8xbf16>, vector<18x18xf32> -> vector<18x18xf32>
    %486 = arith.addf %485, %225 : vector<18x18xf32>
    %cst_150 = arith.constant dense<0xFF800000> : vector<18xf32>
    %487 = vector.multi_reduction <maximumf>, %486, %cst_150 [1] : vector<18x18xf32> to vector<18xf32>
    %488 = vector.shape_cast %487 : vector<18xf32> to vector<18x1xf32>
    %489 = vector.broadcast %488 : vector<18x1xf32> to vector<18x18xf32>
    %490 = arith.subf %486, %489 : vector<18x18xf32>
    %491 = math.exp %490 : vector<18x18xf32>
    %cst_151 = arith.constant dense<0.000000e+00> : vector<18xf32>
    %492 = vector.multi_reduction <add>, %491, %cst_151 [1] : vector<18x18xf32> to vector<18xf32>
    %493 = vector.shape_cast %492 : vector<18xf32> to vector<18x1xf32>
    %494 = tpu.reciprocal %493 {approx = true} : vector<18x1xf32> -> vector<18x1xf32>
    %495 = vector.broadcast %494 : vector<18x1xf32> to vector<18x18xf32>
    %496 = arith.mulf %491, %495 : vector<18x18xf32>
    %497 = arith.truncf %496 : vector<18x18xf32> to vector<18x18xbf16>
    %cst_152 = arith.constant dense<0.000000e+00> : vector<18x8xf32>
    %498 = tpu.matmul %497, %484, %cst_152 {dimension_numbers = #tpu.dot_dimension_numbers<[1], [0], [0], [1], [0, 0, 1, 1], [], []>} : vector<18x18xbf16>, vector<18x8xbf16>, vector<18x8xf32> -> vector<18x8xf32>
    %499 = arith.truncf %498 : vector<18x8xf32> to vector<18x8xbf16>
    %500 = vector.extract_strided_slice %452 {offsets = [1, 0, 0], sizes = [1, 8, 32], strides = [1, 1, 1]} : vector<4x8x32xbf16> to vector<1x8x32xbf16>
    %501 = vector.shape_cast %500 : vector<1x8x32xbf16> to vector<8x32xbf16>
    %cst_153 = arith.constant dense<0.000000e+00> : vector<18x32xf32>
    %502 = tpu.matmul %499, %501, %cst_153 {dimension_numbers = #tpu.dot_dimension_numbers<[1], [0], [0], [1], [0, 0, 1, 1], [], []>} : vector<18x8xbf16>, vector<8x32xbf16>, vector<18x32xf32> -> vector<18x32xf32>
    %503 = arith.addf %478, %502 : vector<18x32xf32>
    %504 = vector.extract_strided_slice %444 {offsets = [0, 16], sizes = [18, 8], strides = [1, 1]} : vector<18x32xf32> to vector<18x8xf32>
    %505 = arith.truncf %504 : vector<18x8xf32> to vector<18x8xbf16>
    %506 = vector.extract_strided_slice %447 {offsets = [0, 16], sizes = [18, 8], strides = [1, 1]} : vector<18x32xf32> to vector<18x8xf32>
    %507 = arith.truncf %506 : vector<18x8xf32> to vector<18x8xbf16>
    %508 = vector.extract_strided_slice %450 {offsets = [0, 16], sizes = [18, 8], strides = [1, 1]} : vector<18x32xf32> to vector<18x8xf32>
    %509 = arith.truncf %508 : vector<18x8xf32> to vector<18x8xbf16>
    %cst_154 = arith.constant dense<0.000000e+00> : vector<18x18xf32>
    %510 = tpu.matmul %505, %507, %cst_154 {dimension_numbers = #tpu.dot_dimension_numbers<[1], [1], [0], [0], [0, 0, 1, 0], [], []>} : vector<18x8xbf16>, vector<18x8xbf16>, vector<18x18xf32> -> vector<18x18xf32>
    %511 = arith.addf %510, %225 : vector<18x18xf32>
    %cst_155 = arith.constant dense<0xFF800000> : vector<18xf32>
    %512 = vector.multi_reduction <maximumf>, %511, %cst_155 [1] : vector<18x18xf32> to vector<18xf32>
    %513 = vector.shape_cast %512 : vector<18xf32> to vector<18x1xf32>
    %514 = vector.broadcast %513 : vector<18x1xf32> to vector<18x18xf32>
    %515 = arith.subf %511, %514 : vector<18x18xf32>
    %516 = math.exp %515 : vector<18x18xf32>
    %cst_156 = arith.constant dense<0.000000e+00> : vector<18xf32>
    %517 = vector.multi_reduction <add>, %516, %cst_156 [1] : vector<18x18xf32> to vector<18xf32>
    %518 = vector.shape_cast %517 : vector<18xf32> to vector<18x1xf32>
    %519 = tpu.reciprocal %518 {approx = true} : vector<18x1xf32> -> vector<18x1xf32>
    %520 = vector.broadcast %519 : vector<18x1xf32> to vector<18x18xf32>
    %521 = arith.mulf %516, %520 : vector<18x18xf32>
    %522 = arith.truncf %521 : vector<18x18xf32> to vector<18x18xbf16>
    %cst_157 = arith.constant dense<0.000000e+00> : vector<18x8xf32>
    %523 = tpu.matmul %522, %509, %cst_157 {dimension_numbers = #tpu.dot_dimension_numbers<[1], [0], [0], [1], [0, 0, 1, 1], [], []>} : vector<18x18xbf16>, vector<18x8xbf16>, vector<18x8xf32> -> vector<18x8xf32>
    %524 = arith.truncf %523 : vector<18x8xf32> to vector<18x8xbf16>
    %525 = vector.extract_strided_slice %452 {offsets = [2, 0, 0], sizes = [1, 8, 32], strides = [1, 1, 1]} : vector<4x8x32xbf16> to vector<1x8x32xbf16>
    %526 = vector.shape_cast %525 : vector<1x8x32xbf16> to vector<8x32xbf16>
    %cst_158 = arith.constant dense<0.000000e+00> : vector<18x32xf32>
    %527 = tpu.matmul %524, %526, %cst_158 {dimension_numbers = #tpu.dot_dimension_numbers<[1], [0], [0], [1], [0, 0, 1, 1], [], []>} : vector<18x8xbf16>, vector<8x32xbf16>, vector<18x32xf32> -> vector<18x32xf32>
    %528 = arith.addf %503, %527 : vector<18x32xf32>
    %529 = vector.extract_strided_slice %444 {offsets = [0, 24], sizes = [18, 8], strides = [1, 1]} : vector<18x32xf32> to vector<18x8xf32>
    %530 = arith.truncf %529 : vector<18x8xf32> to vector<18x8xbf16>
    %531 = vector.extract_strided_slice %447 {offsets = [0, 24], sizes = [18, 8], strides = [1, 1]} : vector<18x32xf32> to vector<18x8xf32>
    %532 = arith.truncf %531 : vector<18x8xf32> to vector<18x8xbf16>
    %533 = vector.extract_strided_slice %450 {offsets = [0, 24], sizes = [18, 8], strides = [1, 1]} : vector<18x32xf32> to vector<18x8xf32>
    %534 = arith.truncf %533 : vector<18x8xf32> to vector<18x8xbf16>
    %cst_159 = arith.constant dense<0.000000e+00> : vector<18x18xf32>
    %535 = tpu.matmul %530, %532, %cst_159 {dimension_numbers = #tpu.dot_dimension_numbers<[1], [1], [0], [0], [0, 0, 1, 0], [], []>} : vector<18x8xbf16>, vector<18x8xbf16>, vector<18x18xf32> -> vector<18x18xf32>
    %536 = arith.addf %535, %225 : vector<18x18xf32>
    %cst_160 = arith.constant dense<0xFF800000> : vector<18xf32>
    %537 = vector.multi_reduction <maximumf>, %536, %cst_160 [1] : vector<18x18xf32> to vector<18xf32>
    %538 = vector.shape_cast %537 : vector<18xf32> to vector<18x1xf32>
    %539 = vector.broadcast %538 : vector<18x1xf32> to vector<18x18xf32>
    %540 = arith.subf %536, %539 : vector<18x18xf32>
    %541 = math.exp %540 : vector<18x18xf32>
    %cst_161 = arith.constant dense<0.000000e+00> : vector<18xf32>
    %542 = vector.multi_reduction <add>, %541, %cst_161 [1] : vector<18x18xf32> to vector<18xf32>
    %543 = vector.shape_cast %542 : vector<18xf32> to vector<18x1xf32>
    %544 = tpu.reciprocal %543 {approx = true} : vector<18x1xf32> -> vector<18x1xf32>
    %545 = vector.broadcast %544 : vector<18x1xf32> to vector<18x18xf32>
    %546 = arith.mulf %541, %545 : vector<18x18xf32>
    %547 = arith.truncf %546 : vector<18x18xf32> to vector<18x18xbf16>
    %cst_162 = arith.constant dense<0.000000e+00> : vector<18x8xf32>
    %548 = tpu.matmul %547, %534, %cst_162 {dimension_numbers = #tpu.dot_dimension_numbers<[1], [0], [0], [1], [0, 0, 1, 1], [], []>} : vector<18x18xbf16>, vector<18x8xbf16>, vector<18x8xf32> -> vector<18x8xf32>
    %549 = arith.truncf %548 : vector<18x8xf32> to vector<18x8xbf16>
    %550 = vector.extract_strided_slice %452 {offsets = [3, 0, 0], sizes = [1, 8, 32], strides = [1, 1, 1]} : vector<4x8x32xbf16> to vector<1x8x32xbf16>
    %551 = vector.shape_cast %550 : vector<1x8x32xbf16> to vector<8x32xbf16>
    %cst_163 = arith.constant dense<0.000000e+00> : vector<18x32xf32>
    %552 = tpu.matmul %549, %551, %cst_163 {dimension_numbers = #tpu.dot_dimension_numbers<[1], [0], [0], [1], [0, 0, 1, 1], [], []>} : vector<18x8xbf16>, vector<8x32xbf16>, vector<18x32xf32> -> vector<18x32xf32>
    %553 = arith.addf %528, %552 : vector<18x32xf32>
    %554 = arith.addf %414, %553 : vector<18x32xf32>
    %c1_164 = arith.constant 1 : index
    %c0_165 = arith.constant 0 : index
    %c0_166 = arith.constant 0 : index
    %555 = vector.load %arg13[%c1_164, %c0_165, %c0_166] : memref<2x1x32xf32, #tpu.memory_space<vmem>>, vector<1x1x32xf32>
    %556 = vector.shape_cast %555 : vector<1x1x32xf32> to vector<1x32xf32>
    %557 = vector.broadcast %556 : vector<1x32xf32> to vector<18x32xf32>
    %558 = arith.addf %554, %557 : vector<18x32xf32>
    %c1_167 = arith.constant 1 : index
    %c0_168 = arith.constant 0 : index
    %c0_169 = arith.constant 0 : index
    %559 = vector.load %arg14[%c1_167, %c0_168, %c0_169] : memref<2x1x32xf32, #tpu.memory_space<vmem>>, vector<1x1x32xf32>
    %560 = vector.shape_cast %559 : vector<1x1x32xf32> to vector<1x32xf32>
    %c1_170 = arith.constant 1 : index
    %c0_171 = arith.constant 0 : index
    %c0_172 = arith.constant 0 : index
    %561 = vector.load %arg15[%c1_170, %c0_171, %c0_172] : memref<2x1x32xf32, #tpu.memory_space<vmem>>, vector<1x1x32xf32>
    %562 = vector.shape_cast %561 : vector<1x1x32xf32> to vector<1x32xf32>
    %cst_173 = arith.constant dense<0.000000e+00> : vector<18xf32>
    %563 = vector.multi_reduction <add>, %558, %cst_173 [1] : vector<18x32xf32> to vector<18xf32>
    %564 = vector.shape_cast %563 : vector<18xf32> to vector<18x1xf32>
    %cst_174 = arith.constant 3.200000e+01 : f32
    %565 = vector.broadcast %cst_174 : f32 to vector<18x1xf32>
    %566 = arith.divf %564, %565 : vector<18x1xf32>
    %567 = vector.broadcast %566 : vector<18x1xf32> to vector<18x32xf32>
    %568 = arith.subf %558, %567 : vector<18x32xf32>
    %569 = arith.mulf %568, %568 : vector<18x32xf32>
    %cst_175 = arith.constant dense<0.000000e+00> : vector<18xf32>
    %570 = vector.multi_reduction <add>, %569, %cst_175 [1] : vector<18x32xf32> to vector<18xf32>
    %571 = vector.shape_cast %570 : vector<18xf32> to vector<18x1xf32>
    %cst_176 = arith.constant 3.200000e+01 : f32
    %572 = vector.broadcast %cst_176 : f32 to vector<18x1xf32>
    %573 = arith.divf %571, %572 : vector<18x1xf32>
    %574 = vector.broadcast %566 : vector<18x1xf32> to vector<18x32xf32>
    %575 = arith.subf %558, %574 : vector<18x32xf32>
    %cst_177 = arith.constant 9.99999974E-6 : f32
    %576 = vector.broadcast %cst_177 : f32 to vector<18x1xf32>
    %577 = arith.addf %573, %576 : vector<18x1xf32>
    %578 = math.rsqrt %577 : vector<18x1xf32>
    %579 = vector.broadcast %578 : vector<18x1xf32> to vector<18x32xf32>
    %580 = arith.mulf %575, %579 : vector<18x32xf32>
    %581 = vector.broadcast %560 : vector<1x32xf32> to vector<18x32xf32>
    %582 = arith.mulf %580, %581 : vector<18x32xf32>
    %583 = vector.broadcast %562 : vector<1x32xf32> to vector<18x32xf32>
    %584 = arith.addf %582, %583 : vector<18x32xf32>
    %585 = arith.truncf %584 : vector<18x32xf32> to vector<18x32xbf16>
    %c1_178 = arith.constant 1 : index
    %c0_179 = arith.constant 0 : index
    %c0_180 = arith.constant 0 : index
    %586 = vector.load %arg16[%c1_178, %c0_179, %c0_180] : memref<2x32x64xbf16, #tpu.memory_space<vmem>>, vector<1x32x64xbf16>
    %587 = vector.shape_cast %586 : vector<1x32x64xbf16> to vector<32x64xbf16>
    %cst_181 = arith.constant dense<0.000000e+00> : vector<18x64xf32>
    %588 = tpu.matmul %585, %587, %cst_181 {dimension_numbers = #tpu.dot_dimension_numbers<[1], [0], [0], [1], [0, 0, 1, 1], [], []>} : vector<18x32xbf16>, vector<32x64xbf16>, vector<18x64xf32> -> vector<18x64xf32>
    %c1_182 = arith.constant 1 : index
    %c0_183 = arith.constant 0 : index
    %c0_184 = arith.constant 0 : index
    %589 = vector.load %arg17[%c1_182, %c0_183, %c0_184] : memref<2x1x64xf32, #tpu.memory_space<vmem>>, vector<1x1x64xf32>
    %590 = vector.shape_cast %589 : vector<1x1x64xf32> to vector<1x64xf32>
    %591 = vector.broadcast %590 : vector<1x64xf32> to vector<18x64xf32>
    %592 = arith.addf %588, %591 : vector<18x64xf32>
    %cst_185 = arith.constant 0.000000e+00 : f32
    %593 = vector.broadcast %cst_185 : f32 to vector<18x64xf32>
    %594 = arith.maximumf %592, %593 : vector<18x64xf32>
    %595 = arith.truncf %594 : vector<18x64xf32> to vector<18x64xbf16>
    %c1_186 = arith.constant 1 : index
    %c0_187 = arith.constant 0 : index
    %c0_188 = arith.constant 0 : index
    %596 = vector.load %arg18[%c1_186, %c0_187, %c0_188] : memref<2x64x32xbf16, #tpu.memory_space<vmem>>, vector<1x64x32xbf16>
    %597 = vector.shape_cast %596 : vector<1x64x32xbf16> to vector<64x32xbf16>
    %cst_189 = arith.constant dense<0.000000e+00> : vector<18x32xf32>
    %598 = tpu.matmul %595, %597, %cst_189 {dimension_numbers = #tpu.dot_dimension_numbers<[1], [0], [0], [1], [0, 0, 1, 1], [], []>} : vector<18x64xbf16>, vector<64x32xbf16>, vector<18x32xf32> -> vector<18x32xf32>
    %c1_190 = arith.constant 1 : index
    %c0_191 = arith.constant 0 : index
    %c0_192 = arith.constant 0 : index
    %599 = vector.load %arg19[%c1_190, %c0_191, %c0_192] : memref<2x1x32xf32, #tpu.memory_space<vmem>>, vector<1x1x32xf32>
    %600 = vector.shape_cast %599 : vector<1x1x32xf32> to vector<1x32xf32>
    %601 = vector.broadcast %600 : vector<1x32xf32> to vector<18x32xf32>
    %602 = arith.addf %598, %601 : vector<18x32xf32>
    %603 = arith.addf %558, %602 : vector<18x32xf32>
    %604 = vector.extract_strided_slice %603 {offsets = [0, 0], sizes = [2, 32], strides = [1, 1]} : vector<18x32xf32> to vector<2x32xf32>
    %c0_193 = arith.constant 0 : index
    %c0_194 = arith.constant 0 : index
    %605 = vector.load %arg20[%c0_193, %c0_194] : memref<2x32xf32, #tpu.memory_space<vmem>>, vector<2x32xf32>
    tpu.vector_store %arg20[%c0_193, %c0_194], %604 {strides = array<i32>} : memref<2x32xf32, #tpu.memory_space<vmem>>, vector<2x32xf32>,
    return
  }
}

</mosaic_0001>

<llo_original>
// kernel: tpu_custom_call.1
$region0: #{tpu_custom_call.1}
  #allocation0 [shape = 'u32[]', space=smem, size = 0x4, offset = 0x4, fixed_abs, tag = 'smem constant byte address 0x4 - core index']
  #allocation1 [shape = 'u32[144,128]{1,0:T(1,128)}', space=vmem, size = 0x12000, scoped, tag = 'internal scratch']
  %s0 = inlined_call_operand.vmem [shape: f32[16,4], index: 0, kind: input, shape index: {}]
  %s1 = inlined_call_operand.hbm [shape: f32[2,32], index: 1, kind: input, shape index: {}]
  %s2 = inlined_call_operand.hbm [shape: f32[2,32], index: 2, kind: input, shape index: {}]
  %s3 = inlined_call_operand.hbm [shape: bf16[4,128], index: 3, kind: input, shape index: {}]
  %s4 = inlined_call_operand.hbm [shape: bf16[32,128], index: 4, kind: input, shape index: {}]
  %s5 = inlined_call_operand.vmem [shape: f32[1,128], index: 5, kind: input, shape index: {}]
  %s6 = inlined_call_operand.hbm [shape: f32[1,32], index: 6, kind: input, shape index: {}]
  %s7 = inlined_call_operand.hbm [shape: f32[2,1,32], index: 7, kind: input, shape index: {}]
  %s8 = inlined_call_operand.hbm [shape: f32[2,1,32], index: 8, kind: input, shape index: {}]
  %s9 = inlined_call_operand.vmem [shape: bf16[2,32,32], index: 9, kind: input, shape index: {}]
  %s10 = inlined_call_operand.vmem [shape: bf16[2,32,32], index: 10, kind: input, shape index: {}]
  %s11 = inlined_call_operand.vmem [shape: bf16[2,32,32], index: 11, kind: input, shape index: {}]
  %s12 = inlined_call_operand.vmem [shape: bf16[2,4,8,32], index: 12, kind: input, shape index: {}]
  %s13 = inlined_call_operand.vmem [shape: f32[2,1,32], index: 13, kind: input, shape index: {}]
  %s14 = inlined_call_operand.vmem [shape: f32[2,1,32], index: 14, kind: input, shape index: {}]
  %s15 = inlined_call_operand.vmem [shape: f32[2,1,32], index: 15, kind: input, shape index: {}]
  %s16 = inlined_call_operand.hbm [shape: bf16[2,32,64], index: 16, kind: input, shape index: {}]
  %s17 = inlined_call_operand.vmem [shape: f32[2,1,64], index: 17, kind: input, shape index: {}]
  %s18 = inlined_call_operand.vmem [shape: bf16[2,64,32], index: 18, kind: input, shape index: {}]
  %s19 = inlined_call_operand.vmem [shape: f32[2,1,32], index: 19, kind: input, shape index: {}]
  %s20 = inlined_call_operand.hbm [shape: f32[2,32], index: 20, kind: output, shape index: {}]
  %s21 = sld [smem:[#allocation0]]
  $region122: #{tpu_custom_call.1} parent=0
    _
  %s23 = ssub.s32 1, %s21
  %s24 = scalar_select 0, %s23, %s21
  $region1: #{tpu_custom_call.1} parent=0
    #allocation2 [shape = 'u8[1024]{0}', space=vmem, size = 0x400, scoped, tag = 'input window, operand 1, single buffered']
    #allocation3 [shape = 's32[1]{0}', space=sflag, size = 0x4, scoped, tag = 'scoped memory for tpu_custom_call.1']
    #allocation4 [shape = 's32[1]{0}', space=sflag, size = 0x4, scoped, tag = 'scoped memory for tpu_custom_call.1']
    #allocation5 [shape = 'u8[1024]{0}', space=vmem, size = 0x400, scoped, tag = 'input window, operand 2, single buffered']
    #allocation6 [shape = 's32[1]{0}', space=sflag, size = 0x4, scoped, tag = 'scoped memory for tpu_custom_call.1']
    #allocation7 [shape = 'u8[1024]{0}', space=vmem, size = 0x400, scoped, tag = 'input window, operand 3, single buffered']
    #allocation8 [shape = 'u8[8192]{0}', space=vmem, size = 0x2000, scoped, tag = 'input window, operand 4, single buffered']
    #allocation9 [shape = 's32[1]{0}', space=sflag, size = 0x4, scoped, tag = 'scoped memory for tpu_custom_call.1']
    #allocation10 [shape = 'u8[512]{0}', space=vmem, size = 0x400, scoped, tag = 'input window, operand 6, single buffered']
    #allocation11 [shape = 'u8[1024]{0}', space=vmem, size = 0x400, scoped, tag = 'input window, operand 7, single buffered']
    #allocation12 [shape = 's32[1]{0}', space=sflag, size = 0x4, scoped, tag = 'scoped memory for tpu_custom_call.1']
    #allocation13 [shape = 'u8[1024]{0}', space=vmem, size = 0x400, scoped, tag = 'input window, operand 8, single buffered']
    #allocation14 [shape = 'u8[16384]{0}', space=vmem, size = 0x4000, scoped, tag = 'input window, operand 16, single buffered']
    #allocation15 [shape = 's32[1]{0}', space=sflag, size = 0x4, scoped, tag = 'scoped memory for tpu_custom_call.1']
    #allocation16 [shape = 'u8[1024]{0}', space=vmem, size = 0x400, scoped, tag = 'output window, operand 0, single buffered']
    %25 = vsyncpa [#allocation3], 0
    %26 = vsyncpa [#allocation6], 0
    %27 = vsyncpa [#allocation9], 0
    %28 = vsyncpa [#allocation12], 0
    %29 = vsyncpa [#allocation15], 0
    %30 = vsyncpa [#allocation4], 0
    // Predicated region
    $region2: #{tpu_custom_call.1} parent=1 // pred_check
      _
    $region3: #{tpu_custom_call.1} parent=1 // pred_check_branch
      %32 = sbr.rel (0) target = $region5
    $region4: #{tpu_custom_call.1} parent=1 // pred_region
      _
    $region5: #{tpu_custom_call.1} parent=1 // pred_fallthru
      _
    // Predicated region
    $region6: #{tpu_custom_call.1} parent=1 // pred_check
      _
    $region7: #{tpu_custom_call.1} parent=1 // pred_check_branch
      %34 = sbr.rel (0) target = $region9
    $region8: #{tpu_custom_call.1} parent=1 // pred_region
      %s36 = ssub.s32 32, 32
      %37 = vsyncadd [#allocation3], %s36
      %s39 = sshll.u32 [#allocation2], 4
      %s40 = int_to_ptr.vmem [resolvable:$true] %s39
      %42 = dma.hbm_to_vmem [thread:$0]  %s1, 32, %s40, [#allocation3]
    $region9: #{tpu_custom_call.1} parent=1 // pred_fallthru
      _
    // Predicated region
    $region10: #{tpu_custom_call.1} parent=1 // pred_check
      _
    $region11: #{tpu_custom_call.1} parent=1 // pred_check_branch
      %44 = sbr.rel (0) target = $region13
    $region12: #{tpu_custom_call.1} parent=1 // pred_region
      %s46 = ssub.s32 32, 32
      %47 = vsyncadd [#allocation6], %s46
      %s49 = sshll.u32 [#allocation5], 4
      %s50 = int_to_ptr.vmem [resolvable:$true] %s49
      %52 = dma.hbm_to_vmem [thread:$0]  %s2, 32, %s50, [#allocation6]
    $region13: #{tpu_custom_call.1} parent=1 // pred_fallthru
      _
    // Predicated region
    $region14: #{tpu_custom_call.1} parent=1 // pred_check
      _
    $region15: #{tpu_custom_call.1} parent=1 // pred_check_branch
      %54 = sbr.rel (0) target = $region17
    $region16: #{tpu_custom_call.1} parent=1 // pred_region
      %s56 = ssub.s32 32, 32
      %57 = vsyncadd [#allocation6], %s56
      %s59 = sshll.u32 [#allocation7], 4
      %s60 = int_to_ptr.vmem [resolvable:$true] %s59
      %62 = dma.hbm_to_vmem [thread:$0]  %s3, 32, %s60, [#allocation6]
    $region17: #{tpu_custom_call.1} parent=1 // pred_fallthru
      _
    // Predicated region
    $region18: #{tpu_custom_call.1} parent=1 // pred_check
      _
    $region19: #{tpu_custom_call.1} parent=1 // pred_check_branch
      %64 = sbr.rel (0) target = $region21
    $region20: #{tpu_custom_call.1} parent=1 // pred_region
      %s66 = ssub.s32 256, 256
      %67 = vsyncadd [#allocation9], %s66
      %s68 = sshll.u32 [#allocation8], 4
      %s69 = int_to_ptr.vmem [resolvable:$true] %s68
      %74 = dma.hbm_to_vmem [thread:$0]  %s4, 256, %s69, [#allocation9], 64, 64, 4
    $region21: #{tpu_custom_call.1} parent=1 // pred_fallthru
      _
    // Predicated region
    $region22: #{tpu_custom_call.1} parent=1 // pred_check
      _
    $region23: #{tpu_custom_call.1} parent=1 // pred_check_branch
      %76 = sbr.rel (0) target = $region25
    $region24: #{tpu_custom_call.1} parent=1 // pred_region
      _
    $region25: #{tpu_custom_call.1} parent=1 // pred_fallthru
      _
    // Predicated region
    $region26: #{tpu_custom_call.1} parent=1 // pred_check
      _
    $region27: #{tpu_custom_call.1} parent=1 // pred_check_branch
      %78 = sbr.rel (0) target = $region29
    $region28: #{tpu_custom_call.1} parent=1 // pred_region
      %s80 = ssub.s32 16, 16
      %81 = vsyncadd [#allocation9], %s80
      %s83 = sshll.u32 [#allocation10], 4
      %s84 = int_to_ptr.vmem [resolvable:$true] %s83
      %86 = dma.hbm_to_vmem [thread:$0]  %s6, 16, %s84, [#allocation9]
    $region29: #{tpu_custom_call.1} parent=1 // pred_fallthru
      _
    // Predicated region
    $region30: #{tpu_custom_call.1} parent=1 // pred_check
      _
    $region31: #{tpu_custom_call.1} parent=1 // pred_check_branch
      %88 = sbr.rel (0) target = $region33
    $region32: #{tpu_custom_call.1} parent=1 // pred_region
      %s90 = ssub.s32 32, 32
      %91 = vsyncadd [#allocation12], %s90
      %s92 = sshll.u32 [#allocation11], 4
      %s93 = int_to_ptr.vmem [resolvable:$true] %s92
      %98 = dma.hbm_to_vmem [thread:$0]  %s7, 32, %s93, [#allocation12], 16, 16, 1
    $region33: #{tpu_custom_call.1} parent=1 // pred_fallthru
      _
    // Predicated region
    $region34: #{tpu_custom_call.1} parent=1 // pred_check
      _
    $region35: #{tpu_custom_call.1} parent=1 // pred_check_branch
      %100 = sbr.rel (0) target = $region37
    $region36: #{tpu_custom_call.1} parent=1 // pred_region
      %s102 = ssub.s32 32, 32
      %103 = vsyncadd [#allocation12], %s102
      %s104 = sshll.u32 [#allocation13], 4
      %s105 = int_to_ptr.vmem [resolvable:$true] %s104
      %110 = dma.hbm_to_vmem [thread:$0]  %s8, 32, %s105, [#allocation12], 16, 16, 1
    $region37: #{tpu_custom_call.1} parent=1 // pred_fallthru
      _
    // Predicated region
    $region38: #{tpu_custom_call.1} parent=1 // pred_check
      _
    $region39: #{tpu_custom_call.1} parent=1 // pred_check_branch
      %112 = sbr.rel (0) target = $region41
    $region40: #{tpu_custom_call.1} parent=1 // pred_region
      _
    $region41: #{tpu_custom_call.1} parent=1 // pred_fallthru
      _
    // Predicated region
    $region42: #{tpu_custom_call.1} parent=1 // pred_check
      _
    $region43: #{tpu_custom_call.1} parent=1 // pred_check_branch
      %114 = sbr.rel (0) target = $region45
    $region44: #{tpu_custom_call.1} parent=1 // pred_region
      _
    $region45: #{tpu_custom_call.1} parent=1 // pred_fallthru
      _
    // Predicated region
    $region46: #{tpu_custom_call.1} parent=1 // pred_check
      _
    $region47: #{tpu_custom_call.1} parent=1 // pred_check_branch
      %116 = sbr.rel (0) target = $region49
    $region48: #{tpu_custom_call.1} parent=1 // pred_region
      _
    $region49: #{tpu_custom_call.1} parent=1 // pred_fallthru
      _
    // Predicated region
    $region50: #{tpu_custom_call.1} parent=1 // pred_check
      _
    $region51: #{tpu_custom_call.1} parent=1 // pred_check_branch
      %118 = sbr.rel (0) target = $region53
    $region52: #{tpu_custom_call.1} parent=1 // pred_region
      _
    $region53: #{tpu_custom_call.1} parent=1 // pred_fallthru
      _
    // Predicated region
    $region54: #{tpu_custom_call.1} parent=1 // pred_check
      _
    $region55: #{tpu_custom_call.1} parent=1 // pred_check_branch
      %120 = sbr.rel (0) target = $region57
    $region56: #{tpu_custom_call.1} parent=1 // pred_region
      _
    $region57: #{tpu_custom_call.1} parent=1 // pred_fallthru
      _
    // Predicated region
    $region58: #{tpu_custom_call.1} parent=1 // pred_check
      _
    $region59: #{tpu_custom_call.1} parent=1 // pred_check_branch
      %122 = sbr.rel (0) target = $region61
    $region60: #{tpu_custom_call.1} parent=1 // pred_region
      _
    $region61: #{tpu_custom_call.1} parent=1 // pred_fallthru
      _
    // Predicated region
    $region62: #{tpu_custom_call.1} parent=1 // pred_check
      _
    $region63: #{tpu_custom_call.1} parent=1 // pred_check_branch
      %124 = sbr.rel (0) target = $region65
    $region64: #{tpu_custom_call.1} parent=1 // pred_region
      _
    $region65: #{tpu_custom_call.1} parent=1 // pred_fallthru
      _
    // Predicated region
    $region66: #{tpu_custom_call.1} parent=1 // pred_check
      _
    $region67: #{tpu_custom_call.1} parent=1 // pred_check_branch
      %126 = sbr.rel (0) target = $region69
    $region68: #{tpu_custom_call.1} parent=1 // pred_region
      %s128 = ssub.s32 512, 512
      %129 = vsyncadd [#allocation15], %s128
      %s130 = sshll.u32 [#allocation14], 4
      %s131 = int_to_ptr.vmem [resolvable:$true] %s130
      %136 = dma.hbm_to_vmem [thread:$0]  %s16, 512, %s131, [#allocation15], 64, 64, 4
    $region69: #{tpu_custom_call.1} parent=1 // pred_fallthru
      _
    // Predicated region
    $region70: #{tpu_custom_call.1} parent=1 // pred_check
      _
    $region71: #{tpu_custom_call.1} parent=1 // pred_check_branch
      %138 = sbr.rel (0) target = $region73
    $region72: #{tpu_custom_call.1} parent=1 // pred_region
      _
    $region73: #{tpu_custom_call.1} parent=1 // pred_fallthru
      _
    // Predicated region
    $region74: #{tpu_custom_call.1} parent=1 // pred_check
      _
    $region75: #{tpu_custom_call.1} parent=1 // pred_check_branch
      %140 = sbr.rel (0) target = $region77
    $region76: #{tpu_custom_call.1} parent=1 // pred_region
      _
    $region77: #{tpu_custom_call.1} parent=1 // pred_fallthru
      _
    // Predicated region
    $region78: #{tpu_custom_call.1} parent=1 // pred_check
      _
    $region79: #{tpu_custom_call.1} parent=1 // pred_check_branch
      %142 = sbr.rel (0) target = $region81
    $region80: #{tpu_custom_call.1} parent=1 // pred_region
      _
    $region81: #{tpu_custom_call.1} parent=1 // pred_fallthru
      _
    // Predicated region
    $region82: #{tpu_custom_call.1} parent=1 // pred_check
      _
    $region83: #{tpu_custom_call.1} parent=1 // pred_check_branch
      %144 = sbr.rel (0) target = $region85
    $region84: #{tpu_custom_call.1} parent=1 // pred_region
      %145 = dma.done [#allocation3], 32
    $region85: #{tpu_custom_call.1} parent=1 // pred_fallthru
      _
    // Predicated region
    $region86: #{tpu_custom_call.1} parent=1 // pred_check
      _
    $region87: #{tpu_custom_call.1} parent=1 // pred_check_branch
      %147 = sbr.rel (0) target = $region89
    $region88: #{tpu_custom_call.1} parent=1 // pred_region
      %148 = dma.done [#allocation6], 32
    $region89: #{tpu_custom_call.1} parent=1 // pred_fallthru
      _
    // Predicated region
    $region90: #{tpu_custom_call.1} parent=1 // pred_check
      _
    $region91: #{tpu_custom_call.1} parent=1 // pred_check_branch
      %150 = sbr.rel (0) target = $region93
    $region92: #{tpu_custom_call.1} parent=1 // pred_region
      %151 = dma.done [#allocation6], 32
    $region93: #{tpu_custom_call.1} parent=1 // pred_fallthru
      _
    // Predicated region
    $region94: #{tpu_custom_call.1} parent=1 // pred_check
      _
    $region95: #{tpu_custom_call.1} parent=1 // pred_check_branch
      %153 = sbr.rel (0) target = $region97
    $region96: #{tpu_custom_call.1} parent=1 // pred_region
      %154 = dma.done [#allocation9], 256
    $region97: #{tpu_custom_call.1} parent=1 // pred_fallthru
      _
    // Predicated region
    $region98: #{tpu_custom_call.1} parent=1 // pred_check
      _
    $region99: #{tpu_custom_call.1} parent=1 // pred_check_branch
      %156 = sbr.rel (0) target = $region101
    $region100: #{tpu_custom_call.1} parent=1 // pred_region
      %157 = dma.done [#allocation9], 16
    $region101: #{tpu_custom_call.1} parent=1 // pred_fallthru
      _
    // Predicated region
    $region102: #{tpu_custom_call.1} parent=1 // pred_check
      _
    $region103: #{tpu_custom_call.1} parent=1 // pred_check_branch
      %159 = sbr.rel (0) target = $region105
    $region104: #{tpu_custom_call.1} parent=1 // pred_region
      %160 = dma.done [#allocation12], 32
    $region105: #{tpu_custom_call.1} parent=1 // pred_fallthru
      _
    // Predicated region
    $region106: #{tpu_custom_call.1} parent=1 // pred_check
      _
    $region107: #{tpu_custom_call.1} parent=1 // pred_check_branch
      %162 = sbr.rel (0) target = $region109
    $region108: #{tpu_custom_call.1} parent=1 // pred_region
      %163 = dma.done [#allocation12], 32
    $region109: #{tpu_custom_call.1} parent=1 // pred_fallthru
      _
    // Predicated region
    $region110: #{tpu_custom_call.1} parent=1 // pred_check
      _
    $region111: #{tpu_custom_call.1} parent=1 // pred_check_branch
      %165 = sbr.rel (0) target = $region113
    $region112: #{tpu_custom_call.1} parent=1 // pred_region
      %166 = dma.done [#allocation15], 512
    $region113: #{tpu_custom_call.1} parent=1 // pred_fallthru
      _
    %v168 = vld [vmem:[#allocation7] sm:$0x3]
    %v169 = vld [vmem:[#allocation8] sm:$0xf]
    %v170 = vld [vmem:[#allocation8 + $0x4] sm:$0xf]
    %v171 = vld [vmem:[#allocation8 + $0x8] sm:$0xf]
    %v172 = vld [vmem:[#allocation8 + $0xc] sm:$0xf]
    %v173 = vld [vmem:[%s5] sm:$0x1]
    %v174 = vld [vmem:[%s0] sm:$0xff]
    %v175 = vld [vmem:[%s0 + $0x8] sm:$0xff]
    %v176 = vpack.c.bf16 %v175, %v174
    %vm177 = vcmask 31744
    %v179 = vsel %vm177, %v176, 0
    %vm181 = vcmask 1041408
    %v183 = vsel %vm181, %v168, 0
    %185 = vmatprep.subr.bf16.mxu0 0
    %186 = vmatpush1.bf16.msra.mxu0 %v183
    %187 = vmatprep.subr.bf16.mxu0 0
    %188 = vmatpush1.bf16.msra.mxu0 0
    %189 = vmatprep.subr.bf16.mxu0 0
    %190 = vmatpush1.bf16.msra.mxu0 0
    %191 = vmatprep.subr.bf16.mxu0 0
    %192 = vmatpush1.bf16.msra.mxu0 0
    %193 = vmatprep.subr.bf16.mxu0 0
    %194 = vmatpush1.bf16.msra.mxu0 0
    %195 = vmatprep.subr.bf16.mxu0 0
    %196 = vmatpush1.bf16.msra.mxu0 0
    %197 = vmatprep.subr.bf16.mxu0 0
    %198 = vmatpush1.bf16.msra.mxu0 0
    %199 = vmatprep.subr.bf16.mxu0 0
    %200 = vmatpush1.bf16.msra.mxu0 0
    %201 = vmatprep.subr.bf16.mxu0 0
    %202 = vmatpush1.bf16.msra.mxu0 0
    %203 = vmatprep.subr.bf16.mxu0 0
    %204 = vmatpush1.bf16.msra.mxu0 0
    %205 = vmatprep.subr.bf16.mxu0 0
    %206 = vmatpush1.bf16.msra.mxu0 0
    %207 = vmatprep.subr.bf16.mxu0 0
    %208 = vmatpush1.bf16.msra.mxu0 0
    %209 = vmatprep.subr.bf16.mxu0 0
    %210 = vmatpush1.bf16.msra.mxu0 0
    %211 = vmatprep.subr.bf16.mxu0 0
    %212 = vmatpush1.bf16.msra.mxu0 0
    %213 = vmatprep.subr.bf16.mxu0 0
    %214 = vmatpush1.bf16.msra.mxu0 0
    %215 = vmatprep.subr.bf16.mxu0 0
    %216 = vmatpush1.bf16.msra.mxu0 0
    %217 = vmatprep.mubr.bf16.mxu0 0
    %218 = vmatmul.mubr.bf16.gmra.mrb[0].mxu0 %v179
    %v219 = vpop.f32.mrb[0].mxu0
    %v220 = vadd.f32 0.0, %v219
    %v221 = vpop.f32.mrb[0].mxu0
    %v222 = vpop.f32.mrb[0].mxu0
    %v223 = vadd.f32 0.0, %v222
    %v224 = vpop.f32.mrb[0].mxu0
    %225 = vdwg.mxu0
    %v226 = vld [vmem:[#allocation2] sm:$0x3]
    %v227 = vld [vmem:[#allocation5] sm:$0x3]
    %v228 = vld [vmem:[#allocation10] sm:$0x1]
    %v230 = vlaneseq
    %v231 = vshrl.u32 %v230, 7
    %v232 = vsub.s32 0, %v231
    %v233 = vrot.slane %v228, %v232
    %v235 = vpack.c.bf16 %v226, %v226
    %v240 = vunpack.c.l.b16 %v169
    %v241 = vunpack.c.l.b16 %v170
    %v242 = vunpack.c.l.b16 %v171
    %v243 = vunpack.c.l.b16 %v172
    %v244 = vpack.c.b16 %v241, %v240
    %v245 = vpack.c.b16 %v243, %v242
    %vm248 = vcmask 261120
    %v250 = vsel %vm248, %v235, 0
    %252 = vmatprep.subr.bf16.mxu0 0
    %253 = vmatpush1.bf16.msra.mxu0 %v244
    %254 = vmatprep.subr.bf16.mxu0 0
    %255 = vmatpush1.bf16.msra.mxu0 %v245
    %256 = vmatprep.subr.bf16.mxu0 0
    %257 = vmatpush1.bf16.msra.mxu0 0
    %258 = vmatprep.subr.bf16.mxu0 0
    %259 = vmatpush1.bf16.msra.mxu0 0
    %260 = vmatprep.subr.bf16.mxu0 0
    %261 = vmatpush1.bf16.msra.mxu0 0
    %262 = vmatprep.subr.bf16.mxu0 0
    %263 = vmatpush1.bf16.msra.mxu0 0
    %264 = vmatprep.subr.bf16.mxu0 0
    %265 = vmatpush1.bf16.msra.mxu0 0
    %266 = vmatprep.subr.bf16.mxu0 0
    %267 = vmatpush1.bf16.msra.mxu0 0
    %268 = vmatprep.subr.bf16.mxu0 0
    %269 = vmatpush1.bf16.msra.mxu0 0
    %270 = vmatprep.subr.bf16.mxu0 0
    %271 = vmatpush1.bf16.msra.mxu0 0
    %272 = vmatprep.subr.bf16.mxu0 0
    %273 = vmatpush1.bf16.msra.mxu0 0
    %274 = vmatprep.subr.bf16.mxu0 0
    %275 = vmatpush1.bf16.msra.mxu0 0
    %276 = vmatprep.subr.bf16.mxu0 0
    %277 = vmatpush1.bf16.msra.mxu0 0
    %278 = vmatprep.subr.bf16.mxu0 0
    %279 = vmatpush1.bf16.msra.mxu0 0
    %280 = vmatprep.subr.bf16.mxu0 0
    %281 = vmatpush1.bf16.msra.mxu0 0
    %282 = vmatprep.subr.bf16.mxu0 0
    %283 = vmatpush1.bf16.msra.mxu0 0
    %284 = vmatprep.mubr.bf16.mxu0 0
    %285 = vmatmul.mubr.bf16.gmra.mrb[0].mxu0 %v250
    %v286 = vpop.f32.mrb[0].mxu0
    %v287 = vadd.f32 0.0, %v286
    %v288 = vpop.f32.mrb[0].mxu0
    %v289 = vpop.f32.mrb[0].mxu0
    %v290 = vpop.f32.mrb[0].mxu0
    %291 = vdwg.mxu0
    %v292 = vadd.f32 %v220, %v287
    %v294 = vlaneseq
    %v295 = vshrl.u32 %v294, 7
    %v296 = vsub.s32 0, %v295
    %v297 = vrot.slane %v173, %v296
    %v299 = vadd.f32 %v292, %v297
    %v300 = vxor.u32 %v299, 2147483648
    %v301 = vmul.f32 %v300, 1.442695
    %v302 = vpow.pop %v301
    %v303 = vadd.f32 %v302, 1.0
    %v304 = vrcp.pop %v303
    %v305 = vmul.f32 1.0, %v304
    %v306 = vtanh.pop %v299
    %308 = vrot.lane.b32.xlu0 %v227, 32
    %v309 = vpop.permute.xlu0 %308
    %v311 = vmul.f32 %v305, %v309
    %313 = vrot.lane.b32.xlu0 %v306, 32
    %v314 = vpop.permute.xlu0 %313
    %v316 = vmul.f32 %v305, %v314
    %318 = vrot.lane.b32.xlu0 %v316, 32
    %v319 = vpop.permute.xlu0 %318
    %v321 = vadd.f32 %v311, %v319
    %v322 = vtanh.pop %v321
    %324 = vrot.lane.b32.xlu0 %v322, 32
    %v325 = vpop.permute.xlu0 %324
    %v327 = vmul.f32 %v305, %v325
    %v328 = vpack.c.bf16 %v327, %v327
    %330 = vrot.lane.b32.xlu0 %v328, 64
    %v331 = vpop.permute.xlu0 %330
    %v333 = vsel %vm248, %v331, 0
    %335 = vmatprep.subr.bf16.mxu0 0
    %336 = vmatpush1.bf16.msra.mxu0 %v244
    %337 = vmatprep.subr.bf16.mxu0 0
    %338 = vmatpush1.bf16.msra.mxu0 %v245
    %339 = vmatprep.subr.bf16.mxu0 0
    %340 = vmatpush1.bf16.msra.mxu0 0
    %341 = vmatprep.subr.bf16.mxu0 0
    %342 = vmatpush1.bf16.msra.mxu0 0
    %343 = vmatprep.subr.bf16.mxu0 0
    %344 = vmatpush1.bf16.msra.mxu0 0
    %345 = vmatprep.subr.bf16.mxu0 0
    %346 = vmatpush1.bf16.msra.mxu0 0
    %347 = vmatprep.subr.bf16.mxu0 0
    %348 = vmatpush1.bf16.msra.mxu0 0
    %349 = vmatprep.subr.bf16.mxu0 0
    %350 = vmatpush1.bf16.msra.mxu0 0
    %351 = vmatprep.subr.bf16.mxu0 0
    %352 = vmatpush1.bf16.msra.mxu0 0
    %353 = vmatprep.subr.bf16.mxu0 0
    %354 = vmatpush1.bf16.msra.mxu0 0
    %355 = vmatprep.subr.bf16.mxu0 0
    %356 = vmatpush1.bf16.msra.mxu0 0
    %357 = vmatprep.subr.bf16.mxu0 0
    %358 = vmatpush1.bf16.msra.mxu0 0
    %359 = vmatprep.subr.bf16.mxu0 0
    %360 = vmatpush1.bf16.msra.mxu0 0
    %361 = vmatprep.subr.bf16.mxu0 0
    %362 = vmatpush1.bf16.msra.mxu0 0
    %363 = vmatprep.subr.bf16.mxu0 0
    %364 = vmatpush1.bf16.msra.mxu0 0
    %365 = vmatprep.subr.bf16.mxu0 0
    %366 = vmatpush1.bf16.msra.mxu0 0
    %367 = vmatprep.mubr.bf16.mxu0 0
    %368 = vmatmul.mubr.bf16.gmra.mrb[0].mxu0 %v333
    %v369 = vpop.f32.mrb[0].mxu0
    %v370 = vadd.f32 0.0, %v369
    %v371 = vpop.f32.mrb[0].mxu0
    %v372 = vpop.f32.mrb[0].mxu0
    %v373 = vpop.f32.mrb[0].mxu0
    %374 = vdwg.mxu0
    %v376 = vrot.slane %v370, 6
    %v378 = vadd.f32 %v220, %v376
    %v379 = vadd.f32 %v378, %v297
    %v380 = vxor.u32 %v379, 2147483648
    %v381 = vmul.f32 %v380, 1.442695
    %v382 = vpow.pop %v381
    %v383 = vadd.f32 %v382, 1.0
    %v384 = vrcp.pop %v383
    %v385 = vmul.f32 1.0, %v384
    %v386 = vtanh.pop %v379
    %v388 = vrot.slane %v321, 6
    %v390 = vmul.f32 %v385, %v388
    %392 = vrot.lane.b32.xlu0 %v386, 32
    %v393 = vpop.permute.xlu0 %392
    %v395 = vmul.f32 %v385, %v393
    %397 = vrot.lane.b32.xlu0 %v395, 32
    %v398 = vpop.permute.xlu0 %397
    %v400 = vadd.f32 %v390, %v398
    %v401 = vtanh.pop %v400
    %403 = vrot.lane.b32.xlu0 %v401, 32
    %v404 = vpop.permute.xlu0 %403
    %v406 = vmul.f32 %v385, %v404
    %v407 = vpack.c.bf16 %v406, %v406
    %v409 = vrot.slane %v407, 1
    %410 = vrot.lane.b32.xlu0 %v409, 64
    %v411 = vpop.permute.xlu0 %410
    %v413 = vsel %vm248, %v411, 0
    %415 = vmatprep.subr.bf16.mxu0 0
    %416 = vmatpush1.bf16.msra.mxu0 %v244
    %417 = vmatprep.subr.bf16.mxu0 0
    %418 = vmatpush1.bf16.msra.mxu0 %v245
    %419 = vmatprep.subr.bf16.mxu0 0
    %420 = vmatpush1.bf16.msra.mxu0 0
    %421 = vmatprep.subr.bf16.mxu0 0
    %422 = vmatpush1.bf16.msra.mxu0 0
    %423 = vmatprep.subr.bf16.mxu0 0
    %424 = vmatpush1.bf16.msra.mxu0 0
    %425 = vmatprep.subr.bf16.mxu0 0
    %426 = vmatpush1.bf16.msra.mxu0 0
    %427 = vmatprep.subr.bf16.mxu0 0
    %428 = vmatpush1.bf16.msra.mxu0 0
    %429 = vmatprep.subr.bf16.mxu0 0
    %430 = vmatpush1.bf16.msra.mxu0 0
    %431 = vmatprep.subr.bf16.mxu0 0
    %432 = vmatpush1.bf16.msra.mxu0 0
    %433 = vmatprep.subr.bf16.mxu0 0
    %434 = vmatpush1.bf16.msra.mxu0 0
    %435 = vmatprep.subr.bf16.mxu0 0
    %436 = vmatpush1.bf16.msra.mxu0 0
    %437 = vmatprep.subr.bf16.mxu0 0
    %438 = vmatpush1.bf16.msra.mxu0 0
    %439 = vmatprep.subr.bf16.mxu0 0
    %440 = vmatpush1.bf16.msra.mxu0 0
    %441 = vmatprep.subr.bf16.mxu0 0
    %442 = vmatpush1.bf16.msra.mxu0 0
    %443 = vmatprep.subr.bf16.mxu0 0
    %444 = vmatpush1.bf16.msra.mxu0 0
    %445 = vmatprep.subr.bf16.mxu0 0
    %446 = vmatpush1.bf16.msra.mxu0 0
    %447 = vmatprep.mubr.bf16.mxu0 0
    %448 = vmatmul.mubr.bf16.gmra.mrb[0].mxu0 %v413
    %v449 = vpop.f32.mrb[0].mxu0
    %v450 = vadd.f32 0.0, %v449
    %v451 = vpop.f32.mrb[0].mxu0
    %v452 = vpop.f32.mrb[0].mxu0
    %v453 = vpop.f32.mrb[0].mxu0
    %454 = vdwg.mxu0
    %v456 = vrot.slane %v450, 4
    %v458 = vadd.f32 %v220, %v456
    %v459 = vadd.f32 %v458, %v297
    %v460 = vxor.u32 %v459, 2147483648
    %v461 = vmul.f32 %v460, 1.442695
    %v462 = vpow.pop %v461
    %v463 = vadd.f32 %v462, 1.0
    %v464 = vrcp.pop %v463
    %v465 = vmul.f32 1.0, %v464
    %v466 = vtanh.pop %v459
    %v468 = vrot.slane %v400, 6
    %v470 = vmul.f32 %v465, %v468
    %472 = vrot.lane.b32.xlu0 %v466, 32
    %v473 = vpop.permute.xlu0 %472
    %v475 = vmul.f32 %v465, %v473
    %477 = vrot.lane.b32.xlu0 %v475, 32
    %v478 = vpop.permute.xlu0 %477
    %v480 = vadd.f32 %v470, %v478
    %v481 = vtanh.pop %v480
    %483 = vrot.lane.b32.xlu0 %v481, 32
    %v484 = vpop.permute.xlu0 %483
    %v486 = vmul.f32 %v465, %v484
    %v487 = vpack.c.bf16 %v486, %v486
    %v489 = vrot.slane %v487, 2
    %490 = vrot.lane.b32.xlu0 %v489, 64
    %v491 = vpop.permute.xlu0 %490
    %v493 = vsel %vm248, %v491, 0
    %495 = vmatprep.subr.bf16.mxu0 0
    %496 = vmatpush1.bf16.msra.mxu0 %v244
    %497 = vmatprep.subr.bf16.mxu0 0
    %498 = vmatpush1.bf16.msra.mxu0 %v245
    %499 = vmatprep.subr.bf16.mxu0 0
    %500 = vmatpush1.bf16.msra.mxu0 0
    %501 = vmatprep.subr.bf16.mxu0 0
    %502 = vmatpush1.bf16.msra.mxu0 0
    %503 = vmatprep.subr.bf16.mxu0 0
    %504 = vmatpush1.bf16.msra.mxu0 0
    %505 = vmatprep.subr.bf16.mxu0 0
    %506 = vmatpush1.bf16.msra.mxu0 0
    %507 = vmatprep.subr.bf16.mxu0 0
    %508 = vmatpush1.bf16.msra.mxu0 0
    %509 = vmatprep.subr.bf16.mxu0 0
    %510 = vmatpush1.bf16.msra.mxu0 0
    %511 = vmatprep.subr.bf16.mxu0 0
    %512 = vmatpush1.bf16.msra.mxu0 0
    %513 = vmatprep.subr.bf16.mxu0 0
    %514 = vmatpush1.bf16.msra.mxu0 0
    %515 = vmatprep.subr.bf16.mxu0 0
    %516 = vmatpush1.bf16.msra.mxu0 0
    %517 = vmatprep.subr.bf16.mxu0 0
    %518 = vmatpush1.bf16.msra.mxu0 0
    %519 = vmatprep.subr.bf16.mxu0 0
    %520 = vmatpush1.bf16.msra.mxu0 0
    %521 = vmatprep.subr.bf16.mxu0 0
    %522 = vmatpush1.bf16.msra.mxu0 0
    %523 = vmatprep.subr.bf16.mxu0 0
    %524 = vmatpush1.bf16.msra.mxu0 0
    %525 = vmatprep.subr.bf16.mxu0 0
    %526 = vmatpush1.bf16.msra.mxu0 0
    %527 = vmatprep.mubr.bf16.mxu0 0
    %528 = vmatmul.mubr.bf16.gmra.mrb[0].mxu0 %v493
    %v529 = vpop.f32.mrb[0].mxu0
    %v530 = vadd.f32 0.0, %v529
    %v531 = vpop.f32.mrb[0].mxu0
    %v532 = vpop.f32.mrb[0].mxu0
    %v533 = vpop.f32.mrb[0].mxu0
    %534 = vdwg.mxu0
    %v536 = vrot.slane %v530, 2
    %v538 = vadd.f32 %v220, %v536
    %v539 = vadd.f32 %v538, %v297
    %v540 = vxor.u32 %v539, 2147483648
    %v541 = vmul.f32 %v540, 1.442695
    %v542 = vpow.pop %v541
    %v543 = vadd.f32 %v542, 1.0
    %v544 = vrcp.pop %v543
    %v545 = vmul.f32 1.0, %v544
    %v546 = vtanh.pop %v539
    %v548 = vrot.slane %v480, 6
    %v550 = vmul.f32 %v545, %v548
    %552 = vrot.lane.b32.xlu0 %v546, 32
    %v553 = vpop.permute.xlu0 %552
    %v555 = vmul.f32 %v545, %v553
    %557 = vrot.lane.b32.xlu0 %v555, 32
    %v558 = vpop.permute.xlu0 %557
    %v560 = vadd.f32 %v550, %v558
    %v561 = vtanh.pop %v560
    %563 = vrot.lane.b32.xlu0 %v561, 32
    %v564 = vpop.permute.xlu0 %563
    %v566 = vmul.f32 %v545, %v564
    %v567 = vpack.c.bf16 %v566, %v566
    %v569 = vrot.slane %v567, 3
    %570 = vrot.lane.b32.xlu0 %v569, 64
    %v571 = vpop.permute.xlu0 %570
    %v573 = vsel %vm248, %v571, 0
    %575 = vmatprep.subr.bf16.mxu0 0
    %576 = vmatpush1.bf16.msra.mxu0 %v244
    %577 = vmatprep.subr.bf16.mxu0 0
    %578 = vmatpush1.bf16.msra.mxu0 %v245
    %579 = vmatprep.subr.bf16.mxu0 0
    %580 = vmatpush1.bf16.msra.mxu0 0
    %581 = vmatprep.subr.bf16.mxu0 0
    %582 = vmatpush1.bf16.msra.mxu0 0
    %583 = vmatprep.subr.bf16.mxu0 0
    %584 = vmatpush1.bf16.msra.mxu0 0
    %585 = vmatprep.subr.bf16.mxu0 0
    %586 = vmatpush1.bf16.msra.mxu0 0
    %587 = vmatprep.subr.bf16.mxu0 0
    %588 = vmatpush1.bf16.msra.mxu0 0
    %589 = vmatprep.subr.bf16.mxu0 0
    %590 = vmatpush1.bf16.msra.mxu0 0
    %591 = vmatprep.subr.bf16.mxu0 0
    %592 = vmatpush1.bf16.msra.mxu0 0
    %593 = vmatprep.subr.bf16.mxu0 0
    %594 = vmatpush1.bf16.msra.mxu0 0
    %595 = vmatprep.subr.bf16.mxu0 0
    %596 = vmatpush1.bf16.msra.mxu0 0
    %597 = vmatprep.subr.bf16.mxu0 0
    %598 = vmatpush1.bf16.msra.mxu0 0
    %599 = vmatprep.subr.bf16.mxu0 0
    %600 = vmatpush1.bf16.msra.mxu0 0
    %601 = vmatprep.subr.bf16.mxu0 0
    %602 = vmatpush1.bf16.msra.mxu0 0
    %603 = vmatprep.subr.bf16.mxu0 0
    %604 = vmatpush1.bf16.msra.mxu0 0
    %605 = vmatprep.subr.bf16.mxu0 0
    %606 = vmatpush1.bf16.msra.mxu0 0
    %607 = vmatprep.mubr.bf16.mxu0 0
    %608 = vmatmul.mubr.bf16.gmra.mrb[0].mxu0 %v573
    %v609 = vpop.f32.mrb[0].mxu0
    %v610 = vadd.f32 0.0, %v609
    %v611 = vpop.f32.mrb[0].mxu0
    %v612 = vpop.f32.mrb[0].mxu0
    %v613 = vpop.f32.mrb[0].mxu0
    %614 = vdwg.mxu0
    %v615 = vadd.f32 %v223, %v610
    %v616 = vadd.f32 %v615, %v297
    %v617 = vxor.u32 %v616, 2147483648
    %v618 = vmul.f32 %v617, 1.442695
    %v619 = vpow.pop %v618
    %v620 = vadd.f32 %v619, 1.0
    %v621 = vrcp.pop %v620
    %v622 = vmul.f32 1.0, %v621
    %v623 = vtanh.pop %v616
    %v625 = vrot.slane %v560, 6
    %v627 = vmul.f32 %v622, %v625
    %629 = vrot.lane.b32.xlu0 %v623, 32
    %v630 = vpop.permute.xlu0 %629
    %v632 = vmul.f32 %v622, %v630
    %634 = vrot.lane.b32.xlu0 %v632, 32
    %v635 = vpop.permute.xlu0 %634
    %v637 = vadd.f32 %v627, %v635
    %v638 = vtanh.pop %v637
    %640 = vrot.lane.b32.xlu0 %v638, 32
    %v641 = vpop.permute.xlu0 %640
    %v643 = vmul.f32 %v622, %v641
    %v644 = vpack.c.bf16 %v643, %v643
    %646 = vrot.lane.b32.xlu0 %v644, 64
    %v647 = vpop.permute.xlu0 %646
    %v649 = vsel %vm248, %v647, 0
    %651 = vmatprep.subr.bf16.mxu0 0
    %652 = vmatpush1.bf16.msra.mxu0 %v244
    %653 = vmatprep.subr.bf16.mxu0 0
    %654 = vmatpush1.bf16.msra.mxu0 %v245
    %655 = vmatprep.subr.bf16.mxu0 0
    %656 = vmatpush1.bf16.msra.mxu0 0
    %657 = vmatprep.subr.bf16.mxu0 0
    %658 = vmatpush1.bf16.msra.mxu0 0
    %659 = vmatprep.subr.bf16.mxu0 0
    %660 = vmatpush1.bf16.msra.mxu0 0
    %661 = vmatprep.subr.bf16.mxu0 0
    %662 = vmatpush1.bf16.msra.mxu0 0
    %663 = vmatprep.subr.bf16.mxu0 0
    %664 = vmatpush1.bf16.msra.mxu0 0
    %665 = vmatprep.subr.bf16.mxu0 0
    %666 = vmatpush1.bf16.msra.mxu0 0
    %667 = vmatprep.subr.bf16.mxu0 0
    %668 = vmatpush1.bf16.msra.mxu0 0
    %669 = vmatprep.subr.bf16.mxu0 0
    %670 = vmatpush1.bf16.msra.mxu0 0
    %671 = vmatprep.subr.bf16.mxu0 0
    %672 = vmatpush1.bf16.msra.mxu0 0
    %673 = vmatprep.subr.bf16.mxu0 0
    %674 = vmatpush1.bf16.msra.mxu0 0
    %675 = vmatprep.subr.bf16.mxu0 0
    %676 = vmatpush1.bf16.msra.mxu0 0
    %677 = vmatprep.subr.bf16.mxu0 0
    %678 = vmatpush1.bf16.msra.mxu0 0
    %679 = vmatprep.subr.bf16.mxu0 0
    %680 = vmatpush1.bf16.msra.mxu0 0
    %681 = vmatprep.subr.bf16.mxu0 0
    %682 = vmatpush1.bf16.msra.mxu0 0
    %683 = vmatprep.mubr.bf16.mxu0 0
    %684 = vmatmul.mubr.bf16.gmra.mrb[0].mxu0 %v649
    %v685 = vpop.f32.mrb[0].mxu0
    %v686 = vadd.f32 0.0, %v685
    %v687 = vpop.f32.mrb[0].mxu0
    %v688 = vpop.f32.mrb[0].mxu0
    %v689 = vpop.f32.mrb[0].mxu0
    %690 = vdwg.mxu0
    %v692 = vrot.slane %v686, 6
    %v694 = vadd.f32 %v223, %v692
    %v695 = vadd.f32 %v694, %v297
    %v696 = vxor.u32 %v695, 2147483648
    %v697 = vmul.f32 %v696, 1.442695
    %v698 = vpow.pop %v697
    %v699 = vadd.f32 %v698, 1.0
    %v700 = vrcp.pop %v699
    %v701 = vmul.f32 1.0, %v700
    %v702 = vtanh.pop %v695
    %v704 = vrot.slane %v637, 6
    %v706 = vmul.f32 %v701, %v704
    %708 = vrot.lane.b32.xlu0 %v702, 32
    %v709 = vpop.permute.xlu0 %708
    %v711 = vmul.f32 %v701, %v709
    %713 = vrot.lane.b32.xlu0 %v711, 32
    %v714 = vpop.permute.xlu0 %713
    %v716 = vadd.f32 %v706, %v714
    %v717 = vtanh.pop %v716
    %719 = vrot.lane.b32.xlu0 %v717, 32
    %v720 = vpop.permute.xlu0 %719
    %v722 = vmul.f32 %v701, %v720
    %v723 = vpack.c.bf16 %v722, %v722
    %v725 = vrot.slane %v723, 1
    %726 = vrot.lane.b32.xlu0 %v725, 64
    %v727 = vpop.permute.xlu0 %726
    %v729 = vsel %vm248, %v727, 0
    %731 = vmatprep.subr.bf16.mxu0 0
    %732 = vmatpush1.bf16.msra.mxu0 %v244
    %733 = vmatprep.subr.bf16.mxu0 0
    %734 = vmatpush1.bf16.msra.mxu0 %v245
    %735 = vmatprep.subr.bf16.mxu0 0
    %736 = vmatpush1.bf16.msra.mxu0 0
    %737 = vmatprep.subr.bf16.mxu0 0
    %738 = vmatpush1.bf16.msra.mxu0 0
    %739 = vmatprep.subr.bf16.mxu0 0
    %740 = vmatpush1.bf16.msra.mxu0 0
    %741 = vmatprep.subr.bf16.mxu0 0
    %742 = vmatpush1.bf16.msra.mxu0 0
    %743 = vmatprep.subr.bf16.mxu0 0
    %744 = vmatpush1.bf16.msra.mxu0 0
    %745 = vmatprep.subr.bf16.mxu0 0
    %746 = vmatpush1.bf16.msra.mxu0 0
    %747 = vmatprep.subr.bf16.mxu0 0
    %748 = vmatpush1.bf16.msra.mxu0 0
    %749 = vmatprep.subr.bf16.mxu0 0
    %750 = vmatpush1.bf16.msra.mxu0 0
    %751 = vmatprep.subr.bf16.mxu0 0
    %752 = vmatpush1.bf16.msra.mxu0 0
    %753 = vmatprep.subr.bf16.mxu0 0
    %754 = vmatpush1.bf16.msra.mxu0 0
    %755 = vmatprep.subr.bf16.mxu0 0
    %756 = vmatpush1.bf16.msra.mxu0 0
    %757 = vmatprep.subr.bf16.mxu0 0
    %758 = vmatpush1.bf16.msra.mxu0 0
    %759 = vmatprep.subr.bf16.mxu0 0
    %760 = vmatpush1.bf16.msra.mxu0 0
    %761 = vmatprep.subr.bf16.mxu0 0
    %762 = vmatpush1.bf16.msra.mxu0 0
    %763 = vmatprep.mubr.bf16.mxu0 0
    %764 = vmatmul.mubr.bf16.gmra.mrb[0].mxu0 %v729
    %v765 = vpop.f32.mrb[0].mxu0
    %v766 = vadd.f32 0.0, %v765
    %v767 = vpop.f32.mrb[0].mxu0
    %v768 = vpop.f32.mrb[0].mxu0
    %v769 = vpop.f32.mrb[0].mxu0
    %770 = vdwg.mxu0
    %v772 = vrot.slane %v766, 4
    %v774 = vadd.f32 %v223, %v772
    %v775 = vadd.f32 %v774, %v297
    %v776 = vxor.u32 %v775, 2147483648
    %v777 = vmul.f32 %v776, 1.442695
    %v778 = vpow.pop %v777
    %v779 = vadd.f32 %v778, 1.0
    %v780 = vrcp.pop %v779
    %v781 = vmul.f32 1.0, %v780
    %v782 = vtanh.pop %v775
    %v784 = vrot.slane %v716, 6
    %v786 = vmul.f32 %v781, %v784
    %788 = vrot.lane.b32.xlu0 %v782, 32
    %v789 = vpop.permute.xlu0 %788
    %v791 = vmul.f32 %v781, %v789
    %793 = vrot.lane.b32.xlu0 %v791, 32
    %v794 = vpop.permute.xlu0 %793
    %v796 = vadd.f32 %v786, %v794
    %v797 = vtanh.pop %v796
    %799 = vrot.lane.b32.xlu0 %v797, 32
    %v800 = vpop.permute.xlu0 %799
    %v802 = vmul.f32 %v781, %v800
    %v803 = vpack.c.bf16 %v802, %v802
    %v805 = vrot.slane %v803, 2
    %806 = vrot.lane.b32.xlu0 %v805, 64
    %v807 = vpop.permute.xlu0 %806
    %v809 = vsel %vm248, %v807, 0
    %811 = vmatprep.subr.bf16.mxu0 0
    %812 = vmatpush1.bf16.msra.mxu0 %v244
    %813 = vmatprep.subr.bf16.mxu0 0
    %814 = vmatpush1.bf16.msra.mxu0 %v245
    %815 = vmatprep.subr.bf16.mxu0 0
    %816 = vmatpush1.bf16.msra.mxu0 0
    %817 = vmatprep.subr.bf16.mxu0 0
    %818 = vmatpush1.bf16.msra.mxu0 0
    %819 = vmatprep.subr.bf16.mxu0 0
    %820 = vmatpush1.bf16.msra.mxu0 0
    %821 = vmatprep.subr.bf16.mxu0 0
    %822 = vmatpush1.bf16.msra.mxu0 0
    %823 = vmatprep.subr.bf16.mxu0 0
    %824 = vmatpush1.bf16.msra.mxu0 0
    %825 = vmatprep.subr.bf16.mxu0 0
    %826 = vmatpush1.bf16.msra.mxu0 0
    %827 = vmatprep.subr.bf16.mxu0 0
    %828 = vmatpush1.bf16.msra.mxu0 0
    %829 = vmatprep.subr.bf16.mxu0 0
    %830 = vmatpush1.bf16.msra.mxu0 0
    %831 = vmatprep.subr.bf16.mxu0 0
    %832 = vmatpush1.bf16.msra.mxu0 0
    %833 = vmatprep.subr.bf16.mxu0 0
    %834 = vmatpush1.bf16.msra.mxu0 0
    %835 = vmatprep.subr.bf16.mxu0 0
    %836 = vmatpush1.bf16.msra.mxu0 0
    %837 = vmatprep.subr.bf16.mxu0 0
    %838 = vmatpush1.bf16.msra.mxu0 0
    %839 = vmatprep.subr.bf16.mxu0 0
    %840 = vmatpush1.bf16.msra.mxu0 0
    %841 = vmatprep.subr.bf16.mxu0 0
    %842 = vmatpush1.bf16.msra.mxu0 0
    %843 = vmatprep.mubr.bf16.mxu0 0
    %844 = vmatmul.mubr.bf16.gmra.mrb[0].mxu0 %v809
    %v845 = vpop.f32.mrb[0].mxu0
    %v846 = vadd.f32 0.0, %v845
    %v847 = vpop.f32.mrb[0].mxu0
    %v848 = vpop.f32.mrb[0].mxu0
    %v849 = vpop.f32.mrb[0].mxu0
    %850 = vdwg.mxu0
    %v852 = vrot.slane %v846, 2
    %v854 = vadd.f32 %v223, %v852
    %v855 = vadd.f32 %v854, %v297
    %v856 = vxor.u32 %v855, 2147483648
    %v857 = vmul.f32 %v856, 1.442695
    %v858 = vpow.pop %v857
    %v859 = vadd.f32 %v858, 1.0
    %v860 = vrcp.pop %v859
    %v861 = vmul.f32 1.0, %v860
    %v862 = vtanh.pop %v855
    %v864 = vrot.slane %v796, 6
    %v866 = vmul.f32 %v861, %v864
    %868 = vrot.lane.b32.xlu0 %v862, 32
    %v869 = vpop.permute.xlu0 %868
    %v871 = vmul.f32 %v861, %v869
    %873 = vrot.lane.b32.xlu0 %v871, 32
    %v874 = vpop.permute.xlu0 %873
    %v876 = vadd.f32 %v866, %v874
    %v877 = vtanh.pop %v876
    %879 = vrot.lane.b32.xlu0 %v877, 32
    %v880 = vpop.permute.xlu0 %879
    %v882 = vmul.f32 %v861, %v880
    %v884 = vrot.slane %v327, 6
    %885 = vrot.lane.b32.xlu0 %v884, 64
    %v886 = vpop.permute.xlu0 %885
    %v889 = vrot.slane %v406, 6
    %890 = vrot.lane.b32.xlu0 %v889, 64
    %v891 = vpop.permute.xlu0 %890
    %v894 = vrot.slane %v486, 6
    %895 = vrot.lane.b32.xlu0 %v894, 64
    %v896 = vpop.permute.xlu0 %895
    %v899 = vrot.slane %v566, 6
    %900 = vrot.lane.b32.xlu0 %v899, 64
    %v901 = vpop.permute.xlu0 %900
    %v904 = vrot.slane %v643, 6
    %905 = vrot.lane.b32.xlu0 %v904, 64
    %v906 = vpop.permute.xlu0 %905
    %v909 = vrot.slane %v722, 6
    %910 = vrot.lane.b32.xlu0 %v909, 64
    %v911 = vpop.permute.xlu0 %910
    %v914 = vrot.slane %v802, 6
    %915 = vrot.lane.b32.xlu0 %v914, 64
    %v916 = vpop.permute.xlu0 %915
    %v919 = vrot.slane %v882, 6
    %920 = vrot.lane.b32.xlu0 %v919, 64
    %v921 = vpop.permute.xlu0 %920
    %v923 = vsel %vm181, %v233, %v886
    %vm924 = vcmask 1043456
    %v925 = vsel %vm924, %v923, %v891
    %vm926 = vcmask 1045504
    %v927 = vsel %vm926, %v925, %v896
    %v928 = vsel %vm181, %v901, %v906
    %v929 = vsel %vm924, %v928, %v911
    %v930 = vsel %vm926, %v929, %v916
    %v931 = vlaneseq
    %v932 = vshrl.u32 %v931, 7
    %v933 = vadd.s32 %v932, 8
    %v934 = vadd.s32 %v932, 16
    %v935 = vlaneseq
    %v936 = vand.u32 %v935, 127
    %vm937 = vcmp.lt.s32.totalorder %v932, 0
    %v938 = vsub.s32 0, %v932
    %v939 = vsel %vm937, %v938, %v932
    %v940 = vshrl.u32 %v939, 1
    %v941 = vand.u32 %v939, 1
    %v942 = vsub.s32 0, %v941
    %v943 = vsel %vm937, %v942, %v941
    %vm944 = vcmp.lt.s32.totalorder %v933, 0
    %v945 = vsub.s32 0, %v933
    %v946 = vsel %vm944, %v945, %v933
    %v947 = vshrl.u32 %v946, 1
    %v948 = vand.u32 %v946, 1
    %v949 = vsub.s32 0, %v948
    %v950 = vsel %vm944, %v949, %v948
    %vm951 = vcmp.lt.s32.totalorder %v934, 0
    %v952 = vsub.s32 0, %v934
    %v953 = vsel %vm951, %v952, %v934
    %v954 = vshrl.u32 %v953, 1
    %v955 = vand.u32 %v953, 1
    %v956 = vsub.s32 0, %v955
    %v957 = vsel %vm951, %v956, %v955
    %vm958 = vcmp.ne.s32.totalorder %v943, 0
    %vm959 = vcmp.ne.s32.totalorder %v950, 0
    %vm960 = vcmp.ne.s32.totalorder %v957, 0
    %vm961 = vcmp.lt.s32.totalorder %v943, 0
    %vm962 = vcmp.lt.s32.totalorder %v950, 0
    %vm963 = vcmp.lt.s32.totalorder %v957, 0
    %vm964 = vmand %vm961, %vm958
    %vm965 = vmand %vm962, %vm959
    %vm966 = vmand %vm963, %vm960
    %v967 = vadd.s32 %v943, 2
    %v968 = vadd.s32 %v950, 2
    %v969 = vadd.s32 %v957, 2
    %v970 = vsel %vm964, %v967, %v943
    %v971 = vsel %vm965, %v968, %v950
    %v972 = vsel %vm966, %v969, %v957
    %vm973 = vcmp.lt.s32.totalorder %v936, 0
    %v974 = vsub.s32 0, %v936
    %v975 = vsel %vm973, %v974, %v936
    %v976 = vshrl.u32 %v975, 1
    %v977 = vand.u32 %v975, 1
    %v978 = vsub.s32 0, %v977
    %v979 = vsel %vm973, %v978, %v977
    %vm980 = vcmp.ne.s32.totalorder %v979, 0
    %vm981 = vcmp.lt.s32.totalorder %v979, 0
    %vm982 = vmand %vm981, %vm980
    %v983 = vadd.s32 %v979, 2
    %v984 = vsel %vm982, %v983, %v979
    %vm985 = vcmp.eq.s32.totalorder %v970, %v984
    %vm986 = vcmp.eq.s32.totalorder %v971, %v984
    %vm987 = vcmp.eq.s32.totalorder %v972, %v984
    %v988 = vsel %vm985, 0.0, -1e+30
    %v989 = vsel %vm986, 0.0, -1e+30
    %v990 = vsel %vm987, 0.0, -1e+30
    %v991 = vld [vmem:[#allocation11] sm:$0x1]
    %v992 = vld [vmem:[#allocation13] sm:$0x1]
    %v993 = vsel %vm248, %v927, 0.0
    %994 = vadd.xlane.f32.xlu0 %v993
    %v995 = vpop.xlane.xlu0 %994
    %v996 = vsel %vm248, %v930, 0.0
    %997 = vadd.xlane.f32.xlu0 %v996
    %v998 = vpop.xlane.xlu0 %997
    %vm999 = vcmask 254976
    %v1000 = vsel %vm999, %v921, 0.0
    %1001 = vadd.xlane.f32.xlu0 %v1000
    %v1002 = vpop.xlane.xlu0 %1001
    %v1003 = vrcp.pop 32.0
    %v1004 = vmul.f32 %v995, %v1003
    %v1005 = vmul.f32 %v998, %v1003
    %v1006 = vmul.f32 %v1002, %v1003
    %v1007 = vsub.f32 %v927, %v1004
    %v1008 = vsub.f32 %v930, %v1005
    %v1009 = vsub.f32 %v921, %v1006
    %v1010 = vmul.f32 %v1007, %v1007
    %v1011 = vmul.f32 %v1008, %v1008
    %v1012 = vmul.f32 %v1009, %v1009
    %v1013 = vsel %vm248, %v1010, 0.0
    %1014 = vadd.xlane.f32.xlu0 %v1013
    %v1015 = vpop.xlane.xlu0 %1014
    %v1016 = vsel %vm248, %v1011, 0.0
    %1017 = vadd.xlane.f32.xlu0 %v1016
    %v1018 = vpop.xlane.xlu0 %1017
    %v1019 = vsel %vm999, %v1012, 0.0
    %1020 = vadd.xlane.f32.xlu0 %v1019
    %v1021 = vpop.xlane.xlu0 %1020
    %v1022 = vmul.f32 %v1015, %v1003
    %v1023 = vmul.f32 %v1018, %v1003
    %v1024 = vmul.f32 %v1021, %v1003
    %v1025 = vadd.f32 %v1022, 1e-05
    %v1026 = vadd.f32 %v1023, 1e-05
    %v1027 = vadd.f32 %v1024, 1e-05
    %v1028 = vrsqrt.pop %v1025
    %v1029 = vrsqrt.pop %v1026
    %v1030 = vrsqrt.pop %v1027
    %v1031 = vmul.f32 %v1007, %v1028
    %v1032 = vmul.f32 %v1008, %v1029
    %v1033 = vmul.f32 %v1009, %v1030
    %v1035 = vlaneseq
    %v1036 = vshrl.u32 %v1035, 7
    %v1037 = vsub.s32 0, %v1036
    %v1038 = vrot.slane %v991, %v1037
    %v1040 = vmul.f32 %v1031, %v1038
    %v1041 = vmul.f32 %v1032, %v1038
    %v1042 = vmul.f32 %v1033, %v1038
    %v1044 = vlaneseq
    %v1045 = vshrl.u32 %v1044, 7
    %v1046 = vsub.s32 0, %v1045
    %v1047 = vrot.slane %v992, %v1046
    %v1049 = vadd.f32 %v1040, %v1047
    %v1050 = vadd.f32 %v1041, %v1047
    %v1051 = vadd.f32 %v1042, %v1047
    %v1052 = vpack.c.bf16 %v1050, %v1049
    %v1053 = vpack.c.bf16 %v1051, %v1051
    %v1054 = vld [vmem:[%s9] sm:$0xf]
    %v1055 = vld [vmem:[%s9 + $0x4] sm:$0xf]
    %v1056 = vld [vmem:[%s9 + $0x8] sm:$0xf]
    %v1057 = vld [vmem:[%s9 + $0xc] sm:$0xf]
    %v1062 = vunpack.c.l.b16 %v1054
    %v1063 = vunpack.c.l.b16 %v1055
    %v1064 = vunpack.c.l.b16 %v1056
    %v1065 = vunpack.c.l.b16 %v1057
    %v1066 = vpack.c.b16 %v1063, %v1062
    %v1067 = vpack.c.b16 %v1065, %v1064
    %v1071 = vsel %vm248, %v1052, 0
    %v1074 = vsel %vm248, %v1053, 0
    %1076 = vmatprep.subr.bf16.mxu0 0
    %1077 = vmatpush1.bf16.msra.mxu0 %v1066
    %1078 = vmatprep.subr.bf16.mxu0 0
    %1079 = vmatpush1.bf16.msra.mxu0 %v1067
    %1080 = vmatprep.subr.bf16.mxu0 0
    %1081 = vmatpush1.bf16.msra.mxu0 0
    %1082 = vmatprep.subr.bf16.mxu0 0
    %1083 = vmatpush1.bf16.msra.mxu0 0
    %1084 = vmatprep.subr.bf16.mxu0 0
    %1085 = vmatpush1.bf16.msra.mxu0 0
    %1086 = vmatprep.subr.bf16.mxu0 0
    %1087 = vmatpush1.bf16.msra.mxu0 0
    %1088 = vmatprep.subr.bf16.mxu0 0
    %1089 = vmatpush1.bf16.msra.mxu0 0
    %1090 = vmatprep.subr.bf16.mxu0 0
    %1091 = vmatpush1.bf16.msra.mxu0 0
    %1092 = vmatprep.subr.bf16.mxu0 0
    %1093 = vmatpush1.bf16.msra.mxu0 0
    %1094 = vmatprep.subr.bf16.mxu0 0
    %1095 = vmatpush1.bf16.msra.mxu0 0
    %1096 = vmatprep.subr.bf16.mxu0 0
    %1097 = vmatpush1.bf16.msra.mxu0 0
    %1098 = vmatprep.subr.bf16.mxu0 0
    %1099 = vmatpush1.bf16.msra.mxu0 0
    %1100 = vmatprep.subr.bf16.mxu0 0
    %1101 = vmatpush1.bf16.msra.mxu0 0
    %1102 = vmatprep.subr.bf16.mxu0 0
    %1103 = vmatpush1.bf16.msra.mxu0 0
    %1104 = vmatprep.subr.bf16.mxu0 0
    %1105 = vmatpush1.bf16.msra.mxu0 0
    %1106 = vmatprep.subr.bf16.mxu0 0
    %1107 = vmatpush1.bf16.msra.mxu0 0
    %1108 = vmatprep.mubr.bf16.mxu0 0
    %1109 = vmatmul.mubr.bf16.gmra.mrb[0].mxu0 %v1071
    %v1110 = vpop.f32.mrb[0].mxu0
    %v1111 = vadd.f32 0.0, %v1110
    %v1112 = vpop.f32.mrb[0].mxu0
    %v1113 = vpop.f32.mrb[0].mxu0
    %v1114 = vadd.f32 0.0, %v1113
    %v1115 = vpop.f32.mrb[0].mxu0
    %1116 = vmatprep.mubr.bf16.mxu0 0
    %1117 = vmatmul.mubr.bf16.gmra.mrb[0].mxu0 %v1074
    %v1118 = vpop.f32.mrb[0].mxu0
    %v1119 = vadd.f32 0.0, %v1118
    %v1120 = vpop.f32.mrb[0].mxu0
    %v1121 = vpop.f32.mrb[0].mxu0
    %v1122 = vpop.f32.mrb[0].mxu0
    %1123 = vdwg.mxu0
    %v1124 = vld [vmem:[%s10] sm:$0xf]
    %v1125 = vld [vmem:[%s10 + $0x4] sm:$0xf]
    %v1126 = vld [vmem:[%s10 + $0x8] sm:$0xf]
    %v1127 = vld [vmem:[%s10 + $0xc] sm:$0xf]
    %v1132 = vunpack.c.l.b16 %v1124
    %v1133 = vunpack.c.l.b16 %v1125
    %v1134 = vunpack.c.l.b16 %v1126
    %v1135 = vunpack.c.l.b16 %v1127
    %v1136 = vpack.c.b16 %v1133, %v1132
    %v1137 = vpack.c.b16 %v1135, %v1134
    %1140 = vmatprep.subr.bf16.mxu0 0
    %1141 = vmatpush1.bf16.msra.mxu0 %v1136
    %1142 = vmatprep.subr.bf16.mxu0 0
    %1143 = vmatpush1.bf16.msra.mxu0 %v1137
    %1144 = vmatprep.subr.bf16.mxu0 0
    %1145 = vmatpush1.bf16.msra.mxu0 0
    %1146 = vmatprep.subr.bf16.mxu0 0
    %1147 = vmatpush1.bf16.msra.mxu0 0
    %1148 = vmatprep.subr.bf16.mxu0 0
    %1149 = vmatpush1.bf16.msra.mxu0 0
    %1150 = vmatprep.subr.bf16.mxu0 0
    %1151 = vmatpush1.bf16.msra.mxu0 0
    %1152 = vmatprep.subr.bf16.mxu0 0
    %1153 = vmatpush1.bf16.msra.mxu0 0
    %1154 = vmatprep.subr.bf16.mxu0 0
    %1155 = vmatpush1.bf16.msra.mxu0 0
    %1156 = vmatprep.subr.bf16.mxu0 0
    %1157 = vmatpush1.bf16.msra.mxu0 0
    %1158 = vmatprep.subr.bf16.mxu0 0
    %1159 = vmatpush1.bf16.msra.mxu0 0
    %1160 = vmatprep.subr.bf16.mxu0 0
    %1161 = vmatpush1.bf16.msra.mxu0 0
    %1162 = vmatprep.subr.bf16.mxu0 0
    %1163 = vmatpush1.bf16.msra.mxu0 0
    %1164 = vmatprep.subr.bf16.mxu0 0
    %1165 = vmatpush1.bf16.msra.mxu0 0
    %1166 = vmatprep.subr.bf16.mxu0 0
    %1167 = vmatpush1.bf16.msra.mxu0 0
    %1168 = vmatprep.subr.bf16.mxu0 0
    %1169 = vmatpush1.bf16.msra.mxu0 0
    %1170 = vmatprep.subr.bf16.mxu0 0
    %1171 = vmatpush1.bf16.msra.mxu0 0
    %1172 = vmatprep.mubr.bf16.mxu0 0
    %1173 = vmatmul.mubr.bf16.gmra.mrb[0].mxu0 %v1071
    %v1174 = vpop.f32.mrb[0].mxu0
    %v1175 = vadd.f32 0.0, %v1174
    %v1176 = vpop.f32.mrb[0].mxu0
    %v1177 = vpop.f32.mrb[0].mxu0
    %v1178 = vadd.f32 0.0, %v1177
    %v1179 = vpop.f32.mrb[0].mxu0
    %1180 = vmatprep.mubr.bf16.mxu0 0
    %1181 = vmatmul.mubr.bf16.gmra.mrb[0].mxu0 %v1074
    %v1182 = vpop.f32.mrb[0].mxu0
    %v1183 = vadd.f32 0.0, %v1182
    %v1184 = vpop.f32.mrb[0].mxu0
    %v1185 = vpop.f32.mrb[0].mxu0
    %v1186 = vpop.f32.mrb[0].mxu0
    %1187 = vdwg.mxu0
    %v1188 = vld [vmem:[%s11] sm:$0xf]
    %v1189 = vld [vmem:[%s11 + $0x4] sm:$0xf]
    %v1190 = vld [vmem:[%s11 + $0x8] sm:$0xf]
    %v1191 = vld [vmem:[%s11 + $0xc] sm:$0xf]
    %v1196 = vunpack.c.l.b16 %v1188
    %v1197 = vunpack.c.l.b16 %v1189
    %v1198 = vunpack.c.l.b16 %v1190
    %v1199 = vunpack.c.l.b16 %v1191
    %v1200 = vpack.c.b16 %v1197, %v1196
    %v1201 = vpack.c.b16 %v1199, %v1198
    %1204 = vmatprep.subr.bf16.mxu0 0
    %1205 = vmatpush1.bf16.msra.mxu0 %v1200
    %1206 = vmatprep.subr.bf16.mxu0 0
    %1207 = vmatpush1.bf16.msra.mxu0 %v1201
    %1208 = vmatprep.subr.bf16.mxu0 0
    %1209 = vmatpush1.bf16.msra.mxu0 0
    %1210 = vmatprep.subr.bf16.mxu0 0
    %1211 = vmatpush1.bf16.msra.mxu0 0
    %1212 = vmatprep.subr.bf16.mxu0 0
    %1213 = vmatpush1.bf16.msra.mxu0 0
    %1214 = vmatprep.subr.bf16.mxu0 0
    %1215 = vmatpush1.bf16.msra.mxu0 0
    %1216 = vmatprep.subr.bf16.mxu0 0
    %1217 = vmatpush1.bf16.msra.mxu0 0
    %1218 = vmatprep.subr.bf16.mxu0 0
    %1219 = vmatpush1.bf16.msra.mxu0 0
    %1220 = vmatprep.subr.bf16.mxu0 0
    %1221 = vmatpush1.bf16.msra.mxu0 0
    %1222 = vmatprep.subr.bf16.mxu0 0
    %1223 = vmatpush1.bf16.msra.mxu0 0
    %1224 = vmatprep.subr.bf16.mxu0 0
    %1225 = vmatpush1.bf16.msra.mxu0 0
    %1226 = vmatprep.subr.bf16.mxu0 0
    %1227 = vmatpush1.bf16.msra.mxu0 0
    %1228 = vmatprep.subr.bf16.mxu0 0
    %1229 = vmatpush1.bf16.msra.mxu0 0
    %1230 = vmatprep.subr.bf16.mxu0 0
    %1231 = vmatpush1.bf16.msra.mxu0 0
    %1232 = vmatprep.subr.bf16.mxu0 0
    %1233 = vmatpush1.bf16.msra.mxu0 0
    %1234 = vmatprep.subr.bf16.mxu0 0
    %1235 = vmatpush1.bf16.msra.mxu0 0
    %1236 = vmatprep.mubr.bf16.mxu0 0
    %1237 = vmatmul.mubr.bf16.gmra.mrb[0].mxu0 %v1071
    %v1238 = vpop.f32.mrb[0].mxu0
    %v1239 = vadd.f32 0.0, %v1238
    %v1240 = vpop.f32.mrb[0].mxu0
    %v1241 = vpop.f32.mrb[0].mxu0
    %v1242 = vadd.f32 0.0, %v1241
    %v1243 = vpop.f32.mrb[0].mxu0
    %1244 = vmatprep.mubr.bf16.mxu0 0
    %1245 = vmatmul.mubr.bf16.gmra.mrb[0].mxu0 %v1074
    %v1246 = vpop.f32.mrb[0].mxu0
    %v1247 = vadd.f32 0.0, %v1246
    %v1248 = vpop.f32.mrb[0].mxu0
    %v1249 = vpop.f32.mrb[0].mxu0
    %v1250 = vpop.f32.mrb[0].mxu0
    %1251 = vdwg.mxu0
    %v1252 = vld [vmem:[%s12] sm:$0xf]
    %v1253 = vld [vmem:[%s12 + $0x4] sm:$0xf]
    %v1254 = vld [vmem:[%s12 + $0x8] sm:$0xf]
    %v1255 = vld [vmem:[%s12 + $0xc] sm:$0xf]
    %v1256 = vpack.c.bf16 %v1114, %v1111
    %v1257 = vpack.c.bf16 %v1119, %v1119
    %v1258 = vpack.c.bf16 %v1178, %v1175
    %v1259 = vpack.c.bf16 %v1183, %v1183
    %v1260 = vpack.c.bf16 %v1242, %v1239
    %v1261 = vpack.c.bf16 %v1247, %v1247
    %vm1262 = vcmask 64512
    %v1264 = vsel %vm1262, %v1256, 0
    %v1267 = vsel %vm1262, %v1257, 0
    %v1270 = vsel %vm1262, %v1258, 0
    %v1273 = vsel %vm1262, %v1259, 0
    %1275 = vmatprep.subr.bf16.mxu0 0
    %1276 = vmatpush1.bf16.xpose.msra.mxu0 %v1270
    %1277 = vmatprep.subr.bf16.mxu0 0
    %1278 = vmatpush1.bf16.xpose.msra.mxu0 %v1273
    %1279 = vmatprep.subr.bf16.mxu0 0
    %1280 = vmatpush1.bf16.xpose.msra.mxu0 0
    %1281 = vmatprep.subr.bf16.mxu0 0
    %1282 = vmatpush1.bf16.xpose.msra.mxu0 0
    %1283 = vmatprep.subr.bf16.mxu0 0
    %1284 = vmatpush1.bf16.xpose.msra.mxu0 0
    %1285 = vmatprep.subr.bf16.mxu0 0
    %1286 = vmatpush1.bf16.xpose.msra.mxu0 0
    %1287 = vmatprep.subr.bf16.mxu0 0
    %1288 = vmatpush1.bf16.xpose.msra.mxu0 0
    %1289 = vmatprep.subr.bf16.mxu0 0
    %1290 = vmatpush1.bf16.xpose.msra.mxu0 0
    %1291 = vmatprep.subr.bf16.mxu0 0
    %1292 = vmatpush1.bf16.xpose.msra.mxu0 0
    %1293 = vmatprep.subr.bf16.mxu0 0
    %1294 = vmatpush1.bf16.xpose.msra.mxu0 0
    %1295 = vmatprep.subr.bf16.mxu0 0
    %1296 = vmatpush1.bf16.xpose.msra.mxu0 0
    %1297 = vmatprep.subr.bf16.mxu0 0
    %1298 = vmatpush1.bf16.xpose.msra.mxu0 0
    %1299 = vmatprep.subr.bf16.mxu0 0
    %1300 = vmatpush1.bf16.xpose.msra.mxu0 0
    %1301 = vmatprep.subr.bf16.mxu0 0
    %1302 = vmatpush1.bf16.xpose.msra.mxu0 0
    %1303 = vmatprep.subr.bf16.mxu0 0
    %1304 = vmatpush1.bf16.xpose.msra.mxu0 0
    %1305 = vmatprep.subr.bf16.mxu0 0
    %1306 = vmatpush1.bf16.xpose.msra.mxu0 0
    %1307 = vmatprep.mubr.bf16.mxu0 0
    %1308 = vmatmul.mubr.bf16.gmra.mrb[0].mxu0 %v1264
    %v1309 = vpop.f32.mrb[0].mxu0
    %v1310 = vadd.f32 %v988, %v1309
    %v1311 = vpop.f32.mrb[0].mxu0
    %v1312 = vpop.f32.mrb[0].mxu0
    %v1313 = vadd.f32 %v989, %v1312
    %v1314 = vpop.f32.mrb[0].mxu0
    %1315 = vmatprep.mubr.bf16.mxu0 0
    %1316 = vmatmul.mubr.bf16.gmra.mrb[0].mxu0 %v1267
    %v1317 = vpop.f32.mrb[0].mxu0
    %v1318 = vadd.f32 %v990, %v1317
    %v1319 = vpop.f32.mrb[0].mxu0
    %v1320 = vpop.f32.mrb[0].mxu0
    %v1321 = vpop.f32.mrb[0].mxu0
    %1322 = vdwg.mxu0
    %vm1323 = vcmask 146432
    %v1324 = vsel %vm1323, %v1310, -inf
    %1325 = vmax.xlane.f32.xlu0 %v1324
    %v1326 = vpop.xlane.xlu0 %1325
    %v1327 = vsel %vm1323, %v1313, -inf
    %1328 = vmax.xlane.f32.xlu0 %v1327
    %v1329 = vpop.xlane.xlu0 %1328
    %vm1330 = vcmask 140288
    %v1331 = vsel %vm1330, %v1318, -inf
    %1332 = vmax.xlane.f32.xlu0 %v1331
    %v1333 = vpop.xlane.xlu0 %1332
    %v1334 = vsub.f32 %v1310, %v1326
    %v1335 = vsub.f32 %v1313, %v1329
    %v1336 = vsub.f32 %v1318, %v1333
    %v1337 = vmul.f32 %v1334, 1.442695
    %v1338 = vpow.pop %v1337
    %v1339 = vmul.f32 %v1335, 1.442695
    %v1340 = vpow.pop %v1339
    %v1341 = vmul.f32 %v1336, 1.442695
    %v1342 = vpow.pop %v1341
    %v1343 = vsel %vm1323, %v1338, 0.0
    %1344 = vadd.xlane.f32.xlu0 %v1343
    %v1345 = vpop.xlane.xlu0 %1344
    %v1346 = vsel %vm1323, %v1340, 0.0
    %1347 = vadd.xlane.f32.xlu0 %v1346
    %v1348 = vpop.xlane.xlu0 %1347
    %v1349 = vsel %vm1330, %v1342, 0.0
    %1350 = vadd.xlane.f32.xlu0 %v1349
    %v1351 = vpop.xlane.xlu0 %1350
    %v1352 = vrcp.pop %v1345
    %v1353 = vrcp.pop %v1348
    %v1354 = vrcp.pop %v1351
    %v1355 = vmul.f32 %v1338, %v1352
    %v1356 = vmul.f32 %v1340, %v1353
    %v1357 = vmul.f32 %v1342, %v1354
    %v1358 = vpack.c.bf16 %v1356, %v1355
    %v1359 = vpack.c.bf16 %v1357, %v1357
    %v1361 = vsel %vm1323, %v1358, 0
    %v1364 = vsel %vm1323, %v1359, 0
    %vm1366 = vcmask 1040384
    %v1368 = vsel %vm1366, %v1261, 0
    %1370 = vmatprep.subr.bf16.mxu0 0
    %1371 = vmatpush1.bf16.msra.mxu0 %v1260
    %1372 = vmatprep.subr.bf16.mxu0 0
    %1373 = vmatpush1.bf16.msra.mxu0 %v1368
    %1374 = vmatprep.subr.bf16.mxu0 0
    %1375 = vmatpush1.bf16.msra.mxu0 0
    %1376 = vmatprep.subr.bf16.mxu0 0
    %1377 = vmatpush1.bf16.msra.mxu0 0
    %1378 = vmatprep.subr.bf16.mxu0 0
    %1379 = vmatpush1.bf16.msra.mxu0 0
    %1380 = vmatprep.subr.bf16.mxu0 0
    %1381 = vmatpush1.bf16.msra.mxu0 0
    %1382 = vmatprep.subr.bf16.mxu0 0
    %1383 = vmatpush1.bf16.msra.mxu0 0
    %1384 = vmatprep.subr.bf16.mxu0 0
    %1385 = vmatpush1.bf16.msra.mxu0 0
    %1386 = vmatprep.subr.bf16.mxu0 0
    %1387 = vmatpush1.bf16.msra.mxu0 0
    %1388 = vmatprep.subr.bf16.mxu0 0
    %1389 = vmatpush1.bf16.msra.mxu0 0
    %1390 = vmatprep.subr.bf16.mxu0 0
    %1391 = vmatpush1.bf16.msra.mxu0 0
    %1392 = vmatprep.subr.bf16.mxu0 0
    %1393 = vmatpush1.bf16.msra.mxu0 0
    %1394 = vmatprep.subr.bf16.mxu0 0
    %1395 = vmatpush1.bf16.msra.mxu0 0
    %1396 = vmatprep.subr.bf16.mxu0 0
    %1397 = vmatpush1.bf16.msra.mxu0 0
    %1398 = vmatprep.subr.bf16.mxu0 0
    %1399 = vmatpush1.bf16.msra.mxu0 0
    %1400 = vmatprep.subr.bf16.mxu0 0
    %1401 = vmatpush1.bf16.msra.mxu0 0
    %1402 = vmatprep.mubr.bf16.mxu0 0
    %1403 = vmatmul.mubr.bf16.gmra.mrb[0].mxu0 %v1361
    %v1404 = vpop.f32.mrb[0].mxu0
    %v1405 = vadd.f32 0.0, %v1404
    %v1406 = vpop.f32.mrb[0].mxu0
    %v1407 = vpop.f32.mrb[0].mxu0
    %v1408 = vadd.f32 0.0, %v1407
    %v1409 = vpop.f32.mrb[0].mxu0
    %1410 = vmatprep.mubr.bf16.mxu0 0
    %1411 = vmatmul.mubr.bf16.gmra.mrb[0].mxu0 %v1364
    %v1412 = vpop.f32.mrb[0].mxu0
    %v1413 = vadd.f32 0.0, %v1412
    %v1414 = vpop.f32.mrb[0].mxu0
    %v1415 = vpop.f32.mrb[0].mxu0
    %v1416 = vpop.f32.mrb[0].mxu0
    %1417 = vdwg.mxu0
    %v1418 = vpack.c.bf16 %v1408, %v1405
    %v1419 = vpack.c.bf16 %v1413, %v1413
    %1422 = vrot.lane.b32.xlu0 %v1256, 120
    %v1423 = vpop.permute.xlu0 %1422
    %1424 = vrot.lane.b32.xlu0 %v1257, 120
    %v1425 = vpop.permute.xlu0 %1424
    %1428 = vrot.lane.b32.xlu0 %v1258, 120
    %v1429 = vpop.permute.xlu0 %1428
    %1430 = vrot.lane.b32.xlu0 %v1259, 120
    %v1431 = vpop.permute.xlu0 %1430
    %v1433 = vsel %vm1262, %v1423, 0
    %v1436 = vsel %vm1262, %v1425, 0
    %v1439 = vsel %vm1262, %v1429, 0
    %v1442 = vsel %vm1262, %v1431, 0
    %1444 = vmatprep.subr.bf16.mxu0 0
    %1445 = vmatpush1.bf16.xpose.msra.mxu0 %v1439
    %1446 = vmatprep.subr.bf16.mxu0 0
    %1447 = vmatpush1.bf16.xpose.msra.mxu0 %v1442
    %1448 = vmatprep.subr.bf16.mxu0 0
    %1449 = vmatpush1.bf16.xpose.msra.mxu0 0
    %1450 = vmatprep.subr.bf16.mxu0 0
    %1451 = vmatpush1.bf16.xpose.msra.mxu0 0
    %1452 = vmatprep.subr.bf16.mxu0 0
    %1453 = vmatpush1.bf16.xpose.msra.mxu0 0
    %1454 = vmatprep.subr.bf16.mxu0 0
    %1455 = vmatpush1.bf16.xpose.msra.mxu0 0
    %1456 = vmatprep.subr.bf16.mxu0 0
    %1457 = vmatpush1.bf16.xpose.msra.mxu0 0
    %1458 = vmatprep.subr.bf16.mxu0 0
    %1459 = vmatpush1.bf16.xpose.msra.mxu0 0
    %1460 = vmatprep.subr.bf16.mxu0 0
    %1461 = vmatpush1.bf16.xpose.msra.mxu0 0
    %1462 = vmatprep.subr.bf16.mxu0 0
    %1463 = vmatpush1.bf16.xpose.msra.mxu0 0
    %1464 = vmatprep.subr.bf16.mxu0 0
    %1465 = vmatpush1.bf16.xpose.msra.mxu0 0
    %1466 = vmatprep.subr.bf16.mxu0 0
    %1467 = vmatpush1.bf16.xpose.msra.mxu0 0
    %1468 = vmatprep.subr.bf16.mxu0 0
    %1469 = vmatpush1.bf16.xpose.msra.mxu0 0
    %1470 = vmatprep.subr.bf16.mxu0 0
    %1471 = vmatpush1.bf16.xpose.msra.mxu0 0
    %1472 = vmatprep.subr.bf16.mxu0 0
    %1473 = vmatpush1.bf16.xpose.msra.mxu0 0
    %1474 = vmatprep.subr.bf16.mxu0 0
    %1475 = vmatpush1.bf16.xpose.msra.mxu0 0
    %1476 = vmatprep.mubr.bf16.mxu0 0
    %1477 = vmatmul.mubr.bf16.gmra.mrb[0].mxu0 %v1433
    %v1478 = vpop.f32.mrb[0].mxu0
    %v1479 = vadd.f32 %v988, %v1478
    %v1480 = vpop.f32.mrb[0].mxu0
    %v1481 = vpop.f32.mrb[0].mxu0
    %v1482 = vadd.f32 %v989, %v1481
    %v1483 = vpop.f32.mrb[0].mxu0
    %1484 = vmatprep.mubr.bf16.mxu0 0
    %1485 = vmatmul.mubr.bf16.gmra.mrb[0].mxu0 %v1436
    %v1486 = vpop.f32.mrb[0].mxu0
    %v1487 = vadd.f32 %v990, %v1486
    %v1488 = vpop.f32.mrb[0].mxu0
    %v1489 = vpop.f32.mrb[0].mxu0
    %v1490 = vpop.f32.mrb[0].mxu0
    %1491 = vdwg.mxu0
    %v1492 = vsel %vm1323, %v1479, -inf
    %1493 = vmax.xlane.f32.xlu0 %v1492
    %v1494 = vpop.xlane.xlu0 %1493
    %v1495 = vsel %vm1323, %v1482, -inf
    %1496 = vmax.xlane.f32.xlu0 %v1495
    %v1497 = vpop.xlane.xlu0 %1496
    %v1498 = vsel %vm1330, %v1487, -inf
    %1499 = vmax.xlane.f32.xlu0 %v1498
    %v1500 = vpop.xlane.xlu0 %1499
    %v1501 = vsub.f32 %v1479, %v1494
    %v1502 = vsub.f32 %v1482, %v1497
    %v1503 = vsub.f32 %v1487, %v1500
    %v1504 = vmul.f32 %v1501, 1.442695
    %v1505 = vpow.pop %v1504
    %v1506 = vmul.f32 %v1502, 1.442695
    %v1507 = vpow.pop %v1506
    %v1508 = vmul.f32 %v1503, 1.442695
    %v1509 = vpow.pop %v1508
    %v1510 = vsel %vm1323, %v1505, 0.0
    %1511 = vadd.xlane.f32.xlu0 %v1510
    %v1512 = vpop.xlane.xlu0 %1511
    %v1513 = vsel %vm1323, %v1507, 0.0
    %1514 = vadd.xlane.f32.xlu0 %v1513
    %v1515 = vpop.xlane.xlu0 %1514
    %v1516 = vsel %vm1330, %v1509, 0.0
    %1517 = vadd.xlane.f32.xlu0 %v1516
    %v1518 = vpop.xlane.xlu0 %1517
    %v1519 = vrcp.pop %v1512
    %v1520 = vrcp.pop %v1515
    %v1521 = vrcp.pop %v1518
    %v1522 = vmul.f32 %v1505, %v1519
    %v1523 = vmul.f32 %v1507, %v1520
    %v1524 = vmul.f32 %v1509, %v1521
    %v1525 = vpack.c.bf16 %v1523, %v1522
    %v1526 = vpack.c.bf16 %v1524, %v1524
    %1529 = vrot.lane.b32.xlu0 %v1260, 120
    %v1530 = vpop.permute.xlu0 %1529
    %1531 = vrot.lane.b32.xlu0 %v1261, 120
    %v1532 = vpop.permute.xlu0 %1531
    %v1535 = vsel %vm1323, %v1525, 0
    %v1538 = vsel %vm1323, %v1526, 0
    %v1541 = vsel %vm1366, %v1532, 0
    %1543 = vmatprep.subr.bf16.mxu0 0
    %1544 = vmatpush1.bf16.msra.mxu0 %v1530
    %1545 = vmatprep.subr.bf16.mxu0 0
    %1546 = vmatpush1.bf16.msra.mxu0 %v1541
    %1547 = vmatprep.subr.bf16.mxu0 0
    %1548 = vmatpush1.bf16.msra.mxu0 0
    %1549 = vmatprep.subr.bf16.mxu0 0
    %1550 = vmatpush1.bf16.msra.mxu0 0
    %1551 = vmatprep.subr.bf16.mxu0 0
    %1552 = vmatpush1.bf16.msra.mxu0 0
    %1553 = vmatprep.subr.bf16.mxu0 0
    %1554 = vmatpush1.bf16.msra.mxu0 0
    %1555 = vmatprep.subr.bf16.mxu0 0
    %1556 = vmatpush1.bf16.msra.mxu0 0
    %1557 = vmatprep.subr.bf16.mxu0 0
    %1558 = vmatpush1.bf16.msra.mxu0 0
    %1559 = vmatprep.subr.bf16.mxu0 0
    %1560 = vmatpush1.bf16.msra.mxu0 0
    %1561 = vmatprep.subr.bf16.mxu0 0
    %1562 = vmatpush1.bf16.msra.mxu0 0
    %1563 = vmatprep.subr.bf16.mxu0 0
    %1564 = vmatpush1.bf16.msra.mxu0 0
    %1565 = vmatprep.subr.bf16.mxu0 0
    %1566 = vmatpush1.bf16.msra.mxu0 0
    %1567 = vmatprep.subr.bf16.mxu0 0
    %1568 = vmatpush1.bf16.msra.mxu0 0
    %1569 = vmatprep.subr.bf16.mxu0 0
    %1570 = vmatpush1.bf16.msra.mxu0 0
    %1571 = vmatprep.subr.bf16.mxu0 0
    %1572 = vmatpush1.bf16.msra.mxu0 0
    %1573 = vmatprep.subr.bf16.mxu0 0
    %1574 = vmatpush1.bf16.msra.mxu0 0
    %1575 = vmatprep.mubr.bf16.mxu0 0
    %1576 = vmatmul.mubr.bf16.gmra.mrb[0].mxu0 %v1535
    %v1577 = vpop.f32.mrb[0].mxu0
    %v1578 = vadd.f32 0.0, %v1577
    %v1579 = vpop.f32.mrb[0].mxu0
    %v1580 = vpop.f32.mrb[0].mxu0
    %v1581 = vadd.f32 0.0, %v1580
    %v1582 = vpop.f32.mrb[0].mxu0
    %1583 = vmatprep.mubr.bf16.mxu0 0
    %1584 = vmatmul.mubr.bf16.gmra.mrb[0].mxu0 %v1538
    %v1585 = vpop.f32.mrb[0].mxu0
    %v1586 = vadd.f32 0.0, %v1585
    %v1587 = vpop.f32.mrb[0].mxu0
    %v1588 = vpop.f32.mrb[0].mxu0
    %v1589 = vpop.f32.mrb[0].mxu0
    %1590 = vdwg.mxu0
    %v1591 = vpack.c.bf16 %v1581, %v1578
    %v1592 = vpack.c.bf16 %v1586, %v1586
    %v1594 = vsel %vm1262, %v1591, 0
    %v1597 = vsel %vm1262, %v1592, 0
    %v1600 = vsel %vm924, %v1253, 0
    %1602 = vmatprep.subr.bf16.mxu0 0
    %1603 = vmatpush1.bf16.msra.mxu0 %v1600
    %1604 = vmatprep.subr.bf16.mxu0 0
    %1605 = vmatpush1.bf16.msra.mxu0 0
    %1606 = vmatprep.subr.bf16.mxu0 0
    %1607 = vmatpush1.bf16.msra.mxu0 0
    %1608 = vmatprep.subr.bf16.mxu0 0
    %1609 = vmatpush1.bf16.msra.mxu0 0
    %1610 = vmatprep.subr.bf16.mxu0 0
    %1611 = vmatpush1.bf16.msra.mxu0 0
    %1612 = vmatprep.subr.bf16.mxu0 0
    %1613 = vmatpush1.bf16.msra.mxu0 0
    %1614 = vmatprep.subr.bf16.mxu0 0
    %1615 = vmatpush1.bf16.msra.mxu0 0
    %1616 = vmatprep.subr.bf16.mxu0 0
    %1617 = vmatpush1.bf16.msra.mxu0 0
    %1618 = vmatprep.subr.bf16.mxu0 0
    %1619 = vmatpush1.bf16.msra.mxu0 0
    %1620 = vmatprep.subr.bf16.mxu0 0
    %1621 = vmatpush1.bf16.msra.mxu0 0
    %1622 = vmatprep.subr.bf16.mxu0 0
    %1623 = vmatpush1.bf16.msra.mxu0 0
    %1624 = vmatprep.subr.bf16.mxu0 0
    %1625 = vmatpush1.bf16.msra.mxu0 0
    %1626 = vmatprep.subr.bf16.mxu0 0
    %1627 = vmatpush1.bf16.msra.mxu0 0
    %1628 = vmatprep.subr.bf16.mxu0 0
    %1629 = vmatpush1.bf16.msra.mxu0 0
    %1630 = vmatprep.subr.bf16.mxu0 0
    %1631 = vmatpush1.bf16.msra.mxu0 0
    %1632 = vmatprep.subr.bf16.mxu0 0
    %1633 = vmatpush1.bf16.msra.mxu0 0
    %1634 = vmatprep.mubr.bf16.mxu0 0
    %1635 = vmatmul.mubr.bf16.gmra.mrb[0].mxu0 %v1594
    %v1636 = vpop.f32.mrb[0].mxu0
    %v1637 = vadd.f32 0.0, %v1636
    %v1638 = vpop.f32.mrb[0].mxu0
    %v1639 = vpop.f32.mrb[0].mxu0
    %v1640 = vadd.f32 0.0, %v1639
    %v1641 = vpop.f32.mrb[0].mxu0
    %1642 = vmatprep.mubr.bf16.mxu0 0
    %1643 = vmatmul.mubr.bf16.gmra.mrb[0].mxu0 %v1597
    %v1644 = vpop.f32.mrb[0].mxu0
    %v1645 = vadd.f32 0.0, %v1644
    %v1646 = vpop.f32.mrb[0].mxu0
    %v1647 = vpop.f32.mrb[0].mxu0
    %v1648 = vpop.f32.mrb[0].mxu0
    %1649 = vdwg.mxu0
    %v1651 = vsel %vm1262, %v1418, 0
    %v1654 = vsel %vm1262, %v1419, 0
    %v1657 = vsel %vm924, %v1252, 0
    %1659 = vmatprep.subr.bf16.mxu0 0
    %1660 = vmatpush1.bf16.msra.mxu0 %v1657
    %1661 = vmatprep.subr.bf16.mxu0 0
    %1662 = vmatpush1.bf16.msra.mxu0 0
    %1663 = vmatprep.subr.bf16.mxu0 0
    %1664 = vmatpush1.bf16.msra.mxu0 0
    %1665 = vmatprep.subr.bf16.mxu0 0
    %1666 = vmatpush1.bf16.msra.mxu0 0
    %1667 = vmatprep.subr.bf16.mxu0 0
    %1668 = vmatpush1.bf16.msra.mxu0 0
    %1669 = vmatprep.subr.bf16.mxu0 0
    %1670 = vmatpush1.bf16.msra.mxu0 0
    %1671 = vmatprep.subr.bf16.mxu0 0
    %1672 = vmatpush1.bf16.msra.mxu0 0
    %1673 = vmatprep.subr.bf16.mxu0 0
    %1674 = vmatpush1.bf16.msra.mxu0 0
    %1675 = vmatprep.subr.bf16.mxu0 0
    %1676 = vmatpush1.bf16.msra.mxu0 0
    %1677 = vmatprep.subr.bf16.mxu0 0
    %1678 = vmatpush1.bf16.msra.mxu0 0
    %1679 = vmatprep.subr.bf16.mxu0 0
    %1680 = vmatpush1.bf16.msra.mxu0 0
    %1681 = vmatprep.subr.bf16.mxu0 0
    %1682 = vmatpush1.bf16.msra.mxu0 0
    %1683 = vmatprep.subr.bf16.mxu0 0
    %1684 = vmatpush1.bf16.msra.mxu0 0
    %1685 = vmatprep.subr.bf16.mxu0 0
    %1686 = vmatpush1.bf16.msra.mxu0 0
    %1687 = vmatprep.subr.bf16.mxu0 0
    %1688 = vmatpush1.bf16.msra.mxu0 0
    %1689 = vmatprep.subr.bf16.mxu0 0
    %1690 = vmatpush1.bf16.msra.mxu0 0
    %1691 = vmatprep.mubr.bf16.mxu0 0
    %1692 = vmatmul.mubr.bf16.gmra.mrb[0].mxu0 %v1651
    %v1693 = vpop.f32.mrb[0].mxu0
    %v1694 = vadd.f32 %v1637, %v1693
    %v1695 = vpop.f32.mrb[0].mxu0
    %v1696 = vpop.f32.mrb[0].mxu0
    %v1697 = vadd.f32 %v1640, %v1696
    %v1698 = vpop.f32.mrb[0].mxu0
    %1699 = vmatprep.mubr.bf16.mxu0 0
    %1700 = vmatmul.mubr.bf16.gmra.mrb[0].mxu0 %v1654
    %v1701 = vpop.f32.mrb[0].mxu0
    %v1702 = vadd.f32 %v1645, %v1701
    %v1703 = vpop.f32.mrb[0].mxu0
    %v1704 = vpop.f32.mrb[0].mxu0
    %v1705 = vpop.f32.mrb[0].mxu0
    %1706 = vdwg.mxu0
    %1707 = vrot.lane.b32.xlu0 %v1256, 112
    %v1708 = vpop.permute.xlu0 %1707
    %1709 = vrot.lane.b32.xlu0 %v1257, 112
    %v1710 = vpop.permute.xlu0 %1709
    %1711 = vrot.lane.b32.xlu0 %v1258, 112
    %v1712 = vpop.permute.xlu0 %1711
    %1713 = vrot.lane.b32.xlu0 %v1259, 112
    %v1714 = vpop.permute.xlu0 %1713
    %v1716 = vsel %vm1262, %v1708, 0
    %v1719 = vsel %vm1262, %v1710, 0
    %v1722 = vsel %vm1262, %v1712, 0
    %v1725 = vsel %vm1262, %v1714, 0
    %1727 = vmatprep.subr.bf16.mxu0 0
    %1728 = vmatpush1.bf16.xpose.msra.mxu0 %v1722
    %1729 = vmatprep.subr.bf16.mxu0 0
    %1730 = vmatpush1.bf16.xpose.msra.mxu0 %v1725
    %1731 = vmatprep.subr.bf16.mxu0 0
    %1732 = vmatpush1.bf16.xpose.msra.mxu0 0
    %1733 = vmatprep.subr.bf16.mxu0 0
    %1734 = vmatpush1.bf16.xpose.msra.mxu0 0
    %1735 = vmatprep.subr.bf16.mxu0 0
    %1736 = vmatpush1.bf16.xpose.msra.mxu0 0
    %1737 = vmatprep.subr.bf16.mxu0 0
    %1738 = vmatpush1.bf16.xpose.msra.mxu0 0
    %1739 = vmatprep.subr.bf16.mxu0 0
    %1740 = vmatpush1.bf16.xpose.msra.mxu0 0
    %1741 = vmatprep.subr.bf16.mxu0 0
    %1742 = vmatpush1.bf16.xpose.msra.mxu0 0
    %1743 = vmatprep.subr.bf16.mxu0 0
    %1744 = vmatpush1.bf16.xpose.msra.mxu0 0
    %1745 = vmatprep.subr.bf16.mxu0 0
    %1746 = vmatpush1.bf16.xpose.msra.mxu0 0
    %1747 = vmatprep.subr.bf16.mxu0 0
    %1748 = vmatpush1.bf16.xpose.msra.mxu0 0
    %1749 = vmatprep.subr.bf16.mxu0 0
    %1750 = vmatpush1.bf16.xpose.msra.mxu0 0
    %1751 = vmatprep.subr.bf16.mxu0 0
    %1752 = vmatpush1.bf16.xpose.msra.mxu0 0
    %1753 = vmatprep.subr.bf16.mxu0 0
    %1754 = vmatpush1.bf16.xpose.msra.mxu0 0
    %1755 = vmatprep.subr.bf16.mxu0 0
    %1756 = vmatpush1.bf16.xpose.msra.mxu0 0
    %1757 = vmatprep.subr.bf16.mxu0 0
    %1758 = vmatpush1.bf16.xpose.msra.mxu0 0
    %1759 = vmatprep.mubr.bf16.mxu0 0
    %1760 = vmatmul.mubr.bf16.gmra.mrb[0].mxu0 %v1716
    %v1761 = vpop.f32.mrb[0].mxu0
    %v1762 = vadd.f32 %v988, %v1761
    %v1763 = vpop.f32.mrb[0].mxu0
    %v1764 = vpop.f32.mrb[0].mxu0
    %v1765 = vadd.f32 %v989, %v1764
    %v1766 = vpop.f32.mrb[0].mxu0
    %1767 = vmatprep.mubr.bf16.mxu0 0
    %1768 = vmatmul.mubr.bf16.gmra.mrb[0].mxu0 %v1719
    %v1769 = vpop.f32.mrb[0].mxu0
    %v1770 = vadd.f32 %v990, %v1769
    %v1771 = vpop.f32.mrb[0].mxu0
    %v1772 = vpop.f32.mrb[0].mxu0
    %v1773 = vpop.f32.mrb[0].mxu0
    %1774 = vdwg.mxu0
    %v1775 = vsel %vm1323, %v1762, -inf
    %1776 = vmax.xlane.f32.xlu0 %v1775
    %v1777 = vpop.xlane.xlu0 %1776
    %v1778 = vsel %vm1323, %v1765, -inf
    %1779 = vmax.xlane.f32.xlu0 %v1778
    %v1780 = vpop.xlane.xlu0 %1779
    %v1781 = vsel %vm1330, %v1770, -inf
    %1782 = vmax.xlane.f32.xlu0 %v1781
    %v1783 = vpop.xlane.xlu0 %1782
    %v1784 = vsub.f32 %v1762, %v1777
    %v1785 = vsub.f32 %v1765, %v1780
    %v1786 = vsub.f32 %v1770, %v1783
    %v1787 = vmul.f32 %v1784, 1.442695
    %v1788 = vpow.pop %v1787
    %v1789 = vmul.f32 %v1785, 1.442695
    %v1790 = vpow.pop %v1789
    %v1791 = vmul.f32 %v1786, 1.442695
    %v1792 = vpow.pop %v1791
    %v1793 = vsel %vm1323, %v1788, 0.0
    %1794 = vadd.xlane.f32.xlu0 %v1793
    %v1795 = vpop.xlane.xlu0 %1794
    %v1796 = vsel %vm1323, %v1790, 0.0
    %1797 = vadd.xlane.f32.xlu0 %v1796
    %v1798 = vpop.xlane.xlu0 %1797
    %v1799 = vsel %vm1330, %v1792, 0.0
    %1800 = vadd.xlane.f32.xlu0 %v1799
    %v1801 = vpop.xlane.xlu0 %1800
    %v1802 = vrcp.pop %v1795
    %v1803 = vrcp.pop %v1798
    %v1804 = vrcp.pop %v1801
    %v1805 = vmul.f32 %v1788, %v1802
    %v1806 = vmul.f32 %v1790, %v1803
    %v1807 = vmul.f32 %v1792, %v1804
    %v1808 = vpack.c.bf16 %v1806, %v1805
    %v1809 = vpack.c.bf16 %v1807, %v1807
    %1810 = vrot.lane.b32.xlu0 %v1260, 112
    %v1811 = vpop.permute.xlu0 %1810
    %1812 = vrot.lane.b32.xlu0 %v1261, 112
    %v1813 = vpop.permute.xlu0 %1812
    %v1816 = vsel %vm1323, %v1808, 0
    %v1819 = vsel %vm1323, %v1809, 0
    %v1822 = vsel %vm1366, %v1813, 0
    %1824 = vmatprep.subr.bf16.mxu0 0
    %1825 = vmatpush1.bf16.msra.mxu0 %v1811
    %1826 = vmatprep.subr.bf16.mxu0 0
    %1827 = vmatpush1.bf16.msra.mxu0 %v1822
    %1828 = vmatprep.subr.bf16.mxu0 0
    %1829 = vmatpush1.bf16.msra.mxu0 0
    %1830 = vmatprep.subr.bf16.mxu0 0
    %1831 = vmatpush1.bf16.msra.mxu0 0
    %1832 = vmatprep.subr.bf16.mxu0 0
    %1833 = vmatpush1.bf16.msra.mxu0 0
    %1834 = vmatprep.subr.bf16.mxu0 0
    %1835 = vmatpush1.bf16.msra.mxu0 0
    %1836 = vmatprep.subr.bf16.mxu0 0
    %1837 = vmatpush1.bf16.msra.mxu0 0
    %1838 = vmatprep.subr.bf16.mxu0 0
    %1839 = vmatpush1.bf16.msra.mxu0 0
    %1840 = vmatprep.subr.bf16.mxu0 0
    %1841 = vmatpush1.bf16.msra.mxu0 0
    %1842 = vmatprep.subr.bf16.mxu0 0
    %1843 = vmatpush1.bf16.msra.mxu0 0
    %1844 = vmatprep.subr.bf16.mxu0 0
    %1845 = vmatpush1.bf16.msra.mxu0 0
    %1846 = vmatprep.subr.bf16.mxu0 0
    %1847 = vmatpush1.bf16.msra.mxu0 0
    %1848 = vmatprep.subr.bf16.mxu0 0
    %1849 = vmatpush1.bf16.msra.mxu0 0
    %1850 = vmatprep.subr.bf16.mxu0 0
    %1851 = vmatpush1.bf16.msra.mxu0 0
    %1852 = vmatprep.subr.bf16.mxu0 0
    %1853 = vmatpush1.bf16.msra.mxu0 0
    %1854 = vmatprep.subr.bf16.mxu0 0
    %1855 = vmatpush1.bf16.msra.mxu0 0
    %1856 = vmatprep.mubr.bf16.mxu0 0
    %1857 = vmatmul.mubr.bf16.gmra.mrb[0].mxu0 %v1816
    %v1858 = vpop.f32.mrb[0].mxu0
    %v1859 = vadd.f32 0.0, %v1858
    %v1860 = vpop.f32.mrb[0].mxu0
    %v1861 = vpop.f32.mrb[0].mxu0
    %v1862 = vadd.f32 0.0, %v1861
    %v1863 = vpop.f32.mrb[0].mxu0
    %1864 = vmatprep.mubr.bf16.mxu0 0
    %1865 = vmatmul.mubr.bf16.gmra.mrb[0].mxu0 %v1819
    %v1866 = vpop.f32.mrb[0].mxu0
    %v1867 = vadd.f32 0.0, %v1866
    %v1868 = vpop.f32.mrb[0].mxu0
    %v1869 = vpop.f32.mrb[0].mxu0
    %v1870 = vpop.f32.mrb[0].mxu0
    %1871 = vdwg.mxu0
    %v1872 = vpack.c.bf16 %v1862, %v1859
    %v1873 = vpack.c.bf16 %v1867, %v1867
    %v1875 = vsel %vm1262, %v1872, 0
    %v1878 = vsel %vm1262, %v1873, 0
    %v1881 = vsel %vm924, %v1254, 0
    %1883 = vmatprep.subr.bf16.mxu0 0
    %1884 = vmatpush1.bf16.msra.mxu0 %v1881
    %1885 = vmatprep.subr.bf16.mxu0 0
    %1886 = vmatpush1.bf16.msra.mxu0 0
    %1887 = vmatprep.subr.bf16.mxu0 0
    %1888 = vmatpush1.bf16.msra.mxu0 0
    %1889 = vmatprep.subr.bf16.mxu0 0
    %1890 = vmatpush1.bf16.msra.mxu0 0
    %1891 = vmatprep.subr.bf16.mxu0 0
    %1892 = vmatpush1.bf16.msra.mxu0 0
    %1893 = vmatprep.subr.bf16.mxu0 0
    %1894 = vmatpush1.bf16.msra.mxu0 0
    %1895 = vmatprep.subr.bf16.mxu0 0
    %1896 = vmatpush1.bf16.msra.mxu0 0
    %1897 = vmatprep.subr.bf16.mxu0 0
    %1898 = vmatpush1.bf16.msra.mxu0 0
    %1899 = vmatprep.subr.bf16.mxu0 0
    %1900 = vmatpush1.bf16.msra.mxu0 0
    %1901 = vmatprep.subr.bf16.mxu0 0
    %1902 = vmatpush1.bf16.msra.mxu0 0
    %1903 = vmatprep.subr.bf16.mxu0 0
    %1904 = vmatpush1.bf16.msra.mxu0 0
    %1905 = vmatprep.subr.bf16.mxu0 0
    %1906 = vmatpush1.bf16.msra.mxu0 0
    %1907 = vmatprep.subr.bf16.mxu0 0
    %1908 = vmatpush1.bf16.msra.mxu0 0
    %1909 = vmatprep.subr.bf16.mxu0 0
    %1910 = vmatpush1.bf16.msra.mxu0 0
    %1911 = vmatprep.subr.bf16.mxu0 0
    %1912 = vmatpush1.bf16.msra.mxu0 0
    %1913 = vmatprep.subr.bf16.mxu0 0
    %1914 = vmatpush1.bf16.msra.mxu0 0
    %1915 = vmatprep.mubr.bf16.mxu0 0
    %1916 = vmatmul.mubr.bf16.gmra.mrb[0].mxu0 %v1875
    %v1917 = vpop.f32.mrb[0].mxu0
    %v1918 = vadd.f32 0.0, %v1917
    %v1919 = vpop.f32.mrb[0].mxu0
    %v1920 = vpop.f32.mrb[0].mxu0
    %v1921 = vadd.f32 0.0, %v1920
    %v1922 = vpop.f32.mrb[0].mxu0
    %1923 = vmatprep.mubr.bf16.mxu0 0
    %1924 = vmatmul.mubr.bf16.gmra.mrb[0].mxu0 %v1878
    %v1925 = vpop.f32.mrb[0].mxu0
    %v1926 = vadd.f32 0.0, %v1925
    %v1927 = vpop.f32.mrb[0].mxu0
    %v1928 = vpop.f32.mrb[0].mxu0
    %v1929 = vpop.f32.mrb[0].mxu0
    %1930 = vdwg.mxu0
    %v1931 = vadd.f32 %v1694, %v1918
    %v1932 = vadd.f32 %v1697, %v1921
    %v1933 = vadd.f32 %v1702, %v1926
    %1934 = vrot.lane.b32.xlu0 %v1256, 104
    %v1935 = vpop.permute.xlu0 %1934
    %1936 = vrot.lane.b32.xlu0 %v1257, 104
    %v1937 = vpop.permute.xlu0 %1936
    %1938 = vrot.lane.b32.xlu0 %v1258, 104
    %v1939 = vpop.permute.xlu0 %1938
    %1940 = vrot.lane.b32.xlu0 %v1259, 104
    %v1941 = vpop.permute.xlu0 %1940
    %v1943 = vsel %vm1262, %v1935, 0
    %v1946 = vsel %vm1262, %v1937, 0
    %v1949 = vsel %vm1262, %v1939, 0
    %v1952 = vsel %vm1262, %v1941, 0
    %1954 = vmatprep.subr.bf16.mxu0 0
    %1955 = vmatpush1.bf16.xpose.msra.mxu0 %v1949
    %1956 = vmatprep.subr.bf16.mxu0 0
    %1957 = vmatpush1.bf16.xpose.msra.mxu0 %v1952
    %1958 = vmatprep.subr.bf16.mxu0 0
    %1959 = vmatpush1.bf16.xpose.msra.mxu0 0
    %1960 = vmatprep.subr.bf16.mxu0 0
    %1961 = vmatpush1.bf16.xpose.msra.mxu0 0
    %1962 = vmatprep.subr.bf16.mxu0 0
    %1963 = vmatpush1.bf16.xpose.msra.mxu0 0
    %1964 = vmatprep.subr.bf16.mxu0 0
    %1965 = vmatpush1.bf16.xpose.msra.mxu0 0
    %1966 = vmatprep.subr.bf16.mxu0 0
    %1967 = vmatpush1.bf16.xpose.msra.mxu0 0
    %1968 = vmatprep.subr.bf16.mxu0 0
    %1969 = vmatpush1.bf16.xpose.msra.mxu0 0
    %1970 = vmatprep.subr.bf16.mxu0 0
    %1971 = vmatpush1.bf16.xpose.msra.mxu0 0
    %1972 = vmatprep.subr.bf16.mxu0 0
    %1973 = vmatpush1.bf16.xpose.msra.mxu0 0
    %1974 = vmatprep.subr.bf16.mxu0 0
    %1975 = vmatpush1.bf16.xpose.msra.mxu0 0
    %1976 = vmatprep.subr.bf16.mxu0 0
    %1977 = vmatpush1.bf16.xpose.msra.mxu0 0
    %1978 = vmatprep.subr.bf16.mxu0 0
    %1979 = vmatpush1.bf16.xpose.msra.mxu0 0
    %1980 = vmatprep.subr.bf16.mxu0 0
    %1981 = vmatpush1.bf16.xpose.msra.mxu0 0
    %1982 = vmatprep.subr.bf16.mxu0 0
    %1983 = vmatpush1.bf16.xpose.msra.mxu0 0
    %1984 = vmatprep.subr.bf16.mxu0 0
    %1985 = vmatpush1.bf16.xpose.msra.mxu0 0
    %1986 = vmatprep.mubr.bf16.mxu0 0
    %1987 = vmatmul.mubr.bf16.gmra.mrb[0].mxu0 %v1943
    %v1988 = vpop.f32.mrb[0].mxu0
    %v1989 = vadd.f32 %v988, %v1988
    %v1990 = vpop.f32.mrb[0].mxu0
    %v1991 = vpop.f32.mrb[0].mxu0
    %v1992 = vadd.f32 %v989, %v1991
    %v1993 = vpop.f32.mrb[0].mxu0
    %1994 = vmatprep.mubr.bf16.mxu0 0
    %1995 = vmatmul.mubr.bf16.gmra.mrb[0].mxu0 %v1946
    %v1996 = vpop.f32.mrb[0].mxu0
    %v1997 = vadd.f32 %v990, %v1996
    %v1998 = vpop.f32.mrb[0].mxu0
    %v1999 = vpop.f32.mrb[0].mxu0
    %v2000 = vpop.f32.mrb[0].mxu0
    %2001 = vdwg.mxu0
    %v2002 = vsel %vm1323, %v1989, -inf
    %2003 = vmax.xlane.f32.xlu0 %v2002
    %v2004 = vpop.xlane.xlu0 %2003
    %v2005 = vsel %vm1323, %v1992, -inf
    %2006 = vmax.xlane.f32.xlu0 %v2005
    %v2007 = vpop.xlane.xlu0 %2006
    %v2008 = vsel %vm1330, %v1997, -inf
    %2009 = vmax.xlane.f32.xlu0 %v2008
    %v2010 = vpop.xlane.xlu0 %2009
    %v2011 = vsub.f32 %v1989, %v2004
    %v2012 = vsub.f32 %v1992, %v2007
    %v2013 = vsub.f32 %v1997, %v2010
    %v2014 = vmul.f32 %v2011, 1.442695
    %v2015 = vpow.pop %v2014
    %v2016 = vmul.f32 %v2012, 1.442695
    %v2017 = vpow.pop %v2016
    %v2018 = vmul.f32 %v2013, 1.442695
    %v2019 = vpow.pop %v2018
    %v2020 = vsel %vm1323, %v2015, 0.0
    %2021 = vadd.xlane.f32.xlu0 %v2020
    %v2022 = vpop.xlane.xlu0 %2021
    %v2023 = vsel %vm1323, %v2017, 0.0
    %2024 = vadd.xlane.f32.xlu0 %v2023
    %v2025 = vpop.xlane.xlu0 %2024
    %v2026 = vsel %vm1330, %v2019, 0.0
    %2027 = vadd.xlane.f32.xlu0 %v2026
    %v2028 = vpop.xlane.xlu0 %2027
    %v2029 = vrcp.pop %v2022
    %v2030 = vrcp.pop %v2025
    %v2031 = vrcp.pop %v2028
    %v2032 = vmul.f32 %v2015, %v2029
    %v2033 = vmul.f32 %v2017, %v2030
    %v2034 = vmul.f32 %v2019, %v2031
    %v2035 = vpack.c.bf16 %v2033, %v2032
    %v2036 = vpack.c.bf16 %v2034, %v2034
    %2037 = vrot.lane.b32.xlu0 %v1260, 104
    %v2038 = vpop.permute.xlu0 %2037
    %2039 = vrot.lane.b32.xlu0 %v1261, 104
    %v2040 = vpop.permute.xlu0 %2039
    %v2043 = vsel %vm1323, %v2035, 0
    %v2046 = vsel %vm1323, %v2036, 0
    %v2049 = vsel %vm1366, %v2040, 0
    %2051 = vmatprep.subr.bf16.mxu0 0
    %2052 = vmatpush1.bf16.msra.mxu0 %v2038
    %2053 = vmatprep.subr.bf16.mxu0 0
    %2054 = vmatpush1.bf16.msra.mxu0 %v2049
    %2055 = vmatprep.subr.bf16.mxu0 0
    %2056 = vmatpush1.bf16.msra.mxu0 0
    %2057 = vmatprep.subr.bf16.mxu0 0
    %2058 = vmatpush1.bf16.msra.mxu0 0
    %2059 = vmatprep.subr.bf16.mxu0 0
    %2060 = vmatpush1.bf16.msra.mxu0 0
    %2061 = vmatprep.subr.bf16.mxu0 0
    %2062 = vmatpush1.bf16.msra.mxu0 0
    %2063 = vmatprep.subr.bf16.mxu0 0
    %2064 = vmatpush1.bf16.msra.mxu0 0
    %2065 = vmatprep.subr.bf16.mxu0 0
    %2066 = vmatpush1.bf16.msra.mxu0 0
    %2067 = vmatprep.subr.bf16.mxu0 0
    %2068 = vmatpush1.bf16.msra.mxu0 0
    %2069 = vmatprep.subr.bf16.mxu0 0
    %2070 = vmatpush1.bf16.msra.mxu0 0
    %2071 = vmatprep.subr.bf16.mxu0 0
    %2072 = vmatpush1.bf16.msra.mxu0 0
    %2073 = vmatprep.subr.bf16.mxu0 0
    %2074 = vmatpush1.bf16.msra.mxu0 0
    %2075 = vmatprep.subr.bf16.mxu0 0
    %2076 = vmatpush1.bf16.msra.mxu0 0
    %2077 = vmatprep.subr.bf16.mxu0 0
    %2078 = vmatpush1.bf16.msra.mxu0 0
    %2079 = vmatprep.subr.bf16.mxu0 0
    %2080 = vmatpush1.bf16.msra.mxu0 0
    %2081 = vmatprep.subr.bf16.mxu0 0
    %2082 = vmatpush1.bf16.msra.mxu0 0
    %2083 = vmatprep.mubr.bf16.mxu0 0
    %2084 = vmatmul.mubr.bf16.gmra.mrb[0].mxu0 %v2043
    %v2085 = vpop.f32.mrb[0].mxu0
    %v2086 = vadd.f32 0.0, %v2085
    %v2087 = vpop.f32.mrb[0].mxu0
    %v2088 = vpop.f32.mrb[0].mxu0
    %v2089 = vadd.f32 0.0, %v2088
    %v2090 = vpop.f32.mrb[0].mxu0
    %2091 = vmatprep.mubr.bf16.mxu0 0
    %2092 = vmatmul.mubr.bf16.gmra.mrb[0].mxu0 %v2046
    %v2093 = vpop.f32.mrb[0].mxu0
    %v2094 = vadd.f32 0.0, %v2093
    %v2095 = vpop.f32.mrb[0].mxu0
    %v2096 = vpop.f32.mrb[0].mxu0
    %v2097 = vpop.f32.mrb[0].mxu0
    %2098 = vdwg.mxu0
    %v2099 = vpack.c.bf16 %v2089, %v2086
    %v2100 = vpack.c.bf16 %v2094, %v2094
    %v2102 = vsel %vm1262, %v2099, 0
    %v2105 = vsel %vm1262, %v2100, 0
    %v2108 = vsel %vm924, %v1255, 0
    %2110 = vmatprep.subr.bf16.mxu0 0
    %2111 = vmatpush1.bf16.msra.mxu0 %v2108
    %2112 = vmatprep.subr.bf16.mxu0 0
    %2113 = vmatpush1.bf16.msra.mxu0 0
    %2114 = vmatprep.subr.bf16.mxu0 0
    %2115 = vmatpush1.bf16.msra.mxu0 0
    %2116 = vmatprep.subr.bf16.mxu0 0
    %2117 = vmatpush1.bf16.msra.mxu0 0
    %2118 = vmatprep.subr.bf16.mxu0 0
    %2119 = vmatpush1.bf16.msra.mxu0 0
    %2120 = vmatprep.subr.bf16.mxu0 0
    %2121 = vmatpush1.bf16.msra.mxu0 0
    %2122 = vmatprep.subr.bf16.mxu0 0
    %2123 = vmatpush1.bf16.msra.mxu0 0
    %2124 = vmatprep.subr.bf16.mxu0 0
    %2125 = vmatpush1.bf16.msra.mxu0 0
    %2126 = vmatprep.subr.bf16.mxu0 0
    %2127 = vmatpush1.bf16.msra.mxu0 0
    %2128 = vmatprep.subr.bf16.mxu0 0
    %2129 = vmatpush1.bf16.msra.mxu0 0
    %2130 = vmatprep.subr.bf16.mxu0 0
    %2131 = vmatpush1.bf16.msra.mxu0 0
    %2132 = vmatprep.subr.bf16.mxu0 0
    %2133 = vmatpush1.bf16.msra.mxu0 0
    %2134 = vmatprep.subr.bf16.mxu0 0
    %2135 = vmatpush1.bf16.msra.mxu0 0
    %2136 = vmatprep.subr.bf16.mxu0 0
    %2137 = vmatpush1.bf16.msra.mxu0 0
    %2138 = vmatprep.subr.bf16.mxu0 0
    %2139 = vmatpush1.bf16.msra.mxu0 0
    %2140 = vmatprep.subr.bf16.mxu0 0
    %2141 = vmatpush1.bf16.msra.mxu0 0
    %2142 = vmatprep.mubr.bf16.mxu0 0
    %2143 = vmatmul.mubr.bf16.gmra.mrb[0].mxu0 %v2102
    %v2144 = vpop.f32.mrb[0].mxu0
    %v2145 = vadd.f32 0.0, %v2144
    %v2146 = vpop.f32.mrb[0].mxu0
    %v2147 = vpop.f32.mrb[0].mxu0
    %v2148 = vadd.f32 0.0, %v2147
    %v2149 = vpop.f32.mrb[0].mxu0
    %2150 = vmatprep.mubr.bf16.mxu0 0
    %2151 = vmatmul.mubr.bf16.gmra.mrb[0].mxu0 %v2105
    %v2152 = vpop.f32.mrb[0].mxu0
    %v2153 = vadd.f32 0.0, %v2152
    %v2154 = vpop.f32.mrb[0].mxu0
    %v2155 = vpop.f32.mrb[0].mxu0
    %v2156 = vpop.f32.mrb[0].mxu0
    %2157 = vdwg.mxu0
    %v2158 = vadd.f32 %v1931, %v2145
    %v2159 = vadd.f32 %v1932, %v2148
    %v2160 = vadd.f32 %v1933, %v2153
    %v2161 = vadd.f32 %v927, %v2158
    %v2162 = vadd.f32 %v930, %v2159
    %v2163 = vadd.f32 %v921, %v2160
    %v2164 = vld [vmem:[%s13] sm:$0x1]
    %v2166 = vlaneseq
    %v2167 = vshrl.u32 %v2166, 7
    %v2168 = vsub.s32 0, %v2167
    %v2169 = vrot.slane %v2164, %v2168
    %v2171 = vadd.f32 %v2161, %v2169
    %v2172 = vadd.f32 %v2162, %v2169
    %v2173 = vadd.f32 %v2163, %v2169
    %v2174 = vld [vmem:[%s14] sm:$0x1]
    %v2175 = vld [vmem:[%s15] sm:$0x1]
    %v2176 = vsel %vm248, %v2171, 0.0
    %2177 = vadd.xlane.f32.xlu0 %v2176
    %v2178 = vpop.xlane.xlu0 %2177
    %v2179 = vsel %vm248, %v2172, 0.0
    %2180 = vadd.xlane.f32.xlu0 %v2179
    %v2181 = vpop.xlane.xlu0 %2180
    %v2182 = vsel %vm999, %v2173, 0.0
    %2183 = vadd.xlane.f32.xlu0 %v2182
    %v2184 = vpop.xlane.xlu0 %2183
    %v2185 = vmul.f32 %v2178, %v1003
    %v2186 = vmul.f32 %v2181, %v1003
    %v2187 = vmul.f32 %v2184, %v1003
    %v2188 = vsub.f32 %v2171, %v2185
    %v2189 = vsub.f32 %v2172, %v2186
    %v2190 = vsub.f32 %v2173, %v2187
    %v2191 = vmul.f32 %v2188, %v2188
    %v2192 = vmul.f32 %v2189, %v2189
    %v2193 = vmul.f32 %v2190, %v2190
    %v2194 = vsel %vm248, %v2191, 0.0
    %2195 = vadd.xlane.f32.xlu0 %v2194
    %v2196 = vpop.xlane.xlu0 %2195
    %v2197 = vsel %vm248, %v2192, 0.0
    %2198 = vadd.xlane.f32.xlu0 %v2197
    %v2199 = vpop.xlane.xlu0 %2198
    %v2200 = vsel %vm999, %v2193, 0.0
    %2201 = vadd.xlane.f32.xlu0 %v2200
    %v2202 = vpop.xlane.xlu0 %2201
    %v2203 = vmul.f32 %v2196, %v1003
    %v2204 = vmul.f32 %v2199, %v1003
    %v2205 = vmul.f32 %v2202, %v1003
    %v2206 = vadd.f32 %v2203, 1e-05
    %v2207 = vadd.f32 %v2204, 1e-05
    %v2208 = vadd.f32 %v2205, 1e-05
    %v2209 = vrsqrt.pop %v2206
    %v2210 = vrsqrt.pop %v2207
    %v2211 = vrsqrt.pop %v2208
    %v2212 = vmul.f32 %v2188, %v2209
    %v2213 = vmul.f32 %v2189, %v2210
    %v2214 = vmul.f32 %v2190, %v2211
    %v2216 = vlaneseq
    %v2217 = vshrl.u32 %v2216, 7
    %v2218 = vsub.s32 0, %v2217
    %v2219 = vrot.slane %v2174, %v2218
    %v2221 = vmul.f32 %v2212, %v2219
    %v2222 = vmul.f32 %v2213, %v2219
    %v2223 = vmul.f32 %v2214, %v2219
    %v2225 = vlaneseq
    %v2226 = vshrl.u32 %v2225, 7
    %v2227 = vsub.s32 0, %v2226
    %v2228 = vrot.slane %v2175, %v2227
    %v2230 = vadd.f32 %v2221, %v2228
    %v2231 = vadd.f32 %v2222, %v2228
    %v2232 = vadd.f32 %v2223, %v2228
    %v2233 = vpack.c.bf16 %v2231, %v2230
    %v2234 = vpack.c.bf16 %v2232, %v2232
    %v2235 = vld [vmem:[#allocation14] sm:$0xf]
    %v2236 = vld [vmem:[#allocation14 + $0x4] sm:$0xf]
    %v2237 = vld [vmem:[#allocation14 + $0x8] sm:$0xf]
    %v2238 = vld [vmem:[#allocation14 + $0xc] sm:$0xf]
    %v2239 = vld [vmem:[%s17] sm:$0x1]
    %v2241 = vlaneseq
    %v2242 = vshrl.u32 %v2241, 7
    %v2243 = vsub.s32 0, %v2242
    %v2244 = vrot.slane %v2239, %v2243
    %v2250 = vunpack.c.l.b16 %v2235
    %v2251 = vunpack.c.l.b16 %v2236
    %v2252 = vunpack.c.l.b16 %v2237
    %v2253 = vunpack.c.l.b16 %v2238
    %v2254 = vpack.c.b16 %v2251, %v2250
    %v2255 = vpack.c.b16 %v2253, %v2252
    %v2259 = vsel %vm248, %v2233, 0
    %v2262 = vsel %vm248, %v2234, 0
    %2264 = vmatprep.subr.bf16.mxu0 0
    %2265 = vmatpush1.bf16.msra.mxu0 %v2254
    %2266 = vmatprep.subr.bf16.mxu0 0
    %2267 = vmatpush1.bf16.msra.mxu0 %v2255
    %2268 = vmatprep.subr.bf16.mxu0 0
    %2269 = vmatpush1.bf16.msra.mxu0 0
    %2270 = vmatprep.subr.bf16.mxu0 0
    %2271 = vmatpush1.bf16.msra.mxu0 0
    %2272 = vmatprep.subr.bf16.mxu0 0
    %2273 = vmatpush1.bf16.msra.mxu0 0
    %2274 = vmatprep.subr.bf16.mxu0 0
    %2275 = vmatpush1.bf16.msra.mxu0 0
    %2276 = vmatprep.subr.bf16.mxu0 0
    %2277 = vmatpush1.bf16.msra.mxu0 0
    %2278 = vmatprep.subr.bf16.mxu0 0
    %2279 = vmatpush1.bf16.msra.mxu0 0
    %2280 = vmatprep.subr.bf16.mxu0 0
    %2281 = vmatpush1.bf16.msra.mxu0 0
    %2282 = vmatprep.subr.bf16.mxu0 0
    %2283 = vmatpush1.bf16.msra.mxu0 0
    %2284 = vmatprep.subr.bf16.mxu0 0
    %2285 = vmatpush1.bf16.msra.mxu0 0
    %2286 = vmatprep.subr.bf16.mxu0 0
    %2287 = vmatpush1.bf16.msra.mxu0 0
    %2288 = vmatprep.subr.bf16.mxu0 0
    %2289 = vmatpush1.bf16.msra.mxu0 0
    %2290 = vmatprep.subr.bf16.mxu0 0
    %2291 = vmatpush1.bf16.msra.mxu0 0
    %2292 = vmatprep.subr.bf16.mxu0 0
    %2293 = vmatpush1.bf16.msra.mxu0 0
    %2294 = vmatprep.subr.bf16.mxu0 0
    %2295 = vmatpush1.bf16.msra.mxu0 0
    %2296 = vmatprep.mubr.bf16.mxu0 0
    %2297 = vmatmul.mubr.bf16.gmra.mrb[0].mxu0 %v2259
    %v2298 = vpop.f32.mrb[0].mxu0
    %v2299 = vadd.f32 %v2244, %v2298
    %v2300 = vpop.f32.mrb[0].mxu0
    %v2301 = vpop.f32.mrb[0].mxu0
    %v2302 = vadd.f32 %v2244, %v2301
    %v2303 = vpop.f32.mrb[0].mxu0
    %2304 = vmatprep.mubr.bf16.mxu0 0
    %2305 = vmatmul.mubr.bf16.gmra.mrb[0].mxu0 %v2262
    %v2306 = vpop.f32.mrb[0].mxu0
    %v2307 = vadd.f32 %v2244, %v2306
    %v2308 = vpop.f32.mrb[0].mxu0
    %v2309 = vpop.f32.mrb[0].mxu0
    %v2310 = vpop.f32.mrb[0].mxu0
    %2311 = vdwg.mxu0
    %v2312 = vmax.f32 %v2299, 0.0
    %v2313 = vmax.f32 %v2302, 0.0
    %v2314 = vmax.f32 %v2307, 0.0
    %v2315 = vpack.c.bf16 %v2313, %v2312
    %v2316 = vpack.c.bf16 %v2314, %v2314
    %v2317 = vld [vmem:[%s18] sm:$0xf]
    %v2318 = vld [vmem:[%s18 + $0x4] sm:$0xf]
    %v2319 = vld [vmem:[%s18 + $0x8] sm:$0xf]
    %v2320 = vld [vmem:[%s18 + $0xc] sm:$0xf]
    %v2321 = vld [vmem:[%s18 + $0x10] sm:$0xf]
    %v2322 = vld [vmem:[%s18 + $0x14] sm:$0xf]
    %v2323 = vld [vmem:[%s18 + $0x18] sm:$0xf]
    %v2324 = vld [vmem:[%s18 + $0x1c] sm:$0xf]
    %v2325 = vld [vmem:[%s19] sm:$0x1]
    %v2327 = vlaneseq
    %v2328 = vshrl.u32 %v2327, 7
    %v2329 = vsub.s32 0, %v2328
    %v2330 = vrot.slane %v2325, %v2329
    %v2340 = vunpack.c.l.b16 %v2317
    %v2341 = vunpack.c.l.b16 %v2318
    %v2342 = vunpack.c.l.b16 %v2319
    %v2343 = vunpack.c.l.b16 %v2320
    %v2344 = vunpack.c.l.b16 %v2321
    %v2345 = vunpack.c.l.b16 %v2322
    %v2346 = vunpack.c.l.b16 %v2323
    %v2347 = vunpack.c.l.b16 %v2324
    %v2348 = vpack.c.b16 %v2341, %v2340
    %v2349 = vpack.c.b16 %v2343, %v2342
    %v2350 = vpack.c.b16 %v2345, %v2344
    %v2351 = vpack.c.b16 %v2347, %v2346
    %vm2356 = vcmask 523264
    %v2358 = vsel %vm2356, %v2315, 0
    %v2361 = vsel %vm2356, %v2316, 0
    %2363 = vmatprep.subr.bf16.mxu0 0
    %2364 = vmatpush1.bf16.msra.mxu0 %v2348
    %2365 = vmatprep.subr.bf16.mxu0 0
    %2366 = vmatpush1.bf16.msra.mxu0 %v2349
    %2367 = vmatprep.subr.bf16.mxu0 0
    %2368 = vmatpush1.bf16.msra.mxu0 %v2350
    %2369 = vmatprep.subr.bf16.mxu0 0
    %2370 = vmatpush1.bf16.msra.mxu0 %v2351
    %2371 = vmatprep.subr.bf16.mxu0 0
    %2372 = vmatpush1.bf16.msra.mxu0 0
    %2373 = vmatprep.subr.bf16.mxu0 0
    %2374 = vmatpush1.bf16.msra.mxu0 0
    %2375 = vmatprep.subr.bf16.mxu0 0
    %2376 = vmatpush1.bf16.msra.mxu0 0
    %2377 = vmatprep.subr.bf16.mxu0 0
    %2378 = vmatpush1.bf16.msra.mxu0 0
    %2379 = vmatprep.subr.bf16.mxu0 0
    %2380 = vmatpush1.bf16.msra.mxu0 0
    %2381 = vmatprep.subr.bf16.mxu0 0
    %2382 = vmatpush1.bf16.msra.mxu0 0
    %2383 = vmatprep.subr.bf16.mxu0 0
    %2384 = vmatpush1.bf16.msra.mxu0 0
    %2385 = vmatprep.subr.bf16.mxu0 0
    %2386 = vmatpush1.bf16.msra.mxu0 0
    %2387 = vmatprep.subr.bf16.mxu0 0
    %2388 = vmatpush1.bf16.msra.mxu0 0
    %2389 = vmatprep.subr.bf16.mxu0 0
    %2390 = vmatpush1.bf16.msra.mxu0 0
    %2391 = vmatprep.subr.bf16.mxu0 0
    %2392 = vmatpush1.bf16.msra.mxu0 0
    %2393 = vmatprep.subr.bf16.mxu0 0
    %2394 = vmatpush1.bf16.msra.mxu0 0
    %2395 = vmatprep.mubr.bf16.mxu0 0
    %2396 = vmatmul.mubr.bf16.gmra.mrb[0].mxu0 %v2358
    %v2397 = vpop.f32.mrb[0].mxu0
    %v2398 = vadd.f32 %v2330, %v2397
    %v2399 = vpop.f32.mrb[0].mxu0
    %v2400 = vpop.f32.mrb[0].mxu0
    %v2401 = vadd.f32 %v2330, %v2400
    %v2402 = vpop.f32.mrb[0].mxu0
    %2403 = vmatprep.mubr.bf16.mxu0 0
    %2404 = vmatmul.mubr.bf16.gmra.mrb[0].mxu0 %v2361
    %v2405 = vpop.f32.mrb[0].mxu0
    %v2406 = vadd.f32 %v2330, %v2405
    %v2407 = vpop.f32.mrb[0].mxu0
    %v2408 = vpop.f32.mrb[0].mxu0
    %v2409 = vpop.f32.mrb[0].mxu0
    %2410 = vdwg.mxu0
    %v2411 = vadd.f32 %v2171, %v2398
    %v2412 = vadd.f32 %v2172, %v2401
    %v2413 = vadd.f32 %v2173, %v2406
    %s2414 = scalar_lea.vmem [#allocation11], 1
    %v2415 = vld [vmem:[%s2414] sm:$0x1]
    %s2416 = scalar_lea.vmem [#allocation13], 1
    %v2417 = vld [vmem:[%s2416] sm:$0x1]
    %v2418 = vsel %vm248, %v2411, 0.0
    %2419 = vadd.xlane.f32.xlu0 %v2418
    %v2420 = vpop.xlane.xlu0 %2419
    %v2421 = vsel %vm248, %v2412, 0.0
    %2422 = vadd.xlane.f32.xlu0 %v2421
    %v2423 = vpop.xlane.xlu0 %2422
    %v2424 = vsel %vm999, %v2413, 0.0
    %2425 = vadd.xlane.f32.xlu0 %v2424
    %v2426 = vpop.xlane.xlu0 %2425
    %v2427 = vmul.f32 %v2420, %v1003
    %v2428 = vmul.f32 %v2423, %v1003
    %v2429 = vmul.f32 %v2426, %v1003
    %v2430 = vsub.f32 %v2411, %v2427
    %v2431 = vsub.f32 %v2412, %v2428
    %v2432 = vsub.f32 %v2413, %v2429
    %v2433 = vmul.f32 %v2430, %v2430
    %v2434 = vmul.f32 %v2431, %v2431
    %v2435 = vmul.f32 %v2432, %v2432
    %v2436 = vsel %vm248, %v2433, 0.0
    %2437 = vadd.xlane.f32.xlu0 %v2436
    %v2438 = vpop.xlane.xlu0 %2437
    %v2439 = vsel %vm248, %v2434, 0.0
    %2440 = vadd.xlane.f32.xlu0 %v2439
    %v2441 = vpop.xlane.xlu0 %2440
    %v2442 = vsel %vm999, %v2435, 0.0
    %2443 = vadd.xlane.f32.xlu0 %v2442
    %v2444 = vpop.xlane.xlu0 %2443
    %v2445 = vmul.f32 %v2438, %v1003
    %v2446 = vmul.f32 %v2441, %v1003
    %v2447 = vmul.f32 %v2444, %v1003
    %v2448 = vadd.f32 %v2445, 1e-05
    %v2449 = vadd.f32 %v2446, 1e-05
    %v2450 = vadd.f32 %v2447, 1e-05
    %v2451 = vrsqrt.pop %v2448
    %v2452 = vrsqrt.pop %v2449
    %v2453 = vrsqrt.pop %v2450
    %v2454 = vmul.f32 %v2430, %v2451
    %v2455 = vmul.f32 %v2431, %v2452
    %v2456 = vmul.f32 %v2432, %v2453
    %v2458 = vlaneseq
    %v2459 = vshrl.u32 %v2458, 7
    %v2460 = vsub.s32 0, %v2459
    %v2461 = vrot.slane %v2415, %v2460
    %v2463 = vmul.f32 %v2454, %v2461
    %v2464 = vmul.f32 %v2455, %v2461
    %v2465 = vmul.f32 %v2456, %v2461
    %v2467 = vlaneseq
    %v2468 = vshrl.u32 %v2467, 7
    %v2469 = vsub.s32 0, %v2468
    %v2470 = vrot.slane %v2417, %v2469
    %v2472 = vadd.f32 %v2463, %v2470
    %v2473 = vadd.f32 %v2464, %v2470
    %v2474 = vadd.f32 %v2465, %v2470
    %v2475 = vpack.c.bf16 %v2473, %v2472
    %v2476 = vpack.c.bf16 %v2474, %v2474
    %s2477 = scalar_lea.vmem %s9, 16
    %v2478 = vld [vmem:[%s2477] sm:$0xf]
    %v2479 = vld [vmem:[%s2477 + $0x4] sm:$0xf]
    %v2480 = vld [vmem:[%s2477 + $0x8] sm:$0xf]
    %v2481 = vld [vmem:[%s2477 + $0xc] sm:$0xf]
    %v2486 = vunpack.c.l.b16 %v2478
    %v2487 = vunpack.c.l.b16 %v2479
    %v2488 = vunpack.c.l.b16 %v2480
    %v2489 = vunpack.c.l.b16 %v2481
    %v2490 = vpack.c.b16 %v2487, %v2486
    %v2491 = vpack.c.b16 %v2489, %v2488
    %v2495 = vsel %vm248, %v2475, 0
    %v2498 = vsel %vm248, %v2476, 0
    %2500 = vmatprep.subr.bf16.mxu0 0
    %2501 = vmatpush1.bf16.msra.mxu0 %v2490
    %2502 = vmatprep.subr.bf16.mxu0 0
    %2503 = vmatpush1.bf16.msra.mxu0 %v2491
    %2504 = vmatprep.subr.bf16.mxu0 0
    %2505 = vmatpush1.bf16.msra.mxu0 0
    %2506 = vmatprep.subr.bf16.mxu0 0
    %2507 = vmatpush1.bf16.msra.mxu0 0
    %2508 = vmatprep.subr.bf16.mxu0 0
    %2509 = vmatpush1.bf16.msra.mxu0 0
    %2510 = vmatprep.subr.bf16.mxu0 0
    %2511 = vmatpush1.bf16.msra.mxu0 0
    %2512 = vmatprep.subr.bf16.mxu0 0
    %2513 = vmatpush1.bf16.msra.mxu0 0
    %2514 = vmatprep.subr.bf16.mxu0 0
    %2515 = vmatpush1.bf16.msra.mxu0 0
    %2516 = vmatprep.subr.bf16.mxu0 0
    %2517 = vmatpush1.bf16.msra.mxu0 0
    %2518 = vmatprep.subr.bf16.mxu0 0
    %2519 = vmatpush1.bf16.msra.mxu0 0
    %2520 = vmatprep.subr.bf16.mxu0 0
    %2521 = vmatpush1.bf16.msra.mxu0 0
    %2522 = vmatprep.subr.bf16.mxu0 0
    %2523 = vmatpush1.bf16.msra.mxu0 0
    %2524 = vmatprep.subr.bf16.mxu0 0
    %2525 = vmatpush1.bf16.msra.mxu0 0
    %2526 = vmatprep.subr.bf16.mxu0 0
    %2527 = vmatpush1.bf16.msra.mxu0 0
    %2528 = vmatprep.subr.bf16.mxu0 0
    %2529 = vmatpush1.bf16.msra.mxu0 0
    %2530 = vmatprep.subr.bf16.mxu0 0
    %2531 = vmatpush1.bf16.msra.mxu0 0
    %2532 = vmatprep.mubr.bf16.mxu0 0
    %2533 = vmatmul.mubr.bf16.gmra.mrb[0].mxu0 %v2495
    %v2534 = vpop.f32.mrb[0].mxu0
    %v2535 = vadd.f32 0.0, %v2534
    %v2536 = vpop.f32.mrb[0].mxu0
    %v2537 = vpop.f32.mrb[0].mxu0
    %v2538 = vadd.f32 0.0, %v2537
    %v2539 = vpop.f32.mrb[0].mxu0
    %2540 = vmatprep.mubr.bf16.mxu0 0
    %2541 = vmatmul.mubr.bf16.gmra.mrb[0].mxu0 %v2498
    %v2542 = vpop.f32.mrb[0].mxu0
    %v2543 = vadd.f32 0.0, %v2542
    %v2544 = vpop.f32.mrb[0].mxu0
    %v2545 = vpop.f32.mrb[0].mxu0
    %v2546 = vpop.f32.mrb[0].mxu0
    %2547 = vdwg.mxu0
    %s2548 = scalar_lea.vmem %s10, 16
    %v2549 = vld [vmem:[%s2548] sm:$0xf]
    %v2550 = vld [vmem:[%s2548 + $0x4] sm:$0xf]
    %v2551 = vld [vmem:[%s2548 + $0x8] sm:$0xf]
    %v2552 = vld [vmem:[%s2548 + $0xc] sm:$0xf]
    %v2557 = vunpack.c.l.b16 %v2549
    %v2558 = vunpack.c.l.b16 %v2550
    %v2559 = vunpack.c.l.b16 %v2551
    %v2560 = vunpack.c.l.b16 %v2552
    %v2561 = vpack.c.b16 %v2558, %v2557
    %v2562 = vpack.c.b16 %v2560, %v2559
    %2565 = vmatprep.subr.bf16.mxu0 0
    %2566 = vmatpush1.bf16.msra.mxu0 %v2561
    %2567 = vmatprep.subr.bf16.mxu0 0
    %2568 = vmatpush1.bf16.msra.mxu0 %v2562
    %2569 = vmatprep.subr.bf16.mxu0 0
    %2570 = vmatpush1.bf16.msra.mxu0 0
    %2571 = vmatprep.subr.bf16.mxu0 0
    %2572 = vmatpush1.bf16.msra.mxu0 0
    %2573 = vmatprep.subr.bf16.mxu0 0
    %2574 = vmatpush1.bf16.msra.mxu0 0
    %2575 = vmatprep.subr.bf16.mxu0 0
    %2576 = vmatpush1.bf16.msra.mxu0 0
    %2577 = vmatprep.subr.bf16.mxu0 0
    %2578 = vmatpush1.bf16.msra.mxu0 0
    %2579 = vmatprep.subr.bf16.mxu0 0
    %2580 = vmatpush1.bf16.msra.mxu0 0
    %2581 = vmatprep.subr.bf16.mxu0 0
    %2582 = vmatpush1.bf16.msra.mxu0 0
    %2583 = vmatprep.subr.bf16.mxu0 0
    %2584 = vmatpush1.bf16.msra.mxu0 0
    %2585 = vmatprep.subr.bf16.mxu0 0
    %2586 = vmatpush1.bf16.msra.mxu0 0
    %2587 = vmatprep.subr.bf16.mxu0 0
    %2588 = vmatpush1.bf16.msra.mxu0 0
    %2589 = vmatprep.subr.bf16.mxu0 0
    %2590 = vmatpush1.bf16.msra.mxu0 0
    %2591 = vmatprep.subr.bf16.mxu0 0
    %2592 = vmatpush1.bf16.msra.mxu0 0
    %2593 = vmatprep.subr.bf16.mxu0 0
    %2594 = vmatpush1.bf16.msra.mxu0 0
    %2595 = vmatprep.subr.bf16.mxu0 0
    %2596 = vmatpush1.bf16.msra.mxu0 0
    %2597 = vmatprep.mubr.bf16.mxu0 0
    %2598 = vmatmul.mubr.bf16.gmra.mrb[0].mxu0 %v2495
    %v2599 = vpop.f32.mrb[0].mxu0
    %v2600 = vadd.f32 0.0, %v2599
    %v2601 = vpop.f32.mrb[0].mxu0
    %v2602 = vpop.f32.mrb[0].mxu0
    %v2603 = vadd.f32 0.0, %v2602
    %v2604 = vpop.f32.mrb[0].mxu0
    %2605 = vmatprep.mubr.bf16.mxu0 0
    %2606 = vmatmul.mubr.bf16.gmra.mrb[0].mxu0 %v2498
    %v2607 = vpop.f32.mrb[0].mxu0
    %v2608 = vadd.f32 0.0, %v2607
    %v2609 = vpop.f32.mrb[0].mxu0
    %v2610 = vpop.f32.mrb[0].mxu0
    %v2611 = vpop.f32.mrb[0].mxu0
    %2612 = vdwg.mxu0
    %s2613 = scalar_lea.vmem %s11, 16
    %v2614 = vld [vmem:[%s2613] sm:$0xf]
    %v2615 = vld [vmem:[%s2613 + $0x4] sm:$0xf]
    %v2616 = vld [vmem:[%s2613 + $0x8] sm:$0xf]
    %v2617 = vld [vmem:[%s2613 + $0xc] sm:$0xf]
    %v2622 = vunpack.c.l.b16 %v2614
    %v2623 = vunpack.c.l.b16 %v2615
    %v2624 = vunpack.c.l.b16 %v2616
    %v2625 = vunpack.c.l.b16 %v2617
    %v2626 = vpack.c.b16 %v2623, %v2622
    %v2627 = vpack.c.b16 %v2625, %v2624
    %2630 = vmatprep.subr.bf16.mxu0 0
    %2631 = vmatpush1.bf16.msra.mxu0 %v2626
    %2632 = vmatprep.subr.bf16.mxu0 0
    %2633 = vmatpush1.bf16.msra.mxu0 %v2627
    %2634 = vmatprep.subr.bf16.mxu0 0
    %2635 = vmatpush1.bf16.msra.mxu0 0
    %2636 = vmatprep.subr.bf16.mxu0 0
    %2637 = vmatpush1.bf16.msra.mxu0 0
    %2638 = vmatprep.subr.bf16.mxu0 0
    %2639 = vmatpush1.bf16.msra.mxu0 0
    %2640 = vmatprep.subr.bf16.mxu0 0
    %2641 = vmatpush1.bf16.msra.mxu0 0
    %2642 = vmatprep.subr.bf16.mxu0 0
    %2643 = vmatpush1.bf16.msra.mxu0 0
    %2644 = vmatprep.subr.bf16.mxu0 0
    %2645 = vmatpush1.bf16.msra.mxu0 0
    %2646 = vmatprep.subr.bf16.mxu0 0
    %2647 = vmatpush1.bf16.msra.mxu0 0
    %2648 = vmatprep.subr.bf16.mxu0 0
    %2649 = vmatpush1.bf16.msra.mxu0 0
    %2650 = vmatprep.subr.bf16.mxu0 0
    %2651 = vmatpush1.bf16.msra.mxu0 0
    %2652 = vmatprep.subr.bf16.mxu0 0
    %2653 = vmatpush1.bf16.msra.mxu0 0
    %2654 = vmatprep.subr.bf16.mxu0 0
    %2655 = vmatpush1.bf16.msra.mxu0 0
    %2656 = vmatprep.subr.bf16.mxu0 0
    %2657 = vmatpush1.bf16.msra.mxu0 0
    %2658 = vmatprep.subr.bf16.mxu0 0
    %2659 = vmatpush1.bf16.msra.mxu0 0
    %2660 = vmatprep.subr.bf16.mxu0 0
    %2661 = vmatpush1.bf16.msra.mxu0 0
    %2662 = vmatprep.mubr.bf16.mxu0 0
    %2663 = vmatmul.mubr.bf16.gmra.mrb[0].mxu0 %v2495
    %v2664 = vpop.f32.mrb[0].mxu0
    %v2665 = vadd.f32 0.0, %v2664
    %v2666 = vpop.f32.mrb[0].mxu0
    %v2667 = vpop.f32.mrb[0].mxu0
    %v2668 = vadd.f32 0.0, %v2667
    %v2669 = vpop.f32.mrb[0].mxu0
    %2670 = vmatprep.mubr.bf16.mxu0 0
    %2671 = vmatmul.mubr.bf16.gmra.mrb[0].mxu0 %v2498
    %v2672 = vpop.f32.mrb[0].mxu0
    %v2673 = vadd.f32 0.0, %v2672
    %v2674 = vpop.f32.mrb[0].mxu0
    %v2675 = vpop.f32.mrb[0].mxu0
    %v2676 = vpop.f32.mrb[0].mxu0
    %2677 = vdwg.mxu0
    %s2678 = scalar_lea.vmem %s12, 16
    %v2679 = vld [vmem:[%s2678] sm:$0xf]
    %v2680 = vld [vmem:[%s2678 + $0x4] sm:$0xf]
    %v2681 = vld [vmem:[%s2678 + $0x8] sm:$0xf]
    %v2682 = vld [vmem:[%s2678 + $0xc] sm:$0xf]
    %v2683 = vpack.c.bf16 %v2538, %v2535
    %v2684 = vpack.c.bf16 %v2543, %v2543
    %v2685 = vpack.c.bf16 %v2603, %v2600
    %v2686 = vpack.c.bf16 %v2608, %v2608
    %v2687 = vpack.c.bf16 %v2668, %v2665
    %v2688 = vpack.c.bf16 %v2673, %v2673
    %v2690 = vsel %vm1262, %v2683, 0
    %v2693 = vsel %vm1262, %v2684, 0
    %v2696 = vsel %vm1262, %v2685, 0
    %v2699 = vsel %vm1262, %v2686, 0
    %2701 = vmatprep.subr.bf16.mxu0 0
    %2702 = vmatpush1.bf16.xpose.msra.mxu0 %v2696
    %2703 = vmatprep.subr.bf16.mxu0 0
    %2704 = vmatpush1.bf16.xpose.msra.mxu0 %v2699
    %2705 = vmatprep.subr.bf16.mxu0 0
    %2706 = vmatpush1.bf16.xpose.msra.mxu0 0
    %2707 = vmatprep.subr.bf16.mxu0 0
    %2708 = vmatpush1.bf16.xpose.msra.mxu0 0
    %2709 = vmatprep.subr.bf16.mxu0 0
    %2710 = vmatpush1.bf16.xpose.msra.mxu0 0
    %2711 = vmatprep.subr.bf16.mxu0 0
    %2712 = vmatpush1.bf16.xpose.msra.mxu0 0
    %2713 = vmatprep.subr.bf16.mxu0 0
    %2714 = vmatpush1.bf16.xpose.msra.mxu0 0
    %2715 = vmatprep.subr.bf16.mxu0 0
    %2716 = vmatpush1.bf16.xpose.msra.mxu0 0
    %2717 = vmatprep.subr.bf16.mxu0 0
    %2718 = vmatpush1.bf16.xpose.msra.mxu0 0
    %2719 = vmatprep.subr.bf16.mxu0 0
    %2720 = vmatpush1.bf16.xpose.msra.mxu0 0
    %2721 = vmatprep.subr.bf16.mxu0 0
    %2722 = vmatpush1.bf16.xpose.msra.mxu0 0
    %2723 = vmatprep.subr.bf16.mxu0 0
    %2724 = vmatpush1.bf16.xpose.msra.mxu0 0
    %2725 = vmatprep.subr.bf16.mxu0 0
    %2726 = vmatpush1.bf16.xpose.msra.mxu0 0
    %2727 = vmatprep.subr.bf16.mxu0 0
    %2728 = vmatpush1.bf16.xpose.msra.mxu0 0
    %2729 = vmatprep.subr.bf16.mxu0 0
    %2730 = vmatpush1.bf16.xpose.msra.mxu0 0
    %2731 = vmatprep.subr.bf16.mxu0 0
    %2732 = vmatpush1.bf16.xpose.msra.mxu0 0
    %2733 = vmatprep.mubr.bf16.mxu0 0
    %2734 = vmatmul.mubr.bf16.gmra.mrb[0].mxu0 %v2690
    %v2735 = vpop.f32.mrb[0].mxu0
    %v2736 = vadd.f32 %v988, %v2735
    %v2737 = vpop.f32.mrb[0].mxu0
    %v2738 = vpop.f32.mrb[0].mxu0
    %v2739 = vadd.f32 %v989, %v2738
    %v2740 = vpop.f32.mrb[0].mxu0
    %2741 = vmatprep.mubr.bf16.mxu0 0
    %2742 = vmatmul.mubr.bf16.gmra.mrb[0].mxu0 %v2693
    %v2743 = vpop.f32.mrb[0].mxu0
    %v2744 = vadd.f32 %v990, %v2743
    %v2745 = vpop.f32.mrb[0].mxu0
    %v2746 = vpop.f32.mrb[0].mxu0
    %v2747 = vpop.f32.mrb[0].mxu0
    %2748 = vdwg.mxu0
    %v2749 = vsel %vm1323, %v2736, -inf
    %2750 = vmax.xlane.f32.xlu0 %v2749
    %v2751 = vpop.xlane.xlu0 %2750
    %v2752 = vsel %vm1323, %v2739, -inf
    %2753 = vmax.xlane.f32.xlu0 %v2752
    %v2754 = vpop.xlane.xlu0 %2753
    %v2755 = vsel %vm1330, %v2744, -inf
    %2756 = vmax.xlane.f32.xlu0 %v2755
    %v2757 = vpop.xlane.xlu0 %2756
    %v2758 = vsub.f32 %v2736, %v2751
    %v2759 = vsub.f32 %v2739, %v2754
    %v2760 = vsub.f32 %v2744, %v2757
    %v2761 = vmul.f32 %v2758, 1.442695
    %v2762 = vpow.pop %v2761
    %v2763 = vmul.f32 %v2759, 1.442695
    %v2764 = vpow.pop %v2763
    %v2765 = vmul.f32 %v2760, 1.442695
    %v2766 = vpow.pop %v2765
    %v2767 = vsel %vm1323, %v2762, 0.0
    %2768 = vadd.xlane.f32.xlu0 %v2767
    %v2769 = vpop.xlane.xlu0 %2768
    %v2770 = vsel %vm1323, %v2764, 0.0
    %2771 = vadd.xlane.f32.xlu0 %v2770
    %v2772 = vpop.xlane.xlu0 %2771
    %v2773 = vsel %vm1330, %v2766, 0.0
    %2774 = vadd.xlane.f32.xlu0 %v2773
    %v2775 = vpop.xlane.xlu0 %2774
    %v2776 = vrcp.pop %v2769
    %v2777 = vrcp.pop %v2772
    %v2778 = vrcp.pop %v2775
    %v2779 = vmul.f32 %v2762, %v2776
    %v2780 = vmul.f32 %v2764, %v2777
    %v2781 = vmul.f32 %v2766, %v2778
    %v2782 = vpack.c.bf16 %v2780, %v2779
    %v2783 = vpack.c.bf16 %v2781, %v2781
    %v2785 = vsel %vm1323, %v2782, 0
    %v2788 = vsel %vm1323, %v2783, 0
    %v2791 = vsel %vm1366, %v2688, 0
    %2793 = vmatprep.subr.bf16.mxu0 0
    %2794 = vmatpush1.bf16.msra.mxu0 %v2687
    %2795 = vmatprep.subr.bf16.mxu0 0
    %2796 = vmatpush1.bf16.msra.mxu0 %v2791
    %2797 = vmatprep.subr.bf16.mxu0 0
    %2798 = vmatpush1.bf16.msra.mxu0 0
    %2799 = vmatprep.subr.bf16.mxu0 0
    %2800 = vmatpush1.bf16.msra.mxu0 0
    %2801 = vmatprep.subr.bf16.mxu0 0
    %2802 = vmatpush1.bf16.msra.mxu0 0
    %2803 = vmatprep.subr.bf16.mxu0 0
    %2804 = vmatpush1.bf16.msra.mxu0 0
    %2805 = vmatprep.subr.bf16.mxu0 0
    %2806 = vmatpush1.bf16.msra.mxu0 0
    %2807 = vmatprep.subr.bf16.mxu0 0
    %2808 = vmatpush1.bf16.msra.mxu0 0
    %2809 = vmatprep.subr.bf16.mxu0 0
    %2810 = vmatpush1.bf16.msra.mxu0 0
    %2811 = vmatprep.subr.bf16.mxu0 0
    %2812 = vmatpush1.bf16.msra.mxu0 0
    %2813 = vmatprep.subr.bf16.mxu0 0
    %2814 = vmatpush1.bf16.msra.mxu0 0
    %2815 = vmatprep.subr.bf16.mxu0 0
    %2816 = vmatpush1.bf16.msra.mxu0 0
    %2817 = vmatprep.subr.bf16.mxu0 0
    %2818 = vmatpush1.bf16.msra.mxu0 0
    %2819 = vmatprep.subr.bf16.mxu0 0
    %2820 = vmatpush1.bf16.msra.mxu0 0
    %2821 = vmatprep.subr.bf16.mxu0 0
    %2822 = vmatpush1.bf16.msra.mxu0 0
    %2823 = vmatprep.subr.bf16.mxu0 0
    %2824 = vmatpush1.bf16.msra.mxu0 0
    %2825 = vmatprep.mubr.bf16.mxu0 0
    %2826 = vmatmul.mubr.bf16.gmra.mrb[0].mxu0 %v2785
    %v2827 = vpop.f32.mrb[0].mxu0
    %v2828 = vadd.f32 0.0, %v2827
    %v2829 = vpop.f32.mrb[0].mxu0
    %v2830 = vpop.f32.mrb[0].mxu0
    %v2831 = vadd.f32 0.0, %v2830
    %v2832 = vpop.f32.mrb[0].mxu0
    %2833 = vmatprep.mubr.bf16.mxu0 0
    %2834 = vmatmul.mubr.bf16.gmra.mrb[0].mxu0 %v2788
    %v2835 = vpop.f32.mrb[0].mxu0
    %v2836 = vadd.f32 0.0, %v2835
    %v2837 = vpop.f32.mrb[0].mxu0
    %v2838 = vpop.f32.mrb[0].mxu0
    %v2839 = vpop.f32.mrb[0].mxu0
    %2840 = vdwg.mxu0
    %v2841 = vpack.c.bf16 %v2831, %v2828
    %v2842 = vpack.c.bf16 %v2836, %v2836
    %2845 = vrot.lane.b32.xlu0 %v2683, 120
    %v2846 = vpop.permute.xlu0 %2845
    %2847 = vrot.lane.b32.xlu0 %v2684, 120
    %v2848 = vpop.permute.xlu0 %2847
    %2851 = vrot.lane.b32.xlu0 %v2685, 120
    %v2852 = vpop.permute.xlu0 %2851
    %2853 = vrot.lane.b32.xlu0 %v2686, 120
    %v2854 = vpop.permute.xlu0 %2853
    %v2856 = vsel %vm1262, %v2846, 0
    %v2859 = vsel %vm1262, %v2848, 0
    %v2862 = vsel %vm1262, %v2852, 0
    %v2865 = vsel %vm1262, %v2854, 0
    %2867 = vmatprep.subr.bf16.mxu0 0
    %2868 = vmatpush1.bf16.xpose.msra.mxu0 %v2862
    %2869 = vmatprep.subr.bf16.mxu0 0
    %2870 = vmatpush1.bf16.xpose.msra.mxu0 %v2865
    %2871 = vmatprep.subr.bf16.mxu0 0
    %2872 = vmatpush1.bf16.xpose.msra.mxu0 0
    %2873 = vmatprep.subr.bf16.mxu0 0
    %2874 = vmatpush1.bf16.xpose.msra.mxu0 0
    %2875 = vmatprep.subr.bf16.mxu0 0
    %2876 = vmatpush1.bf16.xpose.msra.mxu0 0
    %2877 = vmatprep.subr.bf16.mxu0 0
    %2878 = vmatpush1.bf16.xpose.msra.mxu0 0
    %2879 = vmatprep.subr.bf16.mxu0 0
    %2880 = vmatpush1.bf16.xpose.msra.mxu0 0
    %2881 = vmatprep.subr.bf16.mxu0 0
    %2882 = vmatpush1.bf16.xpose.msra.mxu0 0
    %2883 = vmatprep.subr.bf16.mxu0 0
    %2884 = vmatpush1.bf16.xpose.msra.mxu0 0
    %2885 = vmatprep.subr.bf16.mxu0 0
    %2886 = vmatpush1.bf16.xpose.msra.mxu0 0
    %2887 = vmatprep.subr.bf16.mxu0 0
    %2888 = vmatpush1.bf16.xpose.msra.mxu0 0
    %2889 = vmatprep.subr.bf16.mxu0 0
    %2890 = vmatpush1.bf16.xpose.msra.mxu0 0
    %2891 = vmatprep.subr.bf16.mxu0 0
    %2892 = vmatpush1.bf16.xpose.msra.mxu0 0
    %2893 = vmatprep.subr.bf16.mxu0 0
    %2894 = vmatpush1.bf16.xpose.msra.mxu0 0
    %2895 = vmatprep.subr.bf16.mxu0 0
    %2896 = vmatpush1.bf16.xpose.msra.mxu0 0
    %2897 = vmatprep.subr.bf16.mxu0 0
    %2898 = vmatpush1.bf16.xpose.msra.mxu0 0
    %2899 = vmatprep.mubr.bf16.mxu0 0
    %2900 = vmatmul.mubr.bf16.gmra.mrb[0].mxu0 %v2856
    %v2901 = vpop.f32.mrb[0].mxu0
    %v2902 = vadd.f32 %v988, %v2901
    %v2903 = vpop.f32.mrb[0].mxu0
    %v2904 = vpop.f32.mrb[0].mxu0
    %v2905 = vadd.f32 %v989, %v2904
    %v2906 = vpop.f32.mrb[0].mxu0
    %2907 = vmatprep.mubr.bf16.mxu0 0
    %2908 = vmatmul.mubr.bf16.gmra.mrb[0].mxu0 %v2859
    %v2909 = vpop.f32.mrb[0].mxu0
    %v2910 = vadd.f32 %v990, %v2909
    %v2911 = vpop.f32.mrb[0].mxu0
    %v2912 = vpop.f32.mrb[0].mxu0
    %v2913 = vpop.f32.mrb[0].mxu0
    %2914 = vdwg.mxu0
    %v2915 = vsel %vm1323, %v2902, -inf
    %2916 = vmax.xlane.f32.xlu0 %v2915
    %v2917 = vpop.xlane.xlu0 %2916
    %v2918 = vsel %vm1323, %v2905, -inf
    %2919 = vmax.xlane.f32.xlu0 %v2918
    %v2920 = vpop.xlane.xlu0 %2919
    %v2921 = vsel %vm1330, %v2910, -inf
    %2922 = vmax.xlane.f32.xlu0 %v2921
    %v2923 = vpop.xlane.xlu0 %2922
    %v2924 = vsub.f32 %v2902, %v2917
    %v2925 = vsub.f32 %v2905, %v2920
    %v2926 = vsub.f32 %v2910, %v2923
    %v2927 = vmul.f32 %v2924, 1.442695
    %v2928 = vpow.pop %v2927
    %v2929 = vmul.f32 %v2925, 1.442695
    %v2930 = vpow.pop %v2929
    %v2931 = vmul.f32 %v2926, 1.442695
    %v2932 = vpow.pop %v2931
    %v2933 = vsel %vm1323, %v2928, 0.0
    %2934 = vadd.xlane.f32.xlu0 %v2933
    %v2935 = vpop.xlane.xlu0 %2934
    %v2936 = vsel %vm1323, %v2930, 0.0
    %2937 = vadd.xlane.f32.xlu0 %v2936
    %v2938 = vpop.xlane.xlu0 %2937
    %v2939 = vsel %vm1330, %v2932, 0.0
    %2940 = vadd.xlane.f32.xlu0 %v2939
    %v2941 = vpop.xlane.xlu0 %2940
    %v2942 = vrcp.pop %v2935
    %v2943 = vrcp.pop %v2938
    %v2944 = vrcp.pop %v2941
    %v2945 = vmul.f32 %v2928, %v2942
    %v2946 = vmul.f32 %v2930, %v2943
    %v2947 = vmul.f32 %v2932, %v2944
    %v2948 = vpack.c.bf16 %v2946, %v2945
    %v2949 = vpack.c.bf16 %v2947, %v2947
    %2952 = vrot.lane.b32.xlu0 %v2687, 120
    %v2953 = vpop.permute.xlu0 %2952
    %2954 = vrot.lane.b32.xlu0 %v2688, 120
    %v2955 = vpop.permute.xlu0 %2954
    %v2958 = vsel %vm1323, %v2948, 0
    %v2961 = vsel %vm1323, %v2949, 0
    %v2964 = vsel %vm1366, %v2955, 0
    %2966 = vmatprep.subr.bf16.mxu0 0
    %2967 = vmatpush1.bf16.msra.mxu0 %v2953
    %2968 = vmatprep.subr.bf16.mxu0 0
    %2969 = vmatpush1.bf16.msra.mxu0 %v2964
    %2970 = vmatprep.subr.bf16.mxu0 0
    %2971 = vmatpush1.bf16.msra.mxu0 0
    %2972 = vmatprep.subr.bf16.mxu0 0
    %2973 = vmatpush1.bf16.msra.mxu0 0
    %2974 = vmatprep.subr.bf16.mxu0 0
    %2975 = vmatpush1.bf16.msra.mxu0 0
    %2976 = vmatprep.subr.bf16.mxu0 0
    %2977 = vmatpush1.bf16.msra.mxu0 0
    %2978 = vmatprep.subr.bf16.mxu0 0
    %2979 = vmatpush1.bf16.msra.mxu0 0
    %2980 = vmatprep.subr.bf16.mxu0 0
    %2981 = vmatpush1.bf16.msra.mxu0 0
    %2982 = vmatprep.subr.bf16.mxu0 0
    %2983 = vmatpush1.bf16.msra.mxu0 0
    %2984 = vmatprep.subr.bf16.mxu0 0
    %2985 = vmatpush1.bf16.msra.mxu0 0
    %2986 = vmatprep.subr.bf16.mxu0 0
    %2987 = vmatpush1.bf16.msra.mxu0 0
    %2988 = vmatprep.subr.bf16.mxu0 0
    %2989 = vmatpush1.bf16.msra.mxu0 0
    %2990 = vmatprep.subr.bf16.mxu0 0
    %2991 = vmatpush1.bf16.msra.mxu0 0
    %2992 = vmatprep.subr.bf16.mxu0 0
    %2993 = vmatpush1.bf16.msra.mxu0 0
    %2994 = vmatprep.subr.bf16.mxu0 0
    %2995 = vmatpush1.bf16.msra.mxu0 0
    %2996 = vmatprep.subr.bf16.mxu0 0
    %2997 = vmatpush1.bf16.msra.mxu0 0
    %2998 = vmatprep.mubr.bf16.mxu0 0
    %2999 = vmatmul.mubr.bf16.gmra.mrb[0].mxu0 %v2958
    %v3000 = vpop.f32.mrb[0].mxu0
    %v3001 = vadd.f32 0.0, %v3000
    %v3002 = vpop.f32.mrb[0].mxu0
    %v3003 = vpop.f32.mrb[0].mxu0
    %v3004 = vadd.f32 0.0, %v3003
    %v3005 = vpop.f32.mrb[0].mxu0
    %3006 = vmatprep.mubr.bf16.mxu0 0
    %3007 = vmatmul.mubr.bf16.gmra.mrb[0].mxu0 %v2961
    %v3008 = vpop.f32.mrb[0].mxu0
    %v3009 = vadd.f32 0.0, %v3008
    %v3010 = vpop.f32.mrb[0].mxu0
    %v3011 = vpop.f32.mrb[0].mxu0
    %v3012 = vpop.f32.mrb[0].mxu0
    %3013 = vdwg.mxu0
    %v3014 = vpack.c.bf16 %v3004, %v3001
    %v3015 = vpack.c.bf16 %v3009, %v3009
    %v3017 = vsel %vm1262, %v3014, 0
    %v3020 = vsel %vm1262, %v3015, 0
    %v3023 = vsel %vm924, %v2680, 0
    %3025 = vmatprep.subr.bf16.mxu0 0
    %3026 = vmatpush1.bf16.msra.mxu0 %v3023
    %3027 = vmatprep.subr.bf16.mxu0 0
    %3028 = vmatpush1.bf16.msra.mxu0 0
    %3029 = vmatprep.subr.bf16.mxu0 0
    %3030 = vmatpush1.bf16.msra.mxu0 0
    %3031 = vmatprep.subr.bf16.mxu0 0
    %3032 = vmatpush1.bf16.msra.mxu0 0
    %3033 = vmatprep.subr.bf16.mxu0 0
    %3034 = vmatpush1.bf16.msra.mxu0 0
    %3035 = vmatprep.subr.bf16.mxu0 0
    %3036 = vmatpush1.bf16.msra.mxu0 0
    %3037 = vmatprep.subr.bf16.mxu0 0
    %3038 = vmatpush1.bf16.msra.mxu0 0
    %3039 = vmatprep.subr.bf16.mxu0 0
    %3040 = vmatpush1.bf16.msra.mxu0 0
    %3041 = vmatprep.subr.bf16.mxu0 0
    %3042 = vmatpush1.bf16.msra.mxu0 0
    %3043 = vmatprep.subr.bf16.mxu0 0
    %3044 = vmatpush1.bf16.msra.mxu0 0
    %3045 = vmatprep.subr.bf16.mxu0 0
    %3046 = vmatpush1.bf16.msra.mxu0 0
    %3047 = vmatprep.subr.bf16.mxu0 0
    %3048 = vmatpush1.bf16.msra.mxu0 0
    %3049 = vmatprep.subr.bf16.mxu0 0
    %3050 = vmatpush1.bf16.msra.mxu0 0
    %3051 = vmatprep.subr.bf16.mxu0 0
    %3052 = vmatpush1.bf16.msra.mxu0 0
    %3053 = vmatprep.subr.bf16.mxu0 0
    %3054 = vmatpush1.bf16.msra.mxu0 0
    %3055 = vmatprep.subr.bf16.mxu0 0
    %3056 = vmatpush1.bf16.msra.mxu0 0
    %3057 = vmatprep.mubr.bf16.mxu0 0
    %3058 = vmatmul.mubr.bf16.gmra.mrb[0].mxu0 %v3017
    %v3059 = vpop.f32.mrb[0].mxu0
    %v3060 = vadd.f32 0.0, %v3059
    %v3061 = vpop.f32.mrb[0].mxu0
    %v3062 = vpop.f32.mrb[0].mxu0
    %v3063 = vadd.f32 0.0, %v3062
    %v3064 = vpop.f32.mrb[0].mxu0
    %3065 = vmatprep.mubr.bf16.mxu0 0
    %3066 = vmatmul.mubr.bf16.gmra.mrb[0].mxu0 %v3020
    %v3067 = vpop.f32.mrb[0].mxu0
    %v3068 = vadd.f32 0.0, %v3067
    %v3069 = vpop.f32.mrb[0].mxu0
    %v3070 = vpop.f32.mrb[0].mxu0
    %v3071 = vpop.f32.mrb[0].mxu0
    %3072 = vdwg.mxu0
    %v3074 = vsel %vm1262, %v2841, 0
    %v3077 = vsel %vm1262, %v2842, 0
    %v3080 = vsel %vm924, %v2679, 0
    %3082 = vmatprep.subr.bf16.mxu0 0
    %3083 = vmatpush1.bf16.msra.mxu0 %v3080
    %3084 = vmatprep.subr.bf16.mxu0 0
    %3085 = vmatpush1.bf16.msra.mxu0 0
    %3086 = vmatprep.subr.bf16.mxu0 0
    %3087 = vmatpush1.bf16.msra.mxu0 0
    %3088 = vmatprep.subr.bf16.mxu0 0
    %3089 = vmatpush1.bf16.msra.mxu0 0
    %3090 = vmatprep.subr.bf16.mxu0 0
    %3091 = vmatpush1.bf16.msra.mxu0 0
    %3092 = vmatprep.subr.bf16.mxu0 0
    %3093 = vmatpush1.bf16.msra.mxu0 0
    %3094 = vmatprep.subr.bf16.mxu0 0
    %3095 = vmatpush1.bf16.msra.mxu0 0
    %3096 = vmatprep.subr.bf16.mxu0 0
    %3097 = vmatpush1.bf16.msra.mxu0 0
    %3098 = vmatprep.subr.bf16.mxu0 0
    %3099 = vmatpush1.bf16.msra.mxu0 0
    %3100 = vmatprep.subr.bf16.mxu0 0
    %3101 = vmatpush1.bf16.msra.mxu0 0
    %3102 = vmatprep.subr.bf16.mxu0 0
    %3103 = vmatpush1.bf16.msra.mxu0 0
    %3104 = vmatprep.subr.bf16.mxu0 0
    %3105 = vmatpush1.bf16.msra.mxu0 0
    %3106 = vmatprep.subr.bf16.mxu0 0
    %3107 = vmatpush1.bf16.msra.mxu0 0
    %3108 = vmatprep.subr.bf16.mxu0 0
    %3109 = vmatpush1.bf16.msra.mxu0 0
    %3110 = vmatprep.subr.bf16.mxu0 0
    %3111 = vmatpush1.bf16.msra.mxu0 0
    %3112 = vmatprep.subr.bf16.mxu0 0
    %3113 = vmatpush1.bf16.msra.mxu0 0
    %3114 = vmatprep.mubr.bf16.mxu0 0
    %3115 = vmatmul.mubr.bf16.gmra.mrb[0].mxu0 %v3074
    %v3116 = vpop.f32.mrb[0].mxu0
    %v3117 = vadd.f32 %v3060, %v3116
    %v3118 = vpop.f32.mrb[0].mxu0
    %v3119 = vpop.f32.mrb[0].mxu0
    %v3120 = vadd.f32 %v3063, %v3119
    %v3121 = vpop.f32.mrb[0].mxu0
    %3122 = vmatprep.mubr.bf16.mxu0 0
    %3123 = vmatmul.mubr.bf16.gmra.mrb[0].mxu0 %v3077
    %v3124 = vpop.f32.mrb[0].mxu0
    %v3125 = vadd.f32 %v3068, %v3124
    %v3126 = vpop.f32.mrb[0].mxu0
    %v3127 = vpop.f32.mrb[0].mxu0
    %v3128 = vpop.f32.mrb[0].mxu0
    %3129 = vdwg.mxu0
    %3130 = vrot.lane.b32.xlu0 %v2683, 112
    %v3131 = vpop.permute.xlu0 %3130
    %3132 = vrot.lane.b32.xlu0 %v2684, 112
    %v3133 = vpop.permute.xlu0 %3132
    %3134 = vrot.lane.b32.xlu0 %v2685, 112
    %v3135 = vpop.permute.xlu0 %3134
    %3136 = vrot.lane.b32.xlu0 %v2686, 112
    %v3137 = vpop.permute.xlu0 %3136
    %v3139 = vsel %vm1262, %v3131, 0
    %v3142 = vsel %vm1262, %v3133, 0
    %v3145 = vsel %vm1262, %v3135, 0
    %v3148 = vsel %vm1262, %v3137, 0
    %3150 = vmatprep.subr.bf16.mxu0 0
    %3151 = vmatpush1.bf16.xpose.msra.mxu0 %v3145
    %3152 = vmatprep.subr.bf16.mxu0 0
    %3153 = vmatpush1.bf16.xpose.msra.mxu0 %v3148
    %3154 = vmatprep.subr.bf16.mxu0 0
    %3155 = vmatpush1.bf16.xpose.msra.mxu0 0
    %3156 = vmatprep.subr.bf16.mxu0 0
    %3157 = vmatpush1.bf16.xpose.msra.mxu0 0
    %3158 = vmatprep.subr.bf16.mxu0 0
    %3159 = vmatpush1.bf16.xpose.msra.mxu0 0
    %3160 = vmatprep.subr.bf16.mxu0 0
    %3161 = vmatpush1.bf16.xpose.msra.mxu0 0
    %3162 = vmatprep.subr.bf16.mxu0 0
    %3163 = vmatpush1.bf16.xpose.msra.mxu0 0
    %3164 = vmatprep.subr.bf16.mxu0 0
    %3165 = vmatpush1.bf16.xpose.msra.mxu0 0
    %3166 = vmatprep.subr.bf16.mxu0 0
    %3167 = vmatpush1.bf16.xpose.msra.mxu0 0
    %3168 = vmatprep.subr.bf16.mxu0 0
    %3169 = vmatpush1.bf16.xpose.msra.mxu0 0
    %3170 = vmatprep.subr.bf16.mxu0 0
    %3171 = vmatpush1.bf16.xpose.msra.mxu0 0
    %3172 = vmatprep.subr.bf16.mxu0 0
    %3173 = vmatpush1.bf16.xpose.msra.mxu0 0
    %3174 = vmatprep.subr.bf16.mxu0 0
    %3175 = vmatpush1.bf16.xpose.msra.mxu0 0
    %3176 = vmatprep.subr.bf16.mxu0 0
    %3177 = vmatpush1.bf16.xpose.msra.mxu0 0
    %3178 = vmatprep.subr.bf16.mxu0 0
    %3179 = vmatpush1.bf16.xpose.msra.mxu0 0
    %3180 = vmatprep.subr.bf16.mxu0 0
    %3181 = vmatpush1.bf16.xpose.msra.mxu0 0
    %3182 = vmatprep.mubr.bf16.mxu0 0
    %3183 = vmatmul.mubr.bf16.gmra.mrb[0].mxu0 %v3139
    %v3184 = vpop.f32.mrb[0].mxu0
    %v3185 = vadd.f32 %v988, %v3184
    %v3186 = vpop.f32.mrb[0].mxu0
    %v3187 = vpop.f32.mrb[0].mxu0
    %v3188 = vadd.f32 %v989, %v3187
    %v3189 = vpop.f32.mrb[0].mxu0
    %3190 = vmatprep.mubr.bf16.mxu0 0
    %3191 = vmatmul.mubr.bf16.gmra.mrb[0].mxu0 %v3142
    %v3192 = vpop.f32.mrb[0].mxu0
    %v3193 = vadd.f32 %v990, %v3192
    %v3194 = vpop.f32.mrb[0].mxu0
    %v3195 = vpop.f32.mrb[0].mxu0
    %v3196 = vpop.f32.mrb[0].mxu0
    %3197 = vdwg.mxu0
    %v3198 = vsel %vm1323, %v3185, -inf
    %3199 = vmax.xlane.f32.xlu0 %v3198
    %v3200 = vpop.xlane.xlu0 %3199
    %v3201 = vsel %vm1323, %v3188, -inf
    %3202 = vmax.xlane.f32.xlu0 %v3201
    %v3203 = vpop.xlane.xlu0 %3202
    %v3204 = vsel %vm1330, %v3193, -inf
    %3205 = vmax.xlane.f32.xlu0 %v3204
    %v3206 = vpop.xlane.xlu0 %3205
    %v3207 = vsub.f32 %v3185, %v3200
    %v3208 = vsub.f32 %v3188, %v3203
    %v3209 = vsub.f32 %v3193, %v3206
    %v3210 = vmul.f32 %v3207, 1.442695
    %v3211 = vpow.pop %v3210
    %v3212 = vmul.f32 %v3208, 1.442695
    %v3213 = vpow.pop %v3212
    %v3214 = vmul.f32 %v3209, 1.442695
    %v3215 = vpow.pop %v3214
    %v3216 = vsel %vm1323, %v3211, 0.0
    %3217 = vadd.xlane.f32.xlu0 %v3216
    %v3218 = vpop.xlane.xlu0 %3217
    %v3219 = vsel %vm1323, %v3213, 0.0
    %3220 = vadd.xlane.f32.xlu0 %v3219
    %v3221 = vpop.xlane.xlu0 %3220
    %v3222 = vsel %vm1330, %v3215, 0.0
    %3223 = vadd.xlane.f32.xlu0 %v3222
    %v3224 = vpop.xlane.xlu0 %3223
    %v3225 = vrcp.pop %v3218
    %v3226 = vrcp.pop %v3221
    %v3227 = vrcp.pop %v3224
    %v3228 = vmul.f32 %v3211, %v3225
    %v3229 = vmul.f32 %v3213, %v3226
    %v3230 = vmul.f32 %v3215, %v3227
    %v3231 = vpack.c.bf16 %v3229, %v3228
    %v3232 = vpack.c.bf16 %v3230, %v3230
    %3233 = vrot.lane.b32.xlu0 %v2687, 112
    %v3234 = vpop.permute.xlu0 %3233
    %3235 = vrot.lane.b32.xlu0 %v2688, 112
    %v3236 = vpop.permute.xlu0 %3235
    %v3239 = vsel %vm1323, %v3231, 0
    %v3242 = vsel %vm1323, %v3232, 0
    %v3245 = vsel %vm1366, %v3236, 0
    %3247 = vmatprep.subr.bf16.mxu0 0
    %3248 = vmatpush1.bf16.msra.mxu0 %v3234
    %3249 = vmatprep.subr.bf16.mxu0 0
    %3250 = vmatpush1.bf16.msra.mxu0 %v3245
    %3251 = vmatprep.subr.bf16.mxu0 0
    %3252 = vmatpush1.bf16.msra.mxu0 0
    %3253 = vmatprep.subr.bf16.mxu0 0
    %3254 = vmatpush1.bf16.msra.mxu0 0
    %3255 = vmatprep.subr.bf16.mxu0 0
    %3256 = vmatpush1.bf16.msra.mxu0 0
    %3257 = vmatprep.subr.bf16.mxu0 0
    %3258 = vmatpush1.bf16.msra.mxu0 0
    %3259 = vmatprep.subr.bf16.mxu0 0
    %3260 = vmatpush1.bf16.msra.mxu0 0
    %3261 = vmatprep.subr.bf16.mxu0 0
    %3262 = vmatpush1.bf16.msra.mxu0 0
    %3263 = vmatprep.subr.bf16.mxu0 0
    %3264 = vmatpush1.bf16.msra.mxu0 0
    %3265 = vmatprep.subr.bf16.mxu0 0
    %3266 = vmatpush1.bf16.msra.mxu0 0
    %3267 = vmatprep.subr.bf16.mxu0 0
    %3268 = vmatpush1.bf16.msra.mxu0 0
    %3269 = vmatprep.subr.bf16.mxu0 0
    %3270 = vmatpush1.bf16.msra.mxu0 0
    %3271 = vmatprep.subr.bf16.mxu0 0
    %3272 = vmatpush1.bf16.msra.mxu0 0
    %3273 = vmatprep.subr.bf16.mxu0 0
    %3274 = vmatpush1.bf16.msra.mxu0 0
    %3275 = vmatprep.subr.bf16.mxu0 0
    %3276 = vmatpush1.bf16.msra.mxu0 0
    %3277 = vmatprep.subr.bf16.mxu0 0
    %3278 = vmatpush1.bf16.msra.mxu0 0
    %3279 = vmatprep.mubr.bf16.mxu0 0
    %3280 = vmatmul.mubr.bf16.gmra.mrb[0].mxu0 %v3239
    %v3281 = vpop.f32.mrb[0].mxu0
    %v3282 = vadd.f32 0.0, %v3281
    %v3283 = vpop.f32.mrb[0].mxu0
    %v3284 = vpop.f32.mrb[0].mxu0
    %v3285 = vadd.f32 0.0, %v3284
    %v3286 = vpop.f32.mrb[0].mxu0
    %3287 = vmatprep.mubr.bf16.mxu0 0
    %3288 = vmatmul.mubr.bf16.gmra.mrb[0].mxu0 %v3242
    %v3289 = vpop.f32.mrb[0].mxu0
    %v3290 = vadd.f32 0.0, %v3289
    %v3291 = vpop.f32.mrb[0].mxu0
    %v3292 = vpop.f32.mrb[0].mxu0
    %v3293 = vpop.f32.mrb[0].mxu0
    %3294 = vdwg.mxu0
    %v3295 = vpack.c.bf16 %v3285, %v3282
    %v3296 = vpack.c.bf16 %v3290, %v3290
    %v3298 = vsel %vm1262, %v3295, 0
    %v3301 = vsel %vm1262, %v3296, 0
    %v3304 = vsel %vm924, %v2681, 0
    %3306 = vmatprep.subr.bf16.mxu0 0
    %3307 = vmatpush1.bf16.msra.mxu0 %v3304
    %3308 = vmatprep.subr.bf16.mxu0 0
    %3309 = vmatpush1.bf16.msra.mxu0 0
    %3310 = vmatprep.subr.bf16.mxu0 0
    %3311 = vmatpush1.bf16.msra.mxu0 0
    %3312 = vmatprep.subr.bf16.mxu0 0
    %3313 = vmatpush1.bf16.msra.mxu0 0
    %3314 = vmatprep.subr.bf16.mxu0 0
    %3315 = vmatpush1.bf16.msra.mxu0 0
    %3316 = vmatprep.subr.bf16.mxu0 0
    %3317 = vmatpush1.bf16.msra.mxu0 0
    %3318 = vmatprep.subr.bf16.mxu0 0
    %3319 = vmatpush1.bf16.msra.mxu0 0
    %3320 = vmatprep.subr.bf16.mxu0 0
    %3321 = vmatpush1.bf16.msra.mxu0 0
    %3322 = vmatprep.subr.bf16.mxu0 0
    %3323 = vmatpush1.bf16.msra.mxu0 0
    %3324 = vmatprep.subr.bf16.mxu0 0
    %3325 = vmatpush1.bf16.msra.mxu0 0
    %3326 = vmatprep.subr.bf16.mxu0 0
    %3327 = vmatpush1.bf16.msra.mxu0 0
    %3328 = vmatprep.subr.bf16.mxu0 0
    %3329 = vmatpush1.bf16.msra.mxu0 0
    %3330 = vmatprep.subr.bf16.mxu0 0
    %3331 = vmatpush1.bf16.msra.mxu0 0
    %3332 = vmatprep.subr.bf16.mxu0 0
    %3333 = vmatpush1.bf16.msra.mxu0 0
    %3334 = vmatprep.subr.bf16.mxu0 0
    %3335 = vmatpush1.bf16.msra.mxu0 0
    %3336 = vmatprep.subr.bf16.mxu0 0
    %3337 = vmatpush1.bf16.msra.mxu0 0
    %3338 = vmatprep.mubr.bf16.mxu0 0
    %3339 = vmatmul.mubr.bf16.gmra.mrb[0].mxu0 %v3298
    %v3340 = vpop.f32.mrb[0].mxu0
    %v3341 = vadd.f32 0.0, %v3340
    %v3342 = vpop.f32.mrb[0].mxu0
    %v3343 = vpop.f32.mrb[0].mxu0
    %v3344 = vadd.f32 0.0, %v3343
    %v3345 = vpop.f32.mrb[0].mxu0
    %3346 = vmatprep.mubr.bf16.mxu0 0
    %3347 = vmatmul.mubr.bf16.gmra.mrb[0].mxu0 %v3301
    %v3348 = vpop.f32.mrb[0].mxu0
    %v3349 = vadd.f32 0.0, %v3348
    %v3350 = vpop.f32.mrb[0].mxu0
    %v3351 = vpop.f32.mrb[0].mxu0
    %v3352 = vpop.f32.mrb[0].mxu0
    %3353 = vdwg.mxu0
    %v3354 = vadd.f32 %v3117, %v3341
    %v3355 = vadd.f32 %v3120, %v3344
    %v3356 = vadd.f32 %v3125, %v3349
    %3357 = vrot.lane.b32.xlu0 %v2683, 104
    %v3358 = vpop.permute.xlu0 %3357
    %3359 = vrot.lane.b32.xlu0 %v2684, 104
    %v3360 = vpop.permute.xlu0 %3359
    %3361 = vrot.lane.b32.xlu0 %v2685, 104
    %v3362 = vpop.permute.xlu0 %3361
    %3363 = vrot.lane.b32.xlu0 %v2686, 104
    %v3364 = vpop.permute.xlu0 %3363
    %v3366 = vsel %vm1262, %v3358, 0
    %v3369 = vsel %vm1262, %v3360, 0
    %v3372 = vsel %vm1262, %v3362, 0
    %v3375 = vsel %vm1262, %v3364, 0
    %3377 = vmatprep.subr.bf16.mxu0 0
    %3378 = vmatpush1.bf16.xpose.msra.mxu0 %v3372
    %3379 = vmatprep.subr.bf16.mxu0 0
    %3380 = vmatpush1.bf16.xpose.msra.mxu0 %v3375
    %3381 = vmatprep.subr.bf16.mxu0 0
    %3382 = vmatpush1.bf16.xpose.msra.mxu0 0
    %3383 = vmatprep.subr.bf16.mxu0 0
    %3384 = vmatpush1.bf16.xpose.msra.mxu0 0
    %3385 = vmatprep.subr.bf16.mxu0 0
    %3386 = vmatpush1.bf16.xpose.msra.mxu0 0
    %3387 = vmatprep.subr.bf16.mxu0 0
    %3388 = vmatpush1.bf16.xpose.msra.mxu0 0
    %3389 = vmatprep.subr.bf16.mxu0 0
    %3390 = vmatpush1.bf16.xpose.msra.mxu0 0
    %3391 = vmatprep.subr.bf16.mxu0 0
    %3392 = vmatpush1.bf16.xpose.msra.mxu0 0
    %3393 = vmatprep.subr.bf16.mxu0 0
    %3394 = vmatpush1.bf16.xpose.msra.mxu0 0
    %3395 = vmatprep.subr.bf16.mxu0 0
    %3396 = vmatpush1.bf16.xpose.msra.mxu0 0
    %3397 = vmatprep.subr.bf16.mxu0 0
    %3398 = vmatpush1.bf16.xpose.msra.mxu0 0
    %3399 = vmatprep.subr.bf16.mxu0 0
    %3400 = vmatpush1.bf16.xpose.msra.mxu0 0
    %3401 = vmatprep.subr.bf16.mxu0 0
    %3402 = vmatpush1.bf16.xpose.msra.mxu0 0
    %3403 = vmatprep.subr.bf16.mxu0 0
    %3404 = vmatpush1.bf16.xpose.msra.mxu0 0
    %3405 = vmatprep.subr.bf16.mxu0 0
    %3406 = vmatpush1.bf16.xpose.msra.mxu0 0
    %3407 = vmatprep.subr.bf16.mxu0 0
    %3408 = vmatpush1.bf16.xpose.msra.mxu0 0
    %3409 = vmatprep.mubr.bf16.mxu0 0
    %3410 = vmatmul.mubr.bf16.gmra.mrb[0].mxu0 %v3366
    %v3411 = vpop.f32.mrb[0].mxu0
    %v3412 = vadd.f32 %v988, %v3411
    %v3413 = vpop.f32.mrb[0].mxu0
    %v3414 = vpop.f32.mrb[0].mxu0
    %v3415 = vadd.f32 %v989, %v3414
    %v3416 = vpop.f32.mrb[0].mxu0
    %3417 = vmatprep.mubr.bf16.mxu0 0
    %3418 = vmatmul.mubr.bf16.gmra.mrb[0].mxu0 %v3369
    %v3419 = vpop.f32.mrb[0].mxu0
    %v3420 = vadd.f32 %v990, %v3419
    %v3421 = vpop.f32.mrb[0].mxu0
    %v3422 = vpop.f32.mrb[0].mxu0
    %v3423 = vpop.f32.mrb[0].mxu0
    %3424 = vdwg.mxu0
    %v3425 = vsel %vm1323, %v3412, -inf
    %3426 = vmax.xlane.f32.xlu0 %v3425
    %v3427 = vpop.xlane.xlu0 %3426
    %v3428 = vsel %vm1323, %v3415, -inf
    %3429 = vmax.xlane.f32.xlu0 %v3428
    %v3430 = vpop.xlane.xlu0 %3429
    %v3431 = vsel %vm1330, %v3420, -inf
    %3432 = vmax.xlane.f32.xlu0 %v3431
    %v3433 = vpop.xlane.xlu0 %3432
    %v3434 = vsub.f32 %v3412, %v3427
    %v3435 = vsub.f32 %v3415, %v3430
    %v3436 = vsub.f32 %v3420, %v3433
    %v3437 = vmul.f32 %v3434, 1.442695
    %v3438 = vpow.pop %v3437
    %v3439 = vmul.f32 %v3435, 1.442695
    %v3440 = vpow.pop %v3439
    %v3441 = vmul.f32 %v3436, 1.442695
    %v3442 = vpow.pop %v3441
    %v3443 = vsel %vm1323, %v3438, 0.0
    %3444 = vadd.xlane.f32.xlu0 %v3443
    %v3445 = vpop.xlane.xlu0 %3444
    %v3446 = vsel %vm1323, %v3440, 0.0
    %3447 = vadd.xlane.f32.xlu0 %v3446
    %v3448 = vpop.xlane.xlu0 %3447
    %v3449 = vsel %vm1330, %v3442, 0.0
    %3450 = vadd.xlane.f32.xlu0 %v3449
    %v3451 = vpop.xlane.xlu0 %3450
    %v3452 = vrcp.pop %v3445
    %v3453 = vrcp.pop %v3448
    %v3454 = vrcp.pop %v3451
    %v3455 = vmul.f32 %v3438, %v3452
    %v3456 = vmul.f32 %v3440, %v3453
    %v3457 = vmul.f32 %v3442, %v3454
    %v3458 = vpack.c.bf16 %v3456, %v3455
    %v3459 = vpack.c.bf16 %v3457, %v3457
    %3460 = vrot.lane.b32.xlu0 %v2687, 104
    %v3461 = vpop.permute.xlu0 %3460
    %3462 = vrot.lane.b32.xlu0 %v2688, 104
    %v3463 = vpop.permute.xlu0 %3462
    %v3466 = vsel %vm1323, %v3458, 0
    %v3469 = vsel %vm1323, %v3459, 0
    %v3472 = vsel %vm1366, %v3463, 0
    %3474 = vmatprep.subr.bf16.mxu0 0
    %3475 = vmatpush1.bf16.msra.mxu0 %v3461
    %3476 = vmatprep.subr.bf16.mxu0 0
    %3477 = vmatpush1.bf16.msra.mxu0 %v3472
    %3478 = vmatprep.subr.bf16.mxu0 0
    %3479 = vmatpush1.bf16.msra.mxu0 0
    %3480 = vmatprep.subr.bf16.mxu0 0
    %3481 = vmatpush1.bf16.msra.mxu0 0
    %3482 = vmatprep.subr.bf16.mxu0 0
    %3483 = vmatpush1.bf16.msra.mxu0 0
    %3484 = vmatprep.subr.bf16.mxu0 0
    %3485 = vmatpush1.bf16.msra.mxu0 0
    %3486 = vmatprep.subr.bf16.mxu0 0
    %3487 = vmatpush1.bf16.msra.mxu0 0
    %3488 = vmatprep.subr.bf16.mxu0 0
    %3489 = vmatpush1.bf16.msra.mxu0 0
    %3490 = vmatprep.subr.bf16.mxu0 0
    %3491 = vmatpush1.bf16.msra.mxu0 0
    %3492 = vmatprep.subr.bf16.mxu0 0
    %3493 = vmatpush1.bf16.msra.mxu0 0
    %3494 = vmatprep.subr.bf16.mxu0 0
    %3495 = vmatpush1.bf16.msra.mxu0 0
    %3496 = vmatprep.subr.bf16.mxu0 0
    %3497 = vmatpush1.bf16.msra.mxu0 0
    %3498 = vmatprep.subr.bf16.mxu0 0
    %3499 = vmatpush1.bf16.msra.mxu0 0
    %3500 = vmatprep.subr.bf16.mxu0 0
    %3501 = vmatpush1.bf16.msra.mxu0 0
    %3502 = vmatprep.subr.bf16.mxu0 0
    %3503 = vmatpush1.bf16.msra.mxu0 0
    %3504 = vmatprep.subr.bf16.mxu0 0
    %3505 = vmatpush1.bf16.msra.mxu0 0
    %3506 = vmatprep.mubr.bf16.mxu0 0
    %3507 = vmatmul.mubr.bf16.gmra.mrb[0].mxu0 %v3466
    %v3508 = vpop.f32.mrb[0].mxu0
    %v3509 = vadd.f32 0.0, %v3508
    %v3510 = vpop.f32.mrb[0].mxu0
    %v3511 = vpop.f32.mrb[0].mxu0
    %v3512 = vadd.f32 0.0, %v3511
    %v3513 = vpop.f32.mrb[0].mxu0
    %3514 = vmatprep.mubr.bf16.mxu0 0
    %3515 = vmatmul.mubr.bf16.gmra.mrb[0].mxu0 %v3469
    %v3516 = vpop.f32.mrb[0].mxu0
    %v3517 = vadd.f32 0.0, %v3516
    %v3518 = vpop.f32.mrb[0].mxu0
    %v3519 = vpop.f32.mrb[0].mxu0
    %v3520 = vpop.f32.mrb[0].mxu0
    %3521 = vdwg.mxu0
    %v3522 = vpack.c.bf16 %v3512, %v3509
    %v3523 = vpack.c.bf16 %v3517, %v3517
    %v3525 = vsel %vm1262, %v3522, 0
    %v3528 = vsel %vm1262, %v3523, 0
    %v3531 = vsel %vm924, %v2682, 0
    %3533 = vmatprep.subr.bf16.mxu0 0
    %3534 = vmatpush1.bf16.msra.mxu0 %v3531
    %3535 = vmatprep.subr.bf16.mxu0 0
    %3536 = vmatpush1.bf16.msra.mxu0 0
    %3537 = vmatprep.subr.bf16.mxu0 0
    %3538 = vmatpush1.bf16.msra.mxu0 0
    %3539 = vmatprep.subr.bf16.mxu0 0
    %3540 = vmatpush1.bf16.msra.mxu0 0
    %3541 = vmatprep.subr.bf16.mxu0 0
    %3542 = vmatpush1.bf16.msra.mxu0 0
    %3543 = vmatprep.subr.bf16.mxu0 0
    %3544 = vmatpush1.bf16.msra.mxu0 0
    %3545 = vmatprep.subr.bf16.mxu0 0
    %3546 = vmatpush1.bf16.msra.mxu0 0
    %3547 = vmatprep.subr.bf16.mxu0 0
    %3548 = vmatpush1.bf16.msra.mxu0 0
    %3549 = vmatprep.subr.bf16.mxu0 0
    %3550 = vmatpush1.bf16.msra.mxu0 0
    %3551 = vmatprep.subr.bf16.mxu0 0
    %3552 = vmatpush1.bf16.msra.mxu0 0
    %3553 = vmatprep.subr.bf16.mxu0 0
    %3554 = vmatpush1.bf16.msra.mxu0 0
    %3555 = vmatprep.subr.bf16.mxu0 0
    %3556 = vmatpush1.bf16.msra.mxu0 0
    %3557 = vmatprep.subr.bf16.mxu0 0
    %3558 = vmatpush1.bf16.msra.mxu0 0
    %3559 = vmatprep.subr.bf16.mxu0 0
    %3560 = vmatpush1.bf16.msra.mxu0 0
    %3561 = vmatprep.subr.bf16.mxu0 0
    %3562 = vmatpush1.bf16.msra.mxu0 0
    %3563 = vmatprep.subr.bf16.mxu0 0
    %3564 = vmatpush1.bf16.msra.mxu0 0
    %3565 = vmatprep.mubr.bf16.mxu0 0
    %3566 = vmatmul.mubr.bf16.gmra.mrb[0].mxu0 %v3525
    %v3567 = vpop.f32.mrb[0].mxu0
    %v3568 = vadd.f32 0.0, %v3567
    %v3569 = vpop.f32.mrb[0].mxu0
    %v3570 = vpop.f32.mrb[0].mxu0
    %v3571 = vadd.f32 0.0, %v3570
    %v3572 = vpop.f32.mrb[0].mxu0
    %3573 = vmatprep.mubr.bf16.mxu0 0
    %3574 = vmatmul.mubr.bf16.gmra.mrb[0].mxu0 %v3528
    %v3575 = vpop.f32.mrb[0].mxu0
    %v3576 = vadd.f32 0.0, %v3575
    %v3577 = vpop.f32.mrb[0].mxu0
    %v3578 = vpop.f32.mrb[0].mxu0
    %v3579 = vpop.f32.mrb[0].mxu0
    %3580 = vdwg.mxu0
    %v3581 = vadd.f32 %v3354, %v3568
    %v3582 = vadd.f32 %v3355, %v3571
    %v3583 = vadd.f32 %v3356, %v3576
    %v3584 = vadd.f32 %v2411, %v3581
    %v3585 = vadd.f32 %v2412, %v3582
    %v3586 = vadd.f32 %v2413, %v3583
    %s3587 = scalar_lea.vmem %s13, 1
    %v3588 = vld [vmem:[%s3587] sm:$0x1]
    %v3590 = vlaneseq
    %v3591 = vshrl.u32 %v3590, 7
    %v3592 = vsub.s32 0, %v3591
    %v3593 = vrot.slane %v3588, %v3592
    %v3595 = vadd.f32 %v3584, %v3593
    %v3596 = vadd.f32 %v3585, %v3593
    %v3597 = vadd.f32 %v3586, %v3593
    %s3598 = scalar_lea.vmem %s14, 1
    %v3599 = vld [vmem:[%s3598] sm:$0x1]
    %s3600 = scalar_lea.vmem %s15, 1
    %v3601 = vld [vmem:[%s3600] sm:$0x1]
    %v3602 = vsel %vm248, %v3595, 0.0
    %3603 = vadd.xlane.f32.xlu0 %v3602
    %v3604 = vpop.xlane.xlu0 %3603
    %v3605 = vsel %vm248, %v3596, 0.0
    %3606 = vadd.xlane.f32.xlu0 %v3605
    %v3607 = vpop.xlane.xlu0 %3606
    %v3608 = vsel %vm999, %v3597, 0.0
    %3609 = vadd.xlane.f32.xlu0 %v3608
    %v3610 = vpop.xlane.xlu0 %3609
    %v3611 = vmul.f32 %v3604, %v1003
    %v3612 = vmul.f32 %v3607, %v1003
    %v3613 = vmul.f32 %v3610, %v1003
    %v3614 = vsub.f32 %v3595, %v3611
    %v3615 = vsub.f32 %v3596, %v3612
    %v3616 = vsub.f32 %v3597, %v3613
    %v3617 = vmul.f32 %v3614, %v3614
    %v3618 = vmul.f32 %v3615, %v3615
    %v3619 = vmul.f32 %v3616, %v3616
    %v3620 = vsel %vm248, %v3617, 0.0
    %3621 = vadd.xlane.f32.xlu0 %v3620
    %v3622 = vpop.xlane.xlu0 %3621
    %v3623 = vsel %vm248, %v3618, 0.0
    %3624 = vadd.xlane.f32.xlu0 %v3623
    %v3625 = vpop.xlane.xlu0 %3624
    %v3626 = vsel %vm999, %v3619, 0.0
    %3627 = vadd.xlane.f32.xlu0 %v3626
    %v3628 = vpop.xlane.xlu0 %3627
    %v3629 = vmul.f32 %v3622, %v1003
    %v3630 = vmul.f32 %v3625, %v1003
    %v3631 = vmul.f32 %v3628, %v1003
    %v3632 = vadd.f32 %v3629, 1e-05
    %v3633 = vadd.f32 %v3630, 1e-05
    %v3634 = vadd.f32 %v3631, 1e-05
    %v3635 = vrsqrt.pop %v3632
    %v3636 = vrsqrt.pop %v3633
    %v3637 = vrsqrt.pop %v3634
    %v3638 = vmul.f32 %v3614, %v3635
    %v3639 = vmul.f32 %v3615, %v3636
    %v3640 = vmul.f32 %v3616, %v3637
    %v3642 = vlaneseq
    %v3643 = vshrl.u32 %v3642, 7
    %v3644 = vsub.s32 0, %v3643
    %v3645 = vrot.slane %v3599, %v3644
    %v3647 = vmul.f32 %v3638, %v3645
    %v3648 = vmul.f32 %v3639, %v3645
    %v3649 = vmul.f32 %v3640, %v3645
    %v3651 = vlaneseq
    %v3652 = vshrl.u32 %v3651, 7
    %v3653 = vsub.s32 0, %v3652
    %v3654 = vrot.slane %v3601, %v3653
    %v3656 = vadd.f32 %v3647, %v3654
    %v3657 = vadd.f32 %v3648, %v3654
    %v3658 = vadd.f32 %v3649, %v3654
    %v3659 = vpack.c.bf16 %v3657, %v3656
    %v3660 = vpack.c.bf16 %v3658, %v3658
    %s3661 = scalar_lea.vmem [#allocation14], 16
    %v3662 = vld [vmem:[%s3661] sm:$0xf]
    %v3663 = vld [vmem:[%s3661 + $0x4] sm:$0xf]
    %v3664 = vld [vmem:[%s3661 + $0x8] sm:$0xf]
    %v3665 = vld [vmem:[%s3661 + $0xc] sm:$0xf]
    %s3666 = scalar_lea.vmem %s17, 1
    %v3667 = vld [vmem:[%s3666] sm:$0x1]
    %v3669 = vlaneseq
    %v3670 = vshrl.u32 %v3669, 7
    %v3671 = vsub.s32 0, %v3670
    %v3672 = vrot.slane %v3667, %v3671
    %v3678 = vunpack.c.l.b16 %v3662
    %v3679 = vunpack.c.l.b16 %v3663
    %v3680 = vunpack.c.l.b16 %v3664
    %v3681 = vunpack.c.l.b16 %v3665
    %v3682 = vpack.c.b16 %v3679, %v3678
    %v3683 = vpack.c.b16 %v3681, %v3680
    %v3687 = vsel %vm248, %v3659, 0
    %v3690 = vsel %vm248, %v3660, 0
    %3692 = vmatprep.subr.bf16.mxu0 0
    %3693 = vmatpush1.bf16.msra.mxu0 %v3682
    %3694 = vmatprep.subr.bf16.mxu0 0
    %3695 = vmatpush1.bf16.msra.mxu0 %v3683
    %3696 = vmatprep.subr.bf16.mxu0 0
    %3697 = vmatpush1.bf16.msra.mxu0 0
    %3698 = vmatprep.subr.bf16.mxu0 0
    %3699 = vmatpush1.bf16.msra.mxu0 0
    %3700 = vmatprep.subr.bf16.mxu0 0
    %3701 = vmatpush1.bf16.msra.mxu0 0
    %3702 = vmatprep.subr.bf16.mxu0 0
    %3703 = vmatpush1.bf16.msra.mxu0 0
    %3704 = vmatprep.subr.bf16.mxu0 0
    %3705 = vmatpush1.bf16.msra.mxu0 0
    %3706 = vmatprep.subr.bf16.mxu0 0
    %3707 = vmatpush1.bf16.msra.mxu0 0
    %3708 = vmatprep.subr.bf16.mxu0 0
    %3709 = vmatpush1.bf16.msra.mxu0 0
    %3710 = vmatprep.subr.bf16.mxu0 0
    %3711 = vmatpush1.bf16.msra.mxu0 0
    %3712 = vmatprep.subr.bf16.mxu0 0
    %3713 = vmatpush1.bf16.msra.mxu0 0
    %3714 = vmatprep.subr.bf16.mxu0 0
    %3715 = vmatpush1.bf16.msra.mxu0 0
    %3716 = vmatprep.subr.bf16.mxu0 0
    %3717 = vmatpush1.bf16.msra.mxu0 0
    %3718 = vmatprep.subr.bf16.mxu0 0
    %3719 = vmatpush1.bf16.msra.mxu0 0
    %3720 = vmatprep.subr.bf16.mxu0 0
    %3721 = vmatpush1.bf16.msra.mxu0 0
    %3722 = vmatprep.subr.bf16.mxu0 0
    %3723 = vmatpush1.bf16.msra.mxu0 0
    %3724 = vmatprep.mubr.bf16.mxu0 0
    %3725 = vmatmul.mubr.bf16.gmra.mrb[0].mxu0 %v3687
    %v3726 = vpop.f32.mrb[0].mxu0
    %v3727 = vadd.f32 %v3672, %v3726
    %v3728 = vpop.f32.mrb[0].mxu0
    %v3729 = vpop.f32.mrb[0].mxu0
    %v3730 = vadd.f32 %v3672, %v3729
    %v3731 = vpop.f32.mrb[0].mxu0
    %3732 = vmatprep.mubr.bf16.mxu0 0
    %3733 = vmatmul.mubr.bf16.gmra.mrb[0].mxu0 %v3690
    %v3734 = vpop.f32.mrb[0].mxu0
    %v3735 = vadd.f32 %v3672, %v3734
    %v3736 = vpop.f32.mrb[0].mxu0
    %v3737 = vpop.f32.mrb[0].mxu0
    %v3738 = vpop.f32.mrb[0].mxu0
    %3739 = vdwg.mxu0
    %v3740 = vmax.f32 %v3727, 0.0
    %v3741 = vmax.f32 %v3730, 0.0
    %v3742 = vmax.f32 %v3735, 0.0
    %v3743 = vpack.c.bf16 %v3741, %v3740
    %v3744 = vpack.c.bf16 %v3742, %v3742
    %s3745 = scalar_lea.vmem %s18, 32
    %v3746 = vld [vmem:[%s3745] sm:$0xf]
    %v3747 = vld [vmem:[%s3745 + $0x4] sm:$0xf]
    %v3748 = vld [vmem:[%s3745 + $0x8] sm:$0xf]
    %v3749 = vld [vmem:[%s3745 + $0xc] sm:$0xf]
    %v3750 = vld [vmem:[%s3745 + $0x10] sm:$0xf]
    %v3751 = vld [vmem:[%s3745 + $0x14] sm:$0xf]
    %v3752 = vld [vmem:[%s3745 + $0x18] sm:$0xf]
    %v3753 = vld [vmem:[%s3745 + $0x1c] sm:$0xf]
    %s3754 = scalar_lea.vmem %s19, 1
    %v3755 = vld [vmem:[%s3754] sm:$0x1]
    %v3757 = vlaneseq
    %v3758 = vshrl.u32 %v3757, 7
    %v3759 = vsub.s32 0, %v3758
    %v3760 = vrot.slane %v3755, %v3759
    %v3770 = vunpack.c.l.b16 %v3746
    %v3771 = vunpack.c.l.b16 %v3747
    %v3772 = vunpack.c.l.b16 %v3748
    %v3773 = vunpack.c.l.b16 %v3749
    %v3774 = vunpack.c.l.b16 %v3750
    %v3775 = vunpack.c.l.b16 %v3751
    %v3776 = vunpack.c.l.b16 %v3752
    %v3777 = vunpack.c.l.b16 %v3753
    %v3778 = vpack.c.b16 %v3771, %v3770
    %v3779 = vpack.c.b16 %v3773, %v3772
    %v3780 = vpack.c.b16 %v3775, %v3774
    %v3781 = vpack.c.b16 %v3777, %v3776
    %v3787 = vsel %vm2356, %v3743, 0
    %v3790 = vsel %vm2356, %v3744, 0
    %3792 = vmatprep.subr.bf16.mxu0 0
    %3793 = vmatpush1.bf16.msra.mxu0 %v3778
    %3794 = vmatprep.subr.bf16.mxu0 0
    %3795 = vmatpush1.bf16.msra.mxu0 %v3779
    %3796 = vmatprep.subr.bf16.mxu0 0
    %3797 = vmatpush1.bf16.msra.mxu0 %v3780
    %3798 = vmatprep.subr.bf16.mxu0 0
    %3799 = vmatpush1.bf16.msra.mxu0 %v3781
    %3800 = vmatprep.subr.bf16.mxu0 0
    %3801 = vmatpush1.bf16.msra.mxu0 0
    %3802 = vmatprep.subr.bf16.mxu0 0
    %3803 = vmatpush1.bf16.msra.mxu0 0
    %3804 = vmatprep.subr.bf16.mxu0 0
    %3805 = vmatpush1.bf16.msra.mxu0 0
    %3806 = vmatprep.subr.bf16.mxu0 0
    %3807 = vmatpush1.bf16.msra.mxu0 0
    %3808 = vmatprep.subr.bf16.mxu0 0
    %3809 = vmatpush1.bf16.msra.mxu0 0
    %3810 = vmatprep.subr.bf16.mxu0 0
    %3811 = vmatpush1.bf16.msra.mxu0 0
    %3812 = vmatprep.subr.bf16.mxu0 0
    %3813 = vmatpush1.bf16.msra.mxu0 0
    %3814 = vmatprep.subr.bf16.mxu0 0
    %3815 = vmatpush1.bf16.msra.mxu0 0
    %3816 = vmatprep.subr.bf16.mxu0 0
    %3817 = vmatpush1.bf16.msra.mxu0 0
    %3818 = vmatprep.subr.bf16.mxu0 0
    %3819 = vmatpush1.bf16.msra.mxu0 0
    %3820 = vmatprep.subr.bf16.mxu0 0
    %3821 = vmatpush1.bf16.msra.mxu0 0
    %3822 = vmatprep.subr.bf16.mxu0 0
    %3823 = vmatpush1.bf16.msra.mxu0 0
    %3824 = vmatprep.mubr.bf16.mxu0 0
    %3825 = vmatmul.mubr.bf16.gmra.mrb[0].mxu0 %v3787
    %v3826 = vpop.f32.mrb[0].mxu0
    %v3827 = vadd.f32 %v3760, %v3826
    %v3828 = vpop.f32.mrb[0].mxu0
    %v3829 = vpop.f32.mrb[0].mxu0
    %v3830 = vpop.f32.mrb[0].mxu0
    %3831 = vmatprep.mubr.bf16.mxu0 0
    %3832 = vmatmul.mubr.bf16.gmra.mrb[0].mxu0 %v3790
    %v3833 = vpop.f32.mrb[0].mxu0
    %v3834 = vpop.f32.mrb[0].mxu0
    %v3835 = vpop.f32.mrb[0].mxu0
    %v3836 = vpop.f32.mrb[0].mxu0
    %3837 = vdwg.mxu0
    %v3838 = vadd.f32 %v3595, %v3827
    %3839 = vst.msk [vmem:[#allocation16] sm:$0x3] %vm999, %v3838
    // Predicated region
    $region114: #{tpu_custom_call.1} parent=1 // pred_check
      _
    $region115: #{tpu_custom_call.1} parent=1 // pred_check_branch
      %3841 = sbr.rel (0) target = $region117
    $region116: #{tpu_custom_call.1} parent=1 // pred_region
      %s3843 = ssub.s32 32, 32
      %3844 = vsyncadd [#allocation4], %s3843
      %s3846 = sshll.u32 [#allocation16], 4
      %s3847 = int_to_ptr.vmem [resolvable:$true] %s3846
      %3849 = dma.vmem_to_hbm [thread:$0]  %s3847, 32, %s20, [#allocation4]
    $region117: #{tpu_custom_call.1} parent=1 // pred_fallthru
      _
    // Predicated region
    $region118: #{tpu_custom_call.1} parent=1 // pred_check
      _
    $region119: #{tpu_custom_call.1} parent=1 // pred_check_branch
      %3851 = sbr.rel (0) target = $region121
    $region120: #{tpu_custom_call.1} parent=1 // pred_region
      %3852 = dma.done [#allocation4], 32
    $region121: #{tpu_custom_call.1} parent=1 // pred_fallthru
      _
    %3853 = vsyncpa [#allocation3], 1
    %3854 = vsyncpa [#allocation6], 1
    %3855 = vsyncpa [#allocation9], 1
    %3856 = vsyncpa [#allocation12], 1
    %3857 = vsyncpa [#allocation15], 1
    %3858 = vsyncpa [#allocation4], 1

</llo_original>
